<compile_context>
chip_gen: v7x
topology: tpu7x:2x2x1
jax: 0.10.0
libtpu: 0.0.40
codegen_flags: <defaults>
</compile_context>

<pallas_src>
import jax
import jax.numpy as jnp
from jax.experimental import pallas as pl
from jax.experimental.pallas import tpu as pltpu


# ------------------------- Pallas kernels -------------------------

def _conv_relu_pool_kernel(p_ref, w_ref, b_ref, o_ref):
    """p_ref: (4*nt, K) bf16 patch rows (4 pool slots stacked per row-tile),
    w_ref: (K, Cout) bf16, b_ref: (1, Cout) f32, o_ref: (nt, Cout) f32.
    One fused matmul, 4-way max over pool slots, then bias + ReLU once."""
    nt = o_ref.shape[0]
    y = jnp.dot(p_ref[...], w_ref[...], preferred_element_type=jnp.float32)  # (4*nt, Cout)
    m = jnp.maximum(jnp.maximum(y[0 * nt:1 * nt], y[1 * nt:2 * nt]),
                    jnp.maximum(y[2 * nt:3 * nt], y[3 * nt:4 * nt]))
    o_ref[...] = jnp.maximum(m + b_ref[...], 0.0)


def _fc_relu_kernel(x_ref, w_ref, b_ref, o_ref, acc_ref):
    """K-tiled fc: grid = (M tiles [parallel], K tiles [arbitrary])."""
    k = pl.program_id(1)

    @pl.when(k == 0)
    def _init():
        acc_ref[...] = jnp.zeros_like(acc_ref)

    acc_ref[...] += jnp.dot(x_ref[...], w_ref[...],
                            preferred_element_type=jnp.float32)

    @pl.when(k == pl.num_programs(1) - 1)
    def _finalize():
        o_ref[...] = jnp.maximum(acc_ref[...] + b_ref[...], 0.0)


def _head_kernel(tid_ref, x_ref, w_ref, b_ref, o_ref):
    """Task head: weight/bias blocks were already selected by the index_map via
    the scalar-prefetched task id."""
    del tid_ref
    o_ref[...] = (jnp.dot(x_ref[...], w_ref[0],
                          preferred_element_type=jnp.float32) + b_ref[0])


# ------------------------- wrappers -------------------------

def _build_pool_patches(x_nhwc_bf16, n_row_tiles):
    """Build ONE stacked bf16 patch tensor of shape (4*N, K): for each row-tile
    the four 2x2 pool-slot patch blocks are contiguous, so a single BlockSpec
    window feeds the kernel."""
    B, H, W, C = x_nhwc_bf16.shape
    Hp, Wp = H // 2, W // 2
    N, K = B * Hp * Wp, 9 * C
    nt = N // n_row_tiles

    xpad = jnp.pad(x_nhwc_bf16, ((0, 0), (1, 1), (1, 1), (0, 0)))  # SAME, k=3
    taps = [xpad[:, dy:dy + H, dx:dx + W, :] for dy in range(3) for dx in range(3)]
    pat = jnp.stack(taps, axis=3)                                   # (B,H,W,9,C)
    slots = [pat[:, i::2, j::2].reshape(N, K) for i in range(2) for j in range(2)]
    p = jnp.stack(slots, axis=0)                                    # (4,N,K)
    # reorder rows: (tile, slot, within-tile) so each row-tile carries its own
    # 4 pool-slot copies contiguously
    p = p.reshape(4, n_row_tiles, nt, K).transpose(1, 0, 2, 3)
    return p.reshape(n_row_tiles * 4 * nt, K), N, K, Hp, Wp, nt


def conv_relu_pool(x_nhwc, w, b):
    """x_nhwc: (B,H,W,Cin) f32, w: (3,3,Cin,Cout) HWIO, b: (Cout,).
    Returns maxpool2(relu(conv_same_k3(x))) -> (B,H//2,W//2,Cout) f32."""
    B, H, W, Cin = x_nhwc.shape
    Cout = w.shape[-1]
    N = B * (H // 2) * (W // 2)
    n_row_tiles = 2 if (N % 2 == 0 and (N // 2) % 8 == 0) else 1

    p, N, K, Hp, Wp, nt = _build_pool_patches(x_nhwc.astype(jnp.bfloat16),
                                              n_row_tiles)
    Kp = ((K + 31) // 32) * 32                       # pad contraction dim (27->32)
    if Kp != K:
        p = jnp.pad(p, ((0, 0), (0, Kp - K)))

    w2 = w.reshape(K, Cout).astype(jnp.bfloat16)
    if Kp != K:
        w2 = jnp.pad(w2, ((0, Kp - K), (0, 0)))
    b2 = b.reshape(1, Cout).astype(jnp.float32)

    out = pl.pallas_call(
        _conv_relu_pool_kernel,
        out_shape=jax.ShapeDtypeStruct((N, Cout), jnp.float32),
        grid=(n_row_tiles,),
        in_specs=[
            pl.BlockSpec((4 * nt, Kp), lambda t: (t, 0)),
            pl.BlockSpec((Kp, Cout), lambda t: (0, 0)),
            pl.BlockSpec((1, Cout), lambda t: (0, 0)),
        ],
        out_specs=pl.BlockSpec((nt, Cout), lambda t: (t, 0)),
        compiler_params=pltpu.CompilerParams(dimension_semantics=("parallel",)),
    )(p, w2, b2)
    return out.reshape(B, Hp, Wp, Cout)


def fc_relu(x, w, b, *, tk=512, tn=128):
    """x: (B,K) f32, w: (K,M) f32, b: (M,) -> relu(x @ w + b), bf16 MXU inputs,
    f32 accumulation, K-tiled with an accumulator scratch."""
    B, K = x.shape
    M = w.shape[-1]
    assert K % tk == 0 and M % tn == 0
    xb = x.astype(jnp.bfloat16)
    wb = w.astype(jnp.bfloat16)
    b2 = b.reshape(1, M).astype(jnp.float32)

    return pl.pallas_call(
        _fc_relu_kernel,
        out_shape=jax.ShapeDtypeStruct((B, M), jnp.float32),
        grid=(M // tn, K // tk),
        in_specs=[
            pl.BlockSpec((B, tk), lambda j, k: (0, k)),
            pl.BlockSpec((tk, tn), lambda j, k: (k, j)),
            pl.BlockSpec((1, tn), lambda j, k: (0, j)),
        ],
        out_specs=pl.BlockSpec((B, tn), lambda j, k: (0, j)),
        scratch_shapes=[pltpu.VMEM((B, tn), jnp.float32)],
        compiler_params=pltpu.CompilerParams(
            dimension_semantics=("parallel", "arbitrary")),
    )(xb, wb, b2)


def multi_head_linear(x, heads_w, heads_b, task_id):
    """x: (B,D) f32, heads_w: (T,D,O), heads_b: (T,O). Selects head `task_id`
    inside the kernel via a scalar-prefetched index_map."""
    B, D = x.shape
    T, _, O = heads_w.shape
    tid = jnp.asarray(task_id, jnp.int32).reshape(1)
    hb = heads_b.reshape(T, 1, O).astype(jnp.float32)

    return pl.pallas_call(
        _head_kernel,
        out_shape=jax.ShapeDtypeStruct((B, O), jnp.float32),
        grid_spec=pltpu.PrefetchScalarGridSpec(
            num_scalar_prefetch=1,
            grid=(1,),
            in_specs=[
                pl.BlockSpec((B, D), lambda g, tid: (0, 0)),
                pl.BlockSpec((1, D, O), lambda g, tid: (tid[0], 0, 0)),
                pl.BlockSpec((1, 1, O), lambda g, tid: (tid[0], 0, 0)),
            ],
            out_specs=pl.BlockSpec((B, O), lambda g, tid: (0, 0)),
        ),
    )(tid, x, heads_w.astype(jnp.float32), hb)


def multi_head_cnn_forward(x_nchw, params, task_id):
    x = jnp.transpose(x_nchw, (0, 2, 3, 1))                       # NCHW -> NHWC
    x = conv_relu_pool(x, params["conv1_w"], params["conv1_b"])   # (B,16,16,32)
    x = conv_relu_pool(x, params["conv2_w"], params["conv2_b"])   # (B, 8, 8,64)
    # match PyTorch's x.view(B,-1) on NCHW: flatten as (C,H,W)
    x = jnp.transpose(x, (0, 3, 1, 2)).reshape(x.shape[0], -1)    # (B,4096)
    x = fc_relu(x, params["fc1_w"], params["fc1_b"])              # (B,256)
    return multi_head_linear(x, params["heads_w"], params["heads_b"], task_id)


# ------------------------- deterministic params & reference -------------------------

def init_params(key, task_count=3):
    ks = jax.random.split(key, 8)
    return {
        # conv weights stored HWIO (equivalent to PyTorch's OIHW semantics)
        "conv1_w": 0.05 * jax.random.normal(ks[0], (3, 3, 3, 32), jnp.float32),
        "conv1_b": 0.05 * jax.random.normal(ks[1], (32,), jnp.float32),
        "conv2_w": 0.05 * jax.random.normal(ks[2], (3, 3, 32, 64), jnp.float32),
        "conv2_b": 0.05 * jax.random.normal(ks[3], (64,), jnp.float32),
        # fc / head weights stored (in, out); PyTorch Linear applies x @ W.T
        "fc1_w": 0.01 * jax.random.normal(ks[4], (64 * 8 * 8, 256), jnp.float32),
        "fc1_b": 0.01 * jax.random.normal(ks[5], (256,), jnp.float32),
        "heads_w": 0.05 * jax.random.normal(ks[6], (task_count, 256, 10), jnp.float32),
        "heads_b": 0.05 * jax.random.normal(ks[7], (task_count, 10), jnp.float32),
    }


def reference_forward(x_nchw, params, task_id):
    """Plain-JAX reference with the same bf16-input / f32-accumulate numerics."""
    def conv(x, w, b):
        y = jax.lax.conv_general_dilated(
            x.astype(jnp.bfloat16), w.astype(jnp.bfloat16), (1, 1), "SAME",
            dimension_numbers=("NHWC", "HWIO", "NHWC"),
            preferred_element_type=jnp.float32)
        return jnp.maximum(y + b, 0.0)

    def pool(x):
        return jax.lax.reduce_window(x, -jnp.inf, jax.lax.max,
                                     (1, 2, 2, 1), (1, 2, 2, 1), "VALID")

    x = jnp.transpose(x_nchw, (0, 2, 3, 1))
    x = pool(conv(x, params["conv1_w"], params["conv1_b"]))
    x = pool(conv(x, params["conv2_w"], params["conv2_b"]))
    x = jnp.transpose(x, (0, 3, 1, 2)).reshape(x.shape[0], -1)
    x = jax.lax.dot(x.astype(jnp.bfloat16), params["fc1_w"].astype(jnp.bfloat16),
                    preferred_element_type=jnp.float32)
    x = jnp.maximum(x + params["fc1_b"], 0.0)
    return x @ params["heads_w"][task_id] + params["heads_b"][task_id]


# ------------------------- main -------------------------

if __name__ == "__main__":
    key = jax.random.PRNGKey(0)
    kx, kp = jax.random.split(key)
    # fc1 expects 64*8*8 features -> spatial size 32x32 (e.g. CIFAR-like input)
    x = jax.random.normal(kx, (2, 3, 32, 32), jnp.float32)
    params = init_params(kp, task_count=3)
    task_id = 1

    out = jax.jit(multi_head_cnn_forward)(x, params, task_id)
    out = jax.block_until_ready(out)

    ref = jax.block_until_ready(reference_forward(x, params, task_id))
    assert out.shape == (2, 10) and out.dtype == jnp.float32
    max_err = float(jnp.max(jnp.abs(out - ref)))
    assert jnp.allclose(out, ref, atol=2e-2, rtol=2e-2), (
        f"mismatch vs JAX reference (max abs err {max_err})")

    print("KERNEL_OK")
</pallas_src>

<mosaic_0001>
module attributes {stable_mosaic.version = 11 : i64} {
  func.func @_conv_relu_pool_kernel(%arg0: i32, %arg1: memref<1024x32xbf16, #tpu.memory_space<vmem>>, %arg2: memref<32x32xbf16, #tpu.memory_space<vmem>>, %arg3: memref<1x32xf32, #tpu.memory_space<vmem>>, %arg4: memref<256x32xf32, #tpu.memory_space<vmem>>) attributes {dimension_semantics = [#tpu.dimension_semantics<parallel>], iteration_bounds = array<i64: 2>, scalar_prefetch = 0 : i64, scratch_operands = 0 : i64, tpu.core_type = #tpu.core_type<tc>, window_params = [{transform_indices = @transform_0, window_bounds = array<i64: 1024, 32>}, {pipeline_mode = #tpu.pipeline_mode<synchronous>, transform_indices = @transform_1, window_bounds = array<i64: 32, 32>}, {pipeline_mode = #tpu.pipeline_mode<synchronous>, transform_indices = @transform_2, window_bounds = array<i64: 1, 32>}, {transform_indices = @transform_3, window_bounds = array<i64: 256, 32>}]} {
    %c0 = arith.constant 0 : index
    %c0_0 = arith.constant 0 : index
    %0 = vector.load %arg1[%c0, %c0_0] : memref<1024x32xbf16, #tpu.memory_space<vmem>>, vector<1024x32xbf16>
    %c0_1 = arith.constant 0 : index
    %c0_2 = arith.constant 0 : index
    %1 = vector.load %arg2[%c0_1, %c0_2] : memref<32x32xbf16, #tpu.memory_space<vmem>>, vector<32x32xbf16>
    %cst = arith.constant dense<0.000000e+00> : vector<1024x32xf32>
    %2 = tpu.matmul %0, %1, %cst {dimension_numbers = #tpu.dot_dimension_numbers<[1], [0], [0], [1], [0, 0, 1, 1], [], []>} : vector<1024x32xbf16>, vector<32x32xbf16>, vector<1024x32xf32> -> vector<1024x32xf32>
    %3 = vector.extract_strided_slice %2 {offsets = [0, 0], sizes = [256, 32], strides = [1, 1]} : vector<1024x32xf32> to vector<256x32xf32>
    %4 = vector.extract_strided_slice %2 {offsets = [256, 0], sizes = [256, 32], strides = [1, 1]} : vector<1024x32xf32> to vector<256x32xf32>
    %5 = arith.maximumf %3, %4 : vector<256x32xf32>
    %6 = vector.extract_strided_slice %2 {offsets = [512, 0], sizes = [256, 32], strides = [1, 1]} : vector<1024x32xf32> to vector<256x32xf32>
    %7 = vector.extract_strided_slice %2 {offsets = [768, 0], sizes = [256, 32], strides = [1, 1]} : vector<1024x32xf32> to vector<256x32xf32>
    %8 = arith.maximumf %6, %7 : vector<256x32xf32>
    %9 = arith.maximumf %5, %8 : vector<256x32xf32>
    %c0_3 = arith.constant 0 : index
    %c0_4 = arith.constant 0 : index
    %10 = vector.load %arg3[%c0_3, %c0_4] : memref<1x32xf32, #tpu.memory_space<vmem>>, vector<1x32xf32>
    %11 = vector.broadcast %10 : vector<1x32xf32> to vector<256x32xf32>
    %12 = arith.addf %9, %11 : vector<256x32xf32>
    %cst_5 = arith.constant 0.000000e+00 : f32
    %13 = vector.broadcast %cst_5 : f32 to vector<256x32xf32>
    %14 = arith.maximumf %12, %13 : vector<256x32xf32>
    %c0_6 = arith.constant 0 : index
    %c0_7 = arith.constant 0 : index
    %15 = vector.load %arg4[%c0_6, %c0_7] : memref<256x32xf32, #tpu.memory_space<vmem>>, vector<256x32xf32>
    tpu.vector_store %arg4[%c0_6, %c0_7], %14 {strides = array<i32>} : memref<256x32xf32, #tpu.memory_space<vmem>>, vector<256x32xf32>,
    return
  }
  func.func @transform_0(%arg0: i32) -> (i32, i32) {
    %c0_i32 = arith.constant 0 : i32
    %c0_i32_0 = arith.constant 0 : i32
    return %arg0, %c0_i32 : i32, i32
  }
  func.func @transform_1(%arg0: i32) -> (i32, i32) {
    %c0_i32 = arith.constant 0 : i32
    %c0_i32_0 = arith.constant 0 : i32
    %c0_i32_1 = arith.constant 0 : i32
    return %c0_i32, %c0_i32_0 : i32, i32
  }
  func.func @transform_2(%arg0: i32) -> (i32, i32) {
    %c0_i32 = arith.constant 0 : i32
    %c0_i32_0 = arith.constant 0 : i32
    %c0_i32_1 = arith.constant 0 : i32
    return %c0_i32, %c0_i32_0 : i32, i32
  }
  func.func @transform_3(%arg0: i32) -> (i32, i32) {
    %c0_i32 = arith.constant 0 : i32
    %c0_i32_0 = arith.constant 0 : i32
    return %arg0, %c0_i32 : i32, i32
  }
}

module attributes {stable_mosaic.version = 11 : i64} {
  func.func @_conv_relu_pool_kernel(%arg0: i32, %arg1: memref<256x288xbf16, #tpu.memory_space<vmem>>, %arg2: memref<288x64xbf16, #tpu.memory_space<vmem>>, %arg3: memref<1x64xf32, #tpu.memory_space<vmem>>, %arg4: memref<64x64xf32, #tpu.memory_space<vmem>>) attributes {dimension_semantics = [#tpu.dimension_semantics<parallel>], iteration_bounds = array<i64: 2>, scalar_prefetch = 0 : i64, scratch_operands = 0 : i64, tpu.core_type = #tpu.core_type<tc>, window_params = [{transform_indices = @transform_0, window_bounds = array<i64: 256, 288>}, {pipeline_mode = #tpu.pipeline_mode<synchronous>, transform_indices = @transform_1, window_bounds = array<i64: 288, 64>}, {pipeline_mode = #tpu.pipeline_mode<synchronous>, transform_indices = @transform_2, window_bounds = array<i64: 1, 64>}, {transform_indices = @transform_3, window_bounds = array<i64: 64, 64>}]} {
    %c0 = arith.constant 0 : index
    %c0_0 = arith.constant 0 : index
    %0 = vector.load %arg1[%c0, %c0_0] : memref<256x288xbf16, #tpu.memory_space<vmem>>, vector<256x288xbf16>
    %c0_1 = arith.constant 0 : index
    %c0_2 = arith.constant 0 : index
    %1 = vector.load %arg2[%c0_1, %c0_2] : memref<288x64xbf16, #tpu.memory_space<vmem>>, vector<288x64xbf16>
    %cst = arith.constant dense<0.000000e+00> : vector<256x64xf32>
    %2 = tpu.matmul %0, %1, %cst {dimension_numbers = #tpu.dot_dimension_numbers<[1], [0], [0], [1], [0, 0, 1, 1], [], []>} : vector<256x288xbf16>, vector<288x64xbf16>, vector<256x64xf32> -> vector<256x64xf32>
    %3 = vector.extract_strided_slice %2 {offsets = [0, 0], sizes = [64, 64], strides = [1, 1]} : vector<256x64xf32> to vector<64x64xf32>
    %4 = vector.extract_strided_slice %2 {offsets = [64, 0], sizes = [64, 64], strides = [1, 1]} : vector<256x64xf32> to vector<64x64xf32>
    %5 = arith.maximumf %3, %4 : vector<64x64xf32>
    %6 = vector.extract_strided_slice %2 {offsets = [128, 0], sizes = [64, 64], strides = [1, 1]} : vector<256x64xf32> to vector<64x64xf32>
    %7 = vector.extract_strided_slice %2 {offsets = [192, 0], sizes = [64, 64], strides = [1, 1]} : vector<256x64xf32> to vector<64x64xf32>
    %8 = arith.maximumf %6, %7 : vector<64x64xf32>
    %9 = arith.maximumf %5, %8 : vector<64x64xf32>
    %c0_3 = arith.constant 0 : index
    %c0_4 = arith.constant 0 : index
    %10 = vector.load %arg3[%c0_3, %c0_4] : memref<1x64xf32, #tpu.memory_space<vmem>>, vector<1x64xf32>
    %11 = vector.broadcast %10 : vector<1x64xf32> to vector<64x64xf32>
    %12 = arith.addf %9, %11 : vector<64x64xf32>
    %cst_5 = arith.constant 0.000000e+00 : f32
    %13 = vector.broadcast %cst_5 : f32 to vector<64x64xf32>
    %14 = arith.maximumf %12, %13 : vector<64x64xf32>
    %c0_6 = arith.constant 0 : index
    %c0_7 = arith.constant 0 : index
    %15 = vector.load %arg4[%c0_6, %c0_7] : memref<64x64xf32, #tpu.memory_space<vmem>>, vector<64x64xf32>
    tpu.vector_store %arg4[%c0_6, %c0_7], %14 {strides = array<i32>} : memref<64x64xf32, #tpu.memory_space<vmem>>, vector<64x64xf32>,
    return
  }
  func.func @transform_0(%arg0: i32) -> (i32, i32) {
    %c0_i32 = arith.constant 0 : i32
    %c0_i32_0 = arith.constant 0 : i32
    return %arg0, %c0_i32 : i32, i32
  }
  func.func @transform_1(%arg0: i32) -> (i32, i32) {
    %c0_i32 = arith.constant 0 : i32
    %c0_i32_0 = arith.constant 0 : i32
    %c0_i32_1 = arith.constant 0 : i32
    return %c0_i32, %c0_i32_0 : i32, i32
  }
  func.func @transform_2(%arg0: i32) -> (i32, i32) {
    %c0_i32 = arith.constant 0 : i32
    %c0_i32_0 = arith.constant 0 : i32
    %c0_i32_1 = arith.constant 0 : i32
    return %c0_i32, %c0_i32_0 : i32, i32
  }
  func.func @transform_3(%arg0: i32) -> (i32, i32) {
    %c0_i32 = arith.constant 0 : i32
    %c0_i32_0 = arith.constant 0 : i32
    return %arg0, %c0_i32 : i32, i32
  }
}

module attributes {stable_mosaic.version = 11 : i64} {
  func.func @_fc_relu_kernel(%arg0: i32, %arg1: i32, %arg2: memref<2x512xbf16, #tpu.memory_space<vmem>>, %arg3: memref<512x128xbf16, #tpu.memory_space<vmem>>, %arg4: memref<1x128xf32, #tpu.memory_space<vmem>>, %arg5: memref<2x128xf32, #tpu.memory_space<vmem>>, %arg6: memref<2x128xf32, #tpu.memory_space<vmem>>) attributes {dimension_semantics = [#tpu.dimension_semantics<parallel>, #tpu.dimension_semantics<arbitrary>], iteration_bounds = array<i64: 2, 8>, scalar_prefetch = 0 : i64, scratch_operands = 1 : i64, tpu.core_type = #tpu.core_type<tc>, window_params = [{transform_indices = @transform_0, window_bounds = array<i64: 2, 512>}, {transform_indices = @transform_1, window_bounds = array<i64: 512, 128>}, {transform_indices = @transform_2, window_bounds = array<i64: 1, 128>}, {transform_indices = @transform_3, window_bounds = array<i64: 2, 128>}]} {
    %c0_i32 = arith.constant 0 : i32
    %0 = arith.cmpi eq, %arg1, %c0_i32 : i32
    %1 = arith.extui %0 : i1 to i32
    %c0_i32_0 = arith.constant 0 : i32
    %2 = arith.cmpi ne, %1, %c0_i32_0 : i32
    scf.if %2 {
      %cst_9 = arith.constant 0.000000e+00 : f32
      %12 = vector.broadcast %cst_9 : f32 to vector<2x128xf32>
      %c0_10 = arith.constant 0 : index
      %c0_11 = arith.constant 0 : index
      %13 = vector.load %arg6[%c0_10, %c0_11] : memref<2x128xf32, #tpu.memory_space<vmem>>, vector<2x128xf32>
      tpu.vector_store %arg6[%c0_10, %c0_11], %12 {strides = array<i32>} : memref<2x128xf32, #tpu.memory_space<vmem>>, vector<2x128xf32>,
    } else {
    }
    %c0 = arith.constant 0 : index
    %c0_1 = arith.constant 0 : index
    %3 = vector.load %arg6[%c0, %c0_1] : memref<2x128xf32, #tpu.memory_space<vmem>>, vector<2x128xf32>
    %c0_2 = arith.constant 0 : index
    %c0_3 = arith.constant 0 : index
    %4 = vector.load %arg2[%c0_2, %c0_3] : memref<2x512xbf16, #tpu.memory_space<vmem>>, vector<2x512xbf16>
    %c0_4 = arith.constant 0 : index
    %c0_5 = arith.constant 0 : index
    %5 = vector.load %arg3[%c0_4, %c0_5] : memref<512x128xbf16, #tpu.memory_space<vmem>>, vector<512x128xbf16>
    %cst = arith.constant dense<0.000000e+00> : vector<2x128xf32>
    %6 = tpu.matmul %4, %5, %cst {dimension_numbers = #tpu.dot_dimension_numbers<[1], [0], [0], [1], [0, 0, 1, 1], [], []>} : vector<2x512xbf16>, vector<512x128xbf16>, vector<2x128xf32> -> vector<2x128xf32>
    %7 = arith.addf %3, %6 : vector<2x128xf32>
    %c0_6 = arith.constant 0 : index
    %c0_7 = arith.constant 0 : index
    %8 = vector.load %arg6[%c0_6, %c0_7] : memref<2x128xf32, #tpu.memory_space<vmem>>, vector<2x128xf32>
    tpu.vector_store %arg6[%c0_6, %c0_7], %7 {strides = array<i32>} : memref<2x128xf32, #tpu.memory_space<vmem>>, vector<2x128xf32>,
    %c7_i32 = arith.constant 7 : i32
    %9 = arith.cmpi eq, %arg1, %c7_i32 : i32
    %10 = arith.extui %9 : i1 to i32
    %c0_i32_8 = arith.constant 0 : i32
    %11 = arith.cmpi ne, %10, %c0_i32_8 : i32
    scf.if %11 {
      %c0_9 = arith.constant 0 : index
      %c0_10 = arith.constant 0 : index
      %12 = vector.load %arg6[%c0_9, %c0_10] : memref<2x128xf32, #tpu.memory_space<vmem>>, vector<2x128xf32>
      %c0_11 = arith.constant 0 : index
      %c0_12 = arith.constant 0 : index
      %13 = vector.load %arg4[%c0_11, %c0_12] : memref<1x128xf32, #tpu.memory_space<vmem>>, vector<1x128xf32>
      %14 = vector.broadcast %13 : vector<1x128xf32> to vector<2x128xf32>
      %15 = arith.addf %12, %14 : vector<2x128xf32>
      %cst_13 = arith.constant 0.000000e+00 : f32
      %16 = vector.broadcast %cst_13 : f32 to vector<2x128xf32>
      %17 = arith.maximumf %15, %16 : vector<2x128xf32>
      %c0_14 = arith.constant 0 : index
      %c0_15 = arith.constant 0 : index
      %18 = vector.load %arg5[%c0_14, %c0_15] : memref<2x128xf32, #tpu.memory_space<vmem>>, vector<2x128xf32>
      tpu.vector_store %arg5[%c0_14, %c0_15], %17 {strides = array<i32>} : memref<2x128xf32, #tpu.memory_space<vmem>>, vector<2x128xf32>,
    } else {
    }
    return
  }
  func.func @transform_0(%arg0: i32, %arg1: i32) -> (i32, i32) {
    %c0_i32 = arith.constant 0 : i32
    %c0_i32_0 = arith.constant 0 : i32
    return %c0_i32, %arg1 : i32, i32
  }
  func.func @transform_1(%arg0: i32, %arg1: i32) -> (i32, i32) {
    %c0_i32 = arith.constant 0 : i32
    return %arg1, %arg0 : i32, i32
  }
  func.func @transform_2(%arg0: i32, %arg1: i32) -> (i32, i32) {
    %c0_i32 = arith.constant 0 : i32
    %c0_i32_0 = arith.constant 0 : i32
    return %c0_i32, %arg0 : i32, i32
  }
  func.func @transform_3(%arg0: i32, %arg1: i32) -> (i32, i32) {
    %c0_i32 = arith.constant 0 : i32
    %c0_i32_0 = arith.constant 0 : i32
    return %c0_i32, %arg0 : i32, i32
  }
}

module attributes {stable_mosaic.version = 11 : i64} {
  func.func @_head_kernel(%arg0: i32, %arg1: memref<1xi32, #tpu.memory_space<smem>>, %arg2: memref<2x256xf32, #tpu.memory_space<vmem>>, %arg3: memref<1x256x10xf32, #tpu.memory_space<vmem>>, %arg4: memref<1x1x10xf32, #tpu.memory_space<vmem>>, %arg5: memref<2x10xf32, #tpu.memory_space<vmem>>) attributes {dimension_semantics = [#tpu.dimension_semantics<arbitrary>], iteration_bounds = array<i64: 1>, scalar_prefetch = 1 : i64, scratch_operands = 0 : i64, tpu.core_type = #tpu.core_type<tc>, window_params = [{pipeline_mode = #tpu.pipeline_mode<synchronous>, transform_indices = @transform_0, window_bounds = array<i64: 2, 256>}, {transform_indices = @transform_1, window_bounds = array<i64: 1, 256, 10>}, {transform_indices = @transform_2, window_bounds = array<i64: 1, 1, 10>}, {pipeline_mode = #tpu.pipeline_mode<synchronous>, transform_indices = @transform_3, window_bounds = array<i64: 2, 10>}]} {
    %c0 = arith.constant 0 : index
    %c0_0 = arith.constant 0 : index
    %0 = vector.load %arg2[%c0, %c0_0] : memref<2x256xf32, #tpu.memory_space<vmem>>, vector<2x256xf32>
    %c0_1 = arith.constant 0 : index
    %c0_2 = arith.constant 0 : index
    %c0_3 = arith.constant 0 : index
    %1 = vector.load %arg3[%c0_1, %c0_2, %c0_3] : memref<1x256x10xf32, #tpu.memory_space<vmem>>, vector<1x256x10xf32>
    %2 = vector.shape_cast %1 : vector<1x256x10xf32> to vector<256x10xf32>
    %cst = arith.constant dense<0.000000e+00> : vector<2x10xf32>
    %3 = tpu.matmul %0, %2, %cst {dimension_numbers = #tpu.dot_dimension_numbers<[1], [0], [0], [1], [0, 0, 1, 1], [], []>} : vector<2x256xf32>, vector<256x10xf32>, vector<2x10xf32> -> vector<2x10xf32>
    %c0_4 = arith.constant 0 : index
    %c0_5 = arith.constant 0 : index
    %c0_6 = arith.constant 0 : index
    %4 = vector.load %arg4[%c0_4, %c0_5, %c0_6] : memref<1x1x10xf32, #tpu.memory_space<vmem>>, vector<1x1x10xf32>
    %5 = vector.shape_cast %4 : vector<1x1x10xf32> to vector<1x10xf32>
    %6 = vector.broadcast %5 : vector<1x10xf32> to vector<2x10xf32>
    %7 = arith.addf %3, %6 : vector<2x10xf32>
    %c0_7 = arith.constant 0 : index
    %c0_8 = arith.constant 0 : index
    %8 = vector.load %arg5[%c0_7, %c0_8] : memref<2x10xf32, #tpu.memory_space<vmem>>, vector<2x10xf32>
    tpu.vector_store %arg5[%c0_7, %c0_8], %7 {strides = array<i32>} : memref<2x10xf32, #tpu.memory_space<vmem>>, vector<2x10xf32>,
    return
  }
  func.func @transform_0(%arg0: i32, %arg1: memref<1xi32, #tpu.memory_space<smem>>) -> (i32, i32) {
    %c0_i32 = arith.constant 0 : i32
    %c0_i32_0 = arith.constant 0 : i32
    %c0_i32_1 = arith.constant 0 : i32
    return %c0_i32, %c0_i32_0 : i32, i32
  }
  func.func @transform_1(%arg0: i32, %arg1: memref<1xi32, #tpu.memory_space<smem>>) -> (i32, i32, i32) {
    %c0 = arith.constant 0 : index
    %0 = memref.load %arg1[%c0] : memref<1xi32, #tpu.memory_space<smem>>
    %c0_i32 = arith.constant 0 : i32
    %c0_i32_0 = arith.constant 0 : i32
    %c0_i32_1 = arith.constant 0 : i32
    return %0, %c0_i32, %c0_i32_0 : i32, i32, i32
  }
  func.func @transform_2(%arg0: i32, %arg1: memref<1xi32, #tpu.memory_space<smem>>) -> (i32, i32, i32) {
    %c0 = arith.constant 0 : index
    %0 = memref.load %arg1[%c0] : memref<1xi32, #tpu.memory_space<smem>>
    %c0_i32 = arith.constant 0 : i32
    %c0_i32_0 = arith.constant 0 : i32
    %c0_i32_1 = arith.constant 0 : i32
    return %0, %c0_i32, %c0_i32_0 : i32, i32, i32
  }
  func.func @transform_3(%arg0: i32, %arg1: memref<1xi32, #tpu.memory_space<smem>>) -> (i32, i32) {
    %c0_i32 = arith.constant 0 : i32
    %c0_i32_0 = arith.constant 0 : i32
    %c0_i32_1 = arith.constant 0 : i32
    return %c0_i32, %c0_i32_0 : i32, i32
  }
}

</mosaic_0001>

<llo_original>
// kernel: multi_head_cnn_forward.4
$region0: #{multi_head_cnn_forward.4}
  #allocation0 [shape = 'u32[]', space=smem, size = 0x4, offset = 0x4, fixed_abs, tag = 'smem constant byte address 0x4 - core index']
  #allocation1 [shape = 'u32[144,128]{1,0:T(1,128)}', space=vmem, size = 0x12000, scoped, tag = 'internal scratch']
  %s0 = inlined_call_operand.vmem [shape: bf16[2048,32], index: 0, kind: input, shape index: {}]
  %s1 = inlined_call_operand.vmem [shape: bf16[32,32], index: 1, kind: input, shape index: {}]
  %s2 = inlined_call_operand.vmem [shape: f32[1,32], index: 2, kind: input, shape index: {}]
  %s3 = inlined_call_operand.vmem [shape: f32[512,32], index: 3, kind: output, shape index: {}]
  %s4 = sld [smem:[#allocation0]]
  $region45: #{multi_head_cnn_forward.4} parent=0
    _
  %s6 = ssub.s32 1, %s4
  %s7 = scalar_select 0, %s6, %s4
  loop: start=0, step=1, limit=4
  $region2: #{multi_head_cnn_forward.4} parent=0 // loop_pre_header
    _
  $region3: #{multi_head_cnn_forward.4} parent=0 // loop_header
    %s9 = sphi 0, %s13
    %p10 = scmp.ge.s32.totalorder %s9, 4
    %s19 = sphi 0, %s21
    %s22 = sphi 0, %s19
    %s23 = sphi 0, %s22
    %s39 = sphi 0, %s23
    %s43 = sphi 0, %s43
    %s45 = sphi 0, %s43
    %s46 = sphi 0, %s45
    %s60 = sphi 0, %s46
    %s64 = sphi 0, %s64
    %s66 = sphi 0, %s64
    %s67 = sphi 0, %s66
    %s81 = sphi 0, %s67
    %s87 = sphi 0, %s89
    %s90 = sphi 0, %s87
    %s91 = sphi 0, %s90
    %s107 = sphi 0, %s91
  $region4: #{multi_head_cnn_forward.4} parent=0 // loop_header_branch
    %12 = sbr.rel (%p10) target = $region8
  $region5: #{multi_head_cnn_forward.4} parent=0 // loop_body
    %s14 = ssub.s32 %s9, 1
    %s15 = ssub.s32 %s9, 2
    %s16 = sadd.s32 %s9, 1
    %s17 = ssub.s32 %s9, %s16
    %p18 = scmp.eq.s32.totalorder %s17, 0
    %s20 = sadd.s32 %s19, 1
    %s21 = scalar_select %p18, %s19, %s20
    %p24 = pneg %p18
    %p25 = scmp.eq.s32.totalorder %s9, 1
    %p26 = por %p24, %p25
    %p27 = scmp.ne.s32.totalorder %s19, %s22
    %p28 = scmp.eq.s32.totalorder %s9, 0
    %p29 = por %p27, %p28
    %p30 = scmp.ne.s32.totalorder %s19, %s22
    %p31 = scmp.eq.s32.totalorder %s14, 1
    %p32 = por %p30, %p31
    %p33 = scmp.ne.s32.totalorder %s22, %s23
    %p34 = scmp.eq.s32.totalorder %s14, 0
    %p35 = por %p33, %p34
    %p36 = scmp.ne.s32.totalorder %s22, %s23
    %p37 = scmp.eq.s32.totalorder %s15, 1
    %p38 = por %p36, %p37
    %p40 = scmp.ne.s32.totalorder %s23, %s39
    %p41 = scmp.eq.s32.totalorder %s15, 0
    %p42 = por %p40, %p41
    %s44 = sadd.s32 %s43, 1
    %p47 = scmp.eq.s32.totalorder %s9, 1
    %p48 = scmp.ne.s32.totalorder %s43, %s45
    %p49 = scmp.eq.s32.totalorder %s9, 0
    %p50 = por %p48, %p49
    %p51 = scmp.ne.s32.totalorder %s43, %s45
    %p52 = scmp.eq.s32.totalorder %s14, 1
    %p53 = por %p51, %p52
    %p54 = scmp.ne.s32.totalorder %s45, %s46
    %p55 = scmp.eq.s32.totalorder %s14, 0
    %p56 = por %p54, %p55
    %p57 = scmp.ne.s32.totalorder %s45, %s46
    %p58 = scmp.eq.s32.totalorder %s15, 1
    %p59 = por %p57, %p58
    %p61 = scmp.ne.s32.totalorder %s46, %s60
    %p62 = scmp.eq.s32.totalorder %s15, 0
    %p63 = por %p61, %p62
    %s65 = sadd.s32 %s64, 1
    %p68 = scmp.eq.s32.totalorder %s9, 1
    %p69 = scmp.ne.s32.totalorder %s64, %s66
    %p70 = scmp.eq.s32.totalorder %s9, 0
    %p71 = por %p69, %p70
    %p72 = scmp.ne.s32.totalorder %s64, %s66
    %p73 = scmp.eq.s32.totalorder %s14, 1
    %p74 = por %p72, %p73
    %p75 = scmp.ne.s32.totalorder %s66, %s67
    %p76 = scmp.eq.s32.totalorder %s14, 0
    %p77 = por %p75, %p76
    %p78 = scmp.ne.s32.totalorder %s66, %s67
    %p79 = scmp.eq.s32.totalorder %s15, 1
    %p80 = por %p78, %p79
    %p82 = scmp.ne.s32.totalorder %s67, %s81
    %p83 = scmp.eq.s32.totalorder %s15, 0
    %p84 = por %p82, %p83
    %s85 = ssub.s32 %s9, %s16
    %p86 = scmp.eq.s32.totalorder %s85, 0
    %s88 = sadd.s32 %s87, 1
    %s89 = scalar_select %p86, %s87, %s88
    %p92 = pneg %p86
    %p93 = scmp.eq.s32.totalorder %s9, 1
    %p94 = por %p92, %p93
    %p95 = scmp.ne.s32.totalorder %s87, %s90
    %p96 = scmp.eq.s32.totalorder %s9, 0
    %p97 = por %p95, %p96
    %p98 = scmp.ne.s32.totalorder %s87, %s90
    %p99 = scmp.eq.s32.totalorder %s14, 1
    %p100 = por %p98, %p99
    %p101 = scmp.ne.s32.totalorder %s90, %s91
    %p102 = scmp.eq.s32.totalorder %s14, 0
    %p103 = por %p101, %p102
    %p104 = scmp.ne.s32.totalorder %s90, %s91
    %p105 = scmp.eq.s32.totalorder %s15, 1
    %p106 = por %p104, %p105
    %p108 = scmp.ne.s32.totalorder %s91, %s107
    %p109 = scmp.eq.s32.totalorder %s15, 0
    %p110 = por %p108, %p109
    %p111 = scmp.le.s32.totalorder 1, %s9
    %p112 = scmp.lt.s32.totalorder %s9, 3
    %p113 = pnand %p111, %p112
    %p114 = pneg %p113
    // Predicated region
    $region9: #{multi_head_cnn_forward.4} parent=5 // pred_check
      _
    $region10: #{multi_head_cnn_forward.4} parent=5 // pred_check_branch
      %116 = sbr.rel (%p113) target = $region12
    $region11: #{multi_head_cnn_forward.4} parent=5 // pred_region
      %s117 = ssub.s32 %s9, 1
      // Predicated region
      $region13: #{multi_head_cnn_forward.4} parent=11 // pred_check
        %p118 = pneg %p56
      $region14: #{multi_head_cnn_forward.4} parent=11 // pred_check_branch
        %120 = sbr.rel (%p118) target = $region16
      $region15: #{multi_head_cnn_forward.4} parent=11 // pred_region
        _
      $region16: #{multi_head_cnn_forward.4} parent=11 // pred_fallthru
        _
      // Predicated region
      $region17: #{multi_head_cnn_forward.4} parent=11 // pred_check
        %p121 = pneg %p77
      $region18: #{multi_head_cnn_forward.4} parent=11 // pred_check_branch
        %123 = sbr.rel (%p121) target = $region20
      $region19: #{multi_head_cnn_forward.4} parent=11 // pred_region
        _
      $region20: #{multi_head_cnn_forward.4} parent=11 // pred_fallthru
        _
    $region12: #{multi_head_cnn_forward.4} parent=5 // pred_fallthru
      _
    %p124 = scmp.lt.s32.totalorder %s9, 2
    // Predicated region
    $region21: #{multi_head_cnn_forward.4} parent=5 // pred_check
      %p125 = pneg %p124
    $region22: #{multi_head_cnn_forward.4} parent=5 // pred_check_branch
      %127 = sbr.rel (%p125) target = $region24
    $region23: #{multi_head_cnn_forward.4} parent=5 // pred_region
      // Predicated region
      $region25: #{multi_head_cnn_forward.4} parent=23 // pred_check
        %p128 = pneg %p29
      $region26: #{multi_head_cnn_forward.4} parent=23 // pred_check_branch
        %130 = sbr.rel (%p128) target = $region28
      $region27: #{multi_head_cnn_forward.4} parent=23 // pred_region
        %s131 = smul.u32 128, %s9
        %p132 = scmp.lt.s32.totalorder %s131, 255
        %s133 = scalar_select %p132, %s131, 255
        %s134 = smul.addr %s133, 4
        %s135 = scalar_lea.vmem %s0, %s134
        %s136 = smul.u32 128, %s9
      $region28: #{multi_head_cnn_forward.4} parent=23 // pred_fallthru
        _
    $region24: #{multi_head_cnn_forward.4} parent=5 // pred_fallthru
      _
    %p137 = scmp.le.s32.totalorder 1, %s9
    %p138 = scmp.lt.s32.totalorder %s9, 3
    %p139 = pnand %p137, %p138
    %p140 = pneg %p139
    // Predicated region
    $region29: #{multi_head_cnn_forward.4} parent=5 // pred_check
      _
    $region30: #{multi_head_cnn_forward.4} parent=5 // pred_check_branch
      %142 = sbr.rel (%p139) target = $region32
    $region31: #{multi_head_cnn_forward.4} parent=5 // pred_region
      %s143 = ssub.s32 %s9, 1
      %s144 = smul.u32 128, %s14
      %p145 = scmp.lt.s32.totalorder %s144, 255
      %s146 = scalar_select %p145, %s144, 255
      %s147 = smul.addr %s146, 4
      %s148 = scalar_lea.vmem %s0, %s147
      %p149 = pneg %p35
      %p150 = pneg %p32
      %p151 = pneg %p56
      %p152 = pneg %p53
      %p153 = pneg %p77
      %p154 = pneg %p74
      %p155 = pneg %p103
      %p156 = pneg %p100
      %s157 = smul.u32 32, %s14
      %p158 = scmp.lt.s32.totalorder %s157, 63
      %s159 = scalar_select %p158, %s157, 63
      %s160 = smul.addr %s159, 8
      %s161 = scalar_lea.vmem %s3, %s160
      %s162 = smul.u32 128, %s14
      %p163 = scmp.lt.s32.totalorder %s162, 255
      %s164 = scalar_select %p163, %s162, 255
      %s165 = smul.addr %s164, 4
      %s166 = scalar_lea.vmem %s0, %s165
      %s167 = smul.u32 128, %s14
      %s168 = smul.u32 32, %s14
      %p169 = scmp.lt.s32.totalorder %s168, 63
      %s170 = scalar_select %p169, %s168, 63
      %s171 = smul.addr %s170, 8
      %s172 = scalar_lea.vmem %s3, %s171
      %s173 = smul.u32 32, %s14
      %v175 = vld [vmem:[%s166] sm:$0xf]
      %v176 = vld [vmem:[%s166 + $0x4] sm:$0xf]
      %v177 = vld [vmem:[%s166 + $0x8] sm:$0xf]
      %v178 = vld [vmem:[%s166 + $0xc] sm:$0xf]
      %v179 = vld [vmem:[%s166 + $0x10] sm:$0xf]
      %v180 = vld [vmem:[%s166 + $0x14] sm:$0xf]
      %v181 = vld [vmem:[%s166 + $0x18] sm:$0xf]
      %v182 = vld [vmem:[%s166 + $0x1c] sm:$0xf]
      %v183 = vld [vmem:[%s166 + $0x20] sm:$0xf]
      %v184 = vld [vmem:[%s166 + $0x24] sm:$0xf]
      %v185 = vld [vmem:[%s166 + $0x28] sm:$0xf]
      %v186 = vld [vmem:[%s166 + $0x2c] sm:$0xf]
      %v187 = vld [vmem:[%s166 + $0x30] sm:$0xf]
      %v188 = vld [vmem:[%s166 + $0x34] sm:$0xf]
      %v189 = vld [vmem:[%s166 + $0x38] sm:$0xf]
      %v190 = vld [vmem:[%s166 + $0x3c] sm:$0xf]
      %v191 = vld [vmem:[%s166 + $0x40] sm:$0xf]
      %v192 = vld [vmem:[%s166 + $0x44] sm:$0xf]
      %v193 = vld [vmem:[%s166 + $0x48] sm:$0xf]
      %v194 = vld [vmem:[%s166 + $0x4c] sm:$0xf]
      %v195 = vld [vmem:[%s166 + $0x50] sm:$0xf]
      %v196 = vld [vmem:[%s166 + $0x54] sm:$0xf]
      %v197 = vld [vmem:[%s166 + $0x58] sm:$0xf]
      %v198 = vld [vmem:[%s166 + $0x5c] sm:$0xf]
      %v199 = vld [vmem:[%s166 + $0x60] sm:$0xf]
      %v200 = vld [vmem:[%s166 + $0x64] sm:$0xf]
      %v201 = vld [vmem:[%s166 + $0x68] sm:$0xf]
      %v202 = vld [vmem:[%s166 + $0x6c] sm:$0xf]
      %v203 = vld [vmem:[%s166 + $0x70] sm:$0xf]
      %v204 = vld [vmem:[%s166 + $0x74] sm:$0xf]
      %v205 = vld [vmem:[%s166 + $0x78] sm:$0xf]
      %v206 = vld [vmem:[%s166 + $0x7c] sm:$0xf]
      %v207 = vld [vmem:[%s166 + $0x80] sm:$0xf]
      %v208 = vld [vmem:[%s166 + $0x84] sm:$0xf]
      %v209 = vld [vmem:[%s166 + $0x88] sm:$0xf]
      %v210 = vld [vmem:[%s166 + $0x8c] sm:$0xf]
      %v211 = vld [vmem:[%s166 + $0x90] sm:$0xf]
      %v212 = vld [vmem:[%s166 + $0x94] sm:$0xf]
      %v213 = vld [vmem:[%s166 + $0x98] sm:$0xf]
      %v214 = vld [vmem:[%s166 + $0x9c] sm:$0xf]
      %v215 = vld [vmem:[%s166 + $0xa0] sm:$0xf]
      %v216 = vld [vmem:[%s166 + $0xa4] sm:$0xf]
      %v217 = vld [vmem:[%s166 + $0xa8] sm:$0xf]
      %v218 = vld [vmem:[%s166 + $0xac] sm:$0xf]
      %v219 = vld [vmem:[%s166 + $0xb0] sm:$0xf]
      %v220 = vld [vmem:[%s166 + $0xb4] sm:$0xf]
      %v221 = vld [vmem:[%s166 + $0xb8] sm:$0xf]
      %v222 = vld [vmem:[%s166 + $0xbc] sm:$0xf]
      %v223 = vld [vmem:[%s166 + $0xc0] sm:$0xf]
      %v224 = vld [vmem:[%s166 + $0xc4] sm:$0xf]
      %v225 = vld [vmem:[%s166 + $0xc8] sm:$0xf]
      %v226 = vld [vmem:[%s166 + $0xcc] sm:$0xf]
      %v227 = vld [vmem:[%s166 + $0xd0] sm:$0xf]
      %v228 = vld [vmem:[%s166 + $0xd4] sm:$0xf]
      %v229 = vld [vmem:[%s166 + $0xd8] sm:$0xf]
      %v230 = vld [vmem:[%s166 + $0xdc] sm:$0xf]
      %v231 = vld [vmem:[%s166 + $0xe0] sm:$0xf]
      %v232 = vld [vmem:[%s166 + $0xe4] sm:$0xf]
      %v233 = vld [vmem:[%s166 + $0xe8] sm:$0xf]
      %v234 = vld [vmem:[%s166 + $0xec] sm:$0xf]
      %v235 = vld [vmem:[%s166 + $0xf0] sm:$0xf]
      %v236 = vld [vmem:[%s166 + $0xf4] sm:$0xf]
      %v237 = vld [vmem:[%s166 + $0xf8] sm:$0xf]
      %v238 = vld [vmem:[%s166 + $0xfc] sm:$0xf]
      %v239 = vld [vmem:[%s166 + $0x100] sm:$0xf]
      %v240 = vld [vmem:[%s166 + $0x104] sm:$0xf]
      %v241 = vld [vmem:[%s166 + $0x108] sm:$0xf]
      %v242 = vld [vmem:[%s166 + $0x10c] sm:$0xf]
      %v243 = vld [vmem:[%s166 + $0x110] sm:$0xf]
      %v244 = vld [vmem:[%s166 + $0x114] sm:$0xf]
      %v245 = vld [vmem:[%s166 + $0x118] sm:$0xf]
      %v246 = vld [vmem:[%s166 + $0x11c] sm:$0xf]
      %v247 = vld [vmem:[%s166 + $0x120] sm:$0xf]
      %v248 = vld [vmem:[%s166 + $0x124] sm:$0xf]
      %v249 = vld [vmem:[%s166 + $0x128] sm:$0xf]
      %v250 = vld [vmem:[%s166 + $0x12c] sm:$0xf]
      %v251 = vld [vmem:[%s166 + $0x130] sm:$0xf]
      %v252 = vld [vmem:[%s166 + $0x134] sm:$0xf]
      %v253 = vld [vmem:[%s166 + $0x138] sm:$0xf]
      %v254 = vld [vmem:[%s166 + $0x13c] sm:$0xf]
      %v255 = vld [vmem:[%s166 + $0x140] sm:$0xf]
      %v256 = vld [vmem:[%s166 + $0x144] sm:$0xf]
      %v257 = vld [vmem:[%s166 + $0x148] sm:$0xf]
      %v258 = vld [vmem:[%s166 + $0x14c] sm:$0xf]
      %v259 = vld [vmem:[%s166 + $0x150] sm:$0xf]
      %v260 = vld [vmem:[%s166 + $0x154] sm:$0xf]
      %v261 = vld [vmem:[%s166 + $0x158] sm:$0xf]
      %v262 = vld [vmem:[%s166 + $0x15c] sm:$0xf]
      %v263 = vld [vmem:[%s166 + $0x160] sm:$0xf]
      %v264 = vld [vmem:[%s166 + $0x164] sm:$0xf]
      %v265 = vld [vmem:[%s166 + $0x168] sm:$0xf]
      %v266 = vld [vmem:[%s166 + $0x16c] sm:$0xf]
      %v267 = vld [vmem:[%s166 + $0x170] sm:$0xf]
      %v268 = vld [vmem:[%s166 + $0x174] sm:$0xf]
      %v269 = vld [vmem:[%s166 + $0x178] sm:$0xf]
      %v270 = vld [vmem:[%s166 + $0x17c] sm:$0xf]
      %v271 = vld [vmem:[%s166 + $0x180] sm:$0xf]
      %v272 = vld [vmem:[%s166 + $0x184] sm:$0xf]
      %v273 = vld [vmem:[%s166 + $0x188] sm:$0xf]
      %v274 = vld [vmem:[%s166 + $0x18c] sm:$0xf]
      %v275 = vld [vmem:[%s166 + $0x190] sm:$0xf]
      %v276 = vld [vmem:[%s166 + $0x194] sm:$0xf]
      %v277 = vld [vmem:[%s166 + $0x198] sm:$0xf]
      %v278 = vld [vmem:[%s166 + $0x19c] sm:$0xf]
      %v279 = vld [vmem:[%s166 + $0x1a0] sm:$0xf]
      %v280 = vld [vmem:[%s166 + $0x1a4] sm:$0xf]
      %v281 = vld [vmem:[%s166 + $0x1a8] sm:$0xf]
      %v282 = vld [vmem:[%s166 + $0x1ac] sm:$0xf]
      %v283 = vld [vmem:[%s166 + $0x1b0] sm:$0xf]
      %v284 = vld [vmem:[%s166 + $0x1b4] sm:$0xf]
      %v285 = vld [vmem:[%s166 + $0x1b8] sm:$0xf]
      %v286 = vld [vmem:[%s166 + $0x1bc] sm:$0xf]
      %v287 = vld [vmem:[%s166 + $0x1c0] sm:$0xf]
      %v288 = vld [vmem:[%s166 + $0x1c4] sm:$0xf]
      %v289 = vld [vmem:[%s166 + $0x1c8] sm:$0xf]
      %v290 = vld [vmem:[%s166 + $0x1cc] sm:$0xf]
      %v291 = vld [vmem:[%s166 + $0x1d0] sm:$0xf]
      %v292 = vld [vmem:[%s166 + $0x1d4] sm:$0xf]
      %v293 = vld [vmem:[%s166 + $0x1d8] sm:$0xf]
      %v294 = vld [vmem:[%s166 + $0x1dc] sm:$0xf]
      %v295 = vld [vmem:[%s166 + $0x1e0] sm:$0xf]
      %v296 = vld [vmem:[%s166 + $0x1e4] sm:$0xf]
      %v297 = vld [vmem:[%s166 + $0x1e8] sm:$0xf]
      %v298 = vld [vmem:[%s166 + $0x1ec] sm:$0xf]
      %v299 = vld [vmem:[%s166 + $0x1f0] sm:$0xf]
      %v300 = vld [vmem:[%s166 + $0x1f4] sm:$0xf]
      %v301 = vld [vmem:[%s166 + $0x1f8] sm:$0xf]
      %v302 = vld [vmem:[%s166 + $0x1fc] sm:$0xf]
      %v303 = vld [vmem:[%s1] sm:$0xf]
      %v304 = vld [vmem:[%s1 + $0x4] sm:$0xf]
      %v305 = vld [vmem:[%s1 + $0x8] sm:$0xf]
      %v306 = vld [vmem:[%s1 + $0xc] sm:$0xf]
      %v435 = vunpack.c.l.b16 %v175
      %v436 = vunpack.c.l.b16 %v176
      %v437 = vunpack.c.l.b16 %v177
      %v438 = vunpack.c.l.b16 %v178
      %v439 = vunpack.c.l.b16 %v179
      %v440 = vunpack.c.l.b16 %v180
      %v441 = vunpack.c.l.b16 %v181
      %v442 = vunpack.c.l.b16 %v182
      %v443 = vunpack.c.l.b16 %v183
      %v444 = vunpack.c.l.b16 %v184
      %v445 = vunpack.c.l.b16 %v185
      %v446 = vunpack.c.l.b16 %v186
      %v447 = vunpack.c.l.b16 %v187
      %v448 = vunpack.c.l.b16 %v188
      %v449 = vunpack.c.l.b16 %v189
      %v450 = vunpack.c.l.b16 %v190
      %v451 = vunpack.c.l.b16 %v191
      %v452 = vunpack.c.l.b16 %v192
      %v453 = vunpack.c.l.b16 %v193
      %v454 = vunpack.c.l.b16 %v194
      %v455 = vunpack.c.l.b16 %v195
      %v456 = vunpack.c.l.b16 %v196
      %v457 = vunpack.c.l.b16 %v197
      %v458 = vunpack.c.l.b16 %v198
      %v459 = vunpack.c.l.b16 %v199
      %v460 = vunpack.c.l.b16 %v200
      %v461 = vunpack.c.l.b16 %v201
      %v462 = vunpack.c.l.b16 %v202
      %v463 = vunpack.c.l.b16 %v203
      %v464 = vunpack.c.l.b16 %v204
      %v465 = vunpack.c.l.b16 %v205
      %v466 = vunpack.c.l.b16 %v206
      %v467 = vunpack.c.l.b16 %v207
      %v468 = vunpack.c.l.b16 %v208
      %v469 = vunpack.c.l.b16 %v209
      %v470 = vunpack.c.l.b16 %v210
      %v471 = vunpack.c.l.b16 %v211
      %v472 = vunpack.c.l.b16 %v212
      %v473 = vunpack.c.l.b16 %v213
      %v474 = vunpack.c.l.b16 %v214
      %v475 = vunpack.c.l.b16 %v215
      %v476 = vunpack.c.l.b16 %v216
      %v477 = vunpack.c.l.b16 %v217
      %v478 = vunpack.c.l.b16 %v218
      %v479 = vunpack.c.l.b16 %v219
      %v480 = vunpack.c.l.b16 %v220
      %v481 = vunpack.c.l.b16 %v221
      %v482 = vunpack.c.l.b16 %v222
      %v483 = vunpack.c.l.b16 %v223
      %v484 = vunpack.c.l.b16 %v224
      %v485 = vunpack.c.l.b16 %v225
      %v486 = vunpack.c.l.b16 %v226
      %v487 = vunpack.c.l.b16 %v227
      %v488 = vunpack.c.l.b16 %v228
      %v489 = vunpack.c.l.b16 %v229
      %v490 = vunpack.c.l.b16 %v230
      %v491 = vunpack.c.l.b16 %v231
      %v492 = vunpack.c.l.b16 %v232
      %v493 = vunpack.c.l.b16 %v233
      %v494 = vunpack.c.l.b16 %v234
      %v495 = vunpack.c.l.b16 %v235
      %v496 = vunpack.c.l.b16 %v236
      %v497 = vunpack.c.l.b16 %v237
      %v498 = vunpack.c.l.b16 %v238
      %v499 = vunpack.c.l.b16 %v239
      %v500 = vunpack.c.l.b16 %v240
      %v501 = vunpack.c.l.b16 %v241
      %v502 = vunpack.c.l.b16 %v242
      %v503 = vunpack.c.l.b16 %v243
      %v504 = vunpack.c.l.b16 %v244
      %v505 = vunpack.c.l.b16 %v245
      %v506 = vunpack.c.l.b16 %v246
      %v507 = vunpack.c.l.b16 %v247
      %v508 = vunpack.c.l.b16 %v248
      %v509 = vunpack.c.l.b16 %v249
      %v510 = vunpack.c.l.b16 %v250
      %v511 = vunpack.c.l.b16 %v251
      %v512 = vunpack.c.l.b16 %v252
      %v513 = vunpack.c.l.b16 %v253
      %v514 = vunpack.c.l.b16 %v254
      %v515 = vunpack.c.l.b16 %v255
      %v516 = vunpack.c.l.b16 %v256
      %v517 = vunpack.c.l.b16 %v257
      %v518 = vunpack.c.l.b16 %v258
      %v519 = vunpack.c.l.b16 %v259
      %v520 = vunpack.c.l.b16 %v260
      %v521 = vunpack.c.l.b16 %v261
      %v522 = vunpack.c.l.b16 %v262
      %v523 = vunpack.c.l.b16 %v263
      %v524 = vunpack.c.l.b16 %v264
      %v525 = vunpack.c.l.b16 %v265
      %v526 = vunpack.c.l.b16 %v266
      %v527 = vunpack.c.l.b16 %v267
      %v528 = vunpack.c.l.b16 %v268
      %v529 = vunpack.c.l.b16 %v269
      %v530 = vunpack.c.l.b16 %v270
      %v531 = vunpack.c.l.b16 %v271
      %v532 = vunpack.c.l.b16 %v272
      %v533 = vunpack.c.l.b16 %v273
      %v534 = vunpack.c.l.b16 %v274
      %v535 = vunpack.c.l.b16 %v275
      %v536 = vunpack.c.l.b16 %v276
      %v537 = vunpack.c.l.b16 %v277
      %v538 = vunpack.c.l.b16 %v278
      %v539 = vunpack.c.l.b16 %v279
      %v540 = vunpack.c.l.b16 %v280
      %v541 = vunpack.c.l.b16 %v281
      %v542 = vunpack.c.l.b16 %v282
      %v543 = vunpack.c.l.b16 %v283
      %v544 = vunpack.c.l.b16 %v284
      %v545 = vunpack.c.l.b16 %v285
      %v546 = vunpack.c.l.b16 %v286
      %v547 = vunpack.c.l.b16 %v287
      %v548 = vunpack.c.l.b16 %v288
      %v549 = vunpack.c.l.b16 %v289
      %v550 = vunpack.c.l.b16 %v290
      %v551 = vunpack.c.l.b16 %v291
      %v552 = vunpack.c.l.b16 %v292
      %v553 = vunpack.c.l.b16 %v293
      %v554 = vunpack.c.l.b16 %v294
      %v555 = vunpack.c.l.b16 %v295
      %v556 = vunpack.c.l.b16 %v296
      %v557 = vunpack.c.l.b16 %v297
      %v558 = vunpack.c.l.b16 %v298
      %v559 = vunpack.c.l.b16 %v299
      %v560 = vunpack.c.l.b16 %v300
      %v561 = vunpack.c.l.b16 %v301
      %v562 = vunpack.c.l.b16 %v302
      %v563 = vpack.c.b16 %v436, %v435
      %v564 = vpack.c.b16 %v438, %v437
      %v565 = vpack.c.b16 %v440, %v439
      %v566 = vpack.c.b16 %v442, %v441
      %v567 = vpack.c.b16 %v444, %v443
      %v568 = vpack.c.b16 %v446, %v445
      %v569 = vpack.c.b16 %v448, %v447
      %v570 = vpack.c.b16 %v450, %v449
      %v571 = vpack.c.b16 %v452, %v451
      %v572 = vpack.c.b16 %v454, %v453
      %v573 = vpack.c.b16 %v456, %v455
      %v574 = vpack.c.b16 %v458, %v457
      %v575 = vpack.c.b16 %v460, %v459
      %v576 = vpack.c.b16 %v462, %v461
      %v577 = vpack.c.b16 %v464, %v463
      %v578 = vpack.c.b16 %v466, %v465
      %v579 = vpack.c.b16 %v468, %v467
      %v580 = vpack.c.b16 %v470, %v469
      %v581 = vpack.c.b16 %v472, %v471
      %v582 = vpack.c.b16 %v474, %v473
      %v583 = vpack.c.b16 %v476, %v475
      %v584 = vpack.c.b16 %v478, %v477
      %v585 = vpack.c.b16 %v480, %v479
      %v586 = vpack.c.b16 %v482, %v481
      %v587 = vpack.c.b16 %v484, %v483
      %v588 = vpack.c.b16 %v486, %v485
      %v589 = vpack.c.b16 %v488, %v487
      %v590 = vpack.c.b16 %v490, %v489
      %v591 = vpack.c.b16 %v492, %v491
      %v592 = vpack.c.b16 %v494, %v493
      %v593 = vpack.c.b16 %v496, %v495
      %v594 = vpack.c.b16 %v498, %v497
      %v595 = vpack.c.b16 %v500, %v499
      %v596 = vpack.c.b16 %v502, %v501
      %v597 = vpack.c.b16 %v504, %v503
      %v598 = vpack.c.b16 %v506, %v505
      %v599 = vpack.c.b16 %v508, %v507
      %v600 = vpack.c.b16 %v510, %v509
      %v601 = vpack.c.b16 %v512, %v511
      %v602 = vpack.c.b16 %v514, %v513
      %v603 = vpack.c.b16 %v516, %v515
      %v604 = vpack.c.b16 %v518, %v517
      %v605 = vpack.c.b16 %v520, %v519
      %v606 = vpack.c.b16 %v522, %v521
      %v607 = vpack.c.b16 %v524, %v523
      %v608 = vpack.c.b16 %v526, %v525
      %v609 = vpack.c.b16 %v528, %v527
      %v610 = vpack.c.b16 %v530, %v529
      %v611 = vpack.c.b16 %v532, %v531
      %v612 = vpack.c.b16 %v534, %v533
      %v613 = vpack.c.b16 %v536, %v535
      %v614 = vpack.c.b16 %v538, %v537
      %v615 = vpack.c.b16 %v540, %v539
      %v616 = vpack.c.b16 %v542, %v541
      %v617 = vpack.c.b16 %v544, %v543
      %v618 = vpack.c.b16 %v546, %v545
      %v619 = vpack.c.b16 %v548, %v547
      %v620 = vpack.c.b16 %v550, %v549
      %v621 = vpack.c.b16 %v552, %v551
      %v622 = vpack.c.b16 %v554, %v553
      %v623 = vpack.c.b16 %v556, %v555
      %v624 = vpack.c.b16 %v558, %v557
      %v625 = vpack.c.b16 %v560, %v559
      %v626 = vpack.c.b16 %v562, %v561
      %v631 = vunpack.c.l.b16 %v303
      %v632 = vunpack.c.l.b16 %v304
      %v633 = vunpack.c.l.b16 %v305
      %v634 = vunpack.c.l.b16 %v306
      %v635 = vpack.c.b16 %v632, %v631
      %v636 = vpack.c.b16 %v634, %v633
      %vm639 = vcmask 261120
      %v641 = vsel %vm639, %v563, 0
      %v644 = vsel %vm639, %v564, 0
      %v647 = vsel %vm639, %v565, 0
      %v650 = vsel %vm639, %v566, 0
      %v653 = vsel %vm639, %v567, 0
      %v656 = vsel %vm639, %v568, 0
      %v659 = vsel %vm639, %v569, 0
      %v662 = vsel %vm639, %v570, 0
      %v665 = vsel %vm639, %v571, 0
      %v668 = vsel %vm639, %v572, 0
      %v671 = vsel %vm639, %v573, 0
      %v674 = vsel %vm639, %v574, 0
      %v677 = vsel %vm639, %v575, 0
      %v680 = vsel %vm639, %v576, 0
      %v683 = vsel %vm639, %v577, 0
      %v686 = vsel %vm639, %v578, 0
      %v689 = vsel %vm639, %v579, 0
      %v692 = vsel %vm639, %v580, 0
      %v695 = vsel %vm639, %v581, 0
      %v698 = vsel %vm639, %v582, 0
      %v701 = vsel %vm639, %v583, 0
      %v704 = vsel %vm639, %v584, 0
      %v707 = vsel %vm639, %v585, 0
      %v710 = vsel %vm639, %v586, 0
      %v713 = vsel %vm639, %v587, 0
      %v716 = vsel %vm639, %v588, 0
      %v719 = vsel %vm639, %v589, 0
      %v722 = vsel %vm639, %v590, 0
      %v725 = vsel %vm639, %v591, 0
      %v728 = vsel %vm639, %v592, 0
      %v731 = vsel %vm639, %v593, 0
      %v734 = vsel %vm639, %v594, 0
      %v737 = vsel %vm639, %v595, 0
      %v740 = vsel %vm639, %v596, 0
      %v743 = vsel %vm639, %v597, 0
      %v746 = vsel %vm639, %v598, 0
      %v749 = vsel %vm639, %v599, 0
      %v752 = vsel %vm639, %v600, 0
      %v755 = vsel %vm639, %v601, 0
      %v758 = vsel %vm639, %v602, 0
      %v761 = vsel %vm639, %v603, 0
      %v764 = vsel %vm639, %v604, 0
      %v767 = vsel %vm639, %v605, 0
      %v770 = vsel %vm639, %v606, 0
      %v773 = vsel %vm639, %v607, 0
      %v776 = vsel %vm639, %v608, 0
      %v779 = vsel %vm639, %v609, 0
      %v782 = vsel %vm639, %v610, 0
      %v785 = vsel %vm639, %v611, 0
      %v788 = vsel %vm639, %v612, 0
      %v791 = vsel %vm639, %v613, 0
      %v794 = vsel %vm639, %v614, 0
      %v797 = vsel %vm639, %v615, 0
      %v800 = vsel %vm639, %v616, 0
      %v803 = vsel %vm639, %v617, 0
      %v806 = vsel %vm639, %v618, 0
      %v809 = vsel %vm639, %v619, 0
      %v812 = vsel %vm639, %v620, 0
      %v815 = vsel %vm639, %v621, 0
      %v818 = vsel %vm639, %v622, 0
      %v821 = vsel %vm639, %v623, 0
      %v824 = vsel %vm639, %v624, 0
      %v827 = vsel %vm639, %v625, 0
      %v830 = vsel %vm639, %v626, 0
      %832 = vmatprep.subr.bf16.mxu0 0
      %833 = vmatpush1.bf16.msra.mxu0 %v635
      %834 = vmatprep.subr.bf16.mxu0 0
      %835 = vmatpush1.bf16.msra.mxu0 %v636
      %836 = vmatprep.subr.bf16.mxu0 0
      %837 = vmatpush1.bf16.msra.mxu0 0
      %838 = vmatprep.subr.bf16.mxu0 0
      %839 = vmatpush1.bf16.msra.mxu0 0
      %840 = vmatprep.subr.bf16.mxu0 0
      %841 = vmatpush1.bf16.msra.mxu0 0
      %842 = vmatprep.subr.bf16.mxu0 0
      %843 = vmatpush1.bf16.msra.mxu0 0
      %844 = vmatprep.subr.bf16.mxu0 0
      %845 = vmatpush1.bf16.msra.mxu0 0
      %846 = vmatprep.subr.bf16.mxu0 0
      %847 = vmatpush1.bf16.msra.mxu0 0
      %848 = vmatprep.subr.bf16.mxu0 0
      %849 = vmatpush1.bf16.msra.mxu0 0
      %850 = vmatprep.subr.bf16.mxu0 0
      %851 = vmatpush1.bf16.msra.mxu0 0
      %852 = vmatprep.subr.bf16.mxu0 0
      %853 = vmatpush1.bf16.msra.mxu0 0
      %854 = vmatprep.subr.bf16.mxu0 0
      %855 = vmatpush1.bf16.msra.mxu0 0
      %856 = vmatprep.subr.bf16.mxu0 0
      %857 = vmatpush1.bf16.msra.mxu0 0
      %858 = vmatprep.subr.bf16.mxu0 0
      %859 = vmatpush1.bf16.msra.mxu0 0
      %860 = vmatprep.subr.bf16.mxu0 0
      %861 = vmatpush1.bf16.msra.mxu0 0
      %862 = vmatprep.subr.bf16.mxu0 0
      %863 = vmatpush1.bf16.msra.mxu0 0
      %864 = vmatprep.mubr.bf16.mxu0 0
      %865 = vmatmul.mubr.bf16.gmra.mrb[0].mxu0 %v641
      %v866 = vpop.f32.mrb[0].mxu0
      %v867 = vadd.f32 0.0, %v866
      %v868 = vpop.f32.mrb[0].mxu0
      %v869 = vpop.f32.mrb[0].mxu0
      %v870 = vadd.f32 0.0, %v869
      %v871 = vpop.f32.mrb[0].mxu0
      %872 = vmatprep.mubr.bf16.mxu0 0
      %873 = vmatmul.mubr.bf16.gmra.mrb[0].mxu0 %v644
      %v874 = vpop.f32.mrb[0].mxu0
      %v875 = vadd.f32 0.0, %v874
      %v876 = vpop.f32.mrb[0].mxu0
      %v877 = vpop.f32.mrb[0].mxu0
      %v878 = vadd.f32 0.0, %v877
      %v879 = vpop.f32.mrb[0].mxu0
      %880 = vmatprep.mubr.bf16.mxu0 0
      %881 = vmatmul.mubr.bf16.gmra.mrb[0].mxu0 %v647
      %v882 = vpop.f32.mrb[0].mxu0
      %v883 = vadd.f32 0.0, %v882
      %v884 = vpop.f32.mrb[0].mxu0
      %v885 = vpop.f32.mrb[0].mxu0
      %v886 = vadd.f32 0.0, %v885
      %v887 = vpop.f32.mrb[0].mxu0
      %888 = vmatprep.mubr.bf16.mxu0 0
      %889 = vmatmul.mubr.bf16.gmra.mrb[0].mxu0 %v650
      %v890 = vpop.f32.mrb[0].mxu0
      %v891 = vadd.f32 0.0, %v890
      %v892 = vpop.f32.mrb[0].mxu0
      %v893 = vpop.f32.mrb[0].mxu0
      %v894 = vadd.f32 0.0, %v893
      %v895 = vpop.f32.mrb[0].mxu0
      %896 = vmatprep.mubr.bf16.mxu0 0
      %897 = vmatmul.mubr.bf16.gmra.mrb[0].mxu0 %v653
      %v898 = vpop.f32.mrb[0].mxu0
      %v899 = vadd.f32 0.0, %v898
      %v900 = vpop.f32.mrb[0].mxu0
      %v901 = vpop.f32.mrb[0].mxu0
      %v902 = vadd.f32 0.0, %v901
      %v903 = vpop.f32.mrb[0].mxu0
      %904 = vmatprep.mubr.bf16.mxu0 0
      %905 = vmatmul.mubr.bf16.gmra.mrb[0].mxu0 %v656
      %v906 = vpop.f32.mrb[0].mxu0
      %v907 = vadd.f32 0.0, %v906
      %v908 = vpop.f32.mrb[0].mxu0
      %v909 = vpop.f32.mrb[0].mxu0
      %v910 = vadd.f32 0.0, %v909
      %v911 = vpop.f32.mrb[0].mxu0
      %912 = vmatprep.mubr.bf16.mxu0 0
      %913 = vmatmul.mubr.bf16.gmra.mrb[0].mxu0 %v659
      %v914 = vpop.f32.mrb[0].mxu0
      %v915 = vadd.f32 0.0, %v914
      %v916 = vpop.f32.mrb[0].mxu0
      %v917 = vpop.f32.mrb[0].mxu0
      %v918 = vadd.f32 0.0, %v917
      %v919 = vpop.f32.mrb[0].mxu0
      %920 = vmatprep.mubr.bf16.mxu0 0
      %921 = vmatmul.mubr.bf16.gmra.mrb[0].mxu0 %v662
      %v922 = vpop.f32.mrb[0].mxu0
      %v923 = vadd.f32 0.0, %v922
      %v924 = vpop.f32.mrb[0].mxu0
      %v925 = vpop.f32.mrb[0].mxu0
      %v926 = vadd.f32 0.0, %v925
      %v927 = vpop.f32.mrb[0].mxu0
      %928 = vmatprep.mubr.bf16.mxu0 0
      %929 = vmatmul.mubr.bf16.gmra.mrb[0].mxu0 %v665
      %v930 = vpop.f32.mrb[0].mxu0
      %v931 = vadd.f32 0.0, %v930
      %v932 = vpop.f32.mrb[0].mxu0
      %v933 = vpop.f32.mrb[0].mxu0
      %v934 = vadd.f32 0.0, %v933
      %v935 = vpop.f32.mrb[0].mxu0
      %936 = vmatprep.mubr.bf16.mxu0 0
      %937 = vmatmul.mubr.bf16.gmra.mrb[0].mxu0 %v668
      %v938 = vpop.f32.mrb[0].mxu0
      %v939 = vadd.f32 0.0, %v938
      %v940 = vpop.f32.mrb[0].mxu0
      %v941 = vpop.f32.mrb[0].mxu0
      %v942 = vadd.f32 0.0, %v941
      %v943 = vpop.f32.mrb[0].mxu0
      %944 = vmatprep.mubr.bf16.mxu0 0
      %945 = vmatmul.mubr.bf16.gmra.mrb[0].mxu0 %v671
      %v946 = vpop.f32.mrb[0].mxu0
      %v947 = vadd.f32 0.0, %v946
      %v948 = vpop.f32.mrb[0].mxu0
      %v949 = vpop.f32.mrb[0].mxu0
      %v950 = vadd.f32 0.0, %v949
      %v951 = vpop.f32.mrb[0].mxu0
      %952 = vmatprep.mubr.bf16.mxu0 0
      %953 = vmatmul.mubr.bf16.gmra.mrb[0].mxu0 %v674
      %v954 = vpop.f32.mrb[0].mxu0
      %v955 = vadd.f32 0.0, %v954
      %v956 = vpop.f32.mrb[0].mxu0
      %v957 = vpop.f32.mrb[0].mxu0
      %v958 = vadd.f32 0.0, %v957
      %v959 = vpop.f32.mrb[0].mxu0
      %960 = vmatprep.mubr.bf16.mxu0 0
      %961 = vmatmul.mubr.bf16.gmra.mrb[0].mxu0 %v677
      %v962 = vpop.f32.mrb[0].mxu0
      %v963 = vadd.f32 0.0, %v962
      %v964 = vpop.f32.mrb[0].mxu0
      %v965 = vpop.f32.mrb[0].mxu0
      %v966 = vadd.f32 0.0, %v965
      %v967 = vpop.f32.mrb[0].mxu0
      %968 = vmatprep.mubr.bf16.mxu0 0
      %969 = vmatmul.mubr.bf16.gmra.mrb[0].mxu0 %v680
      %v970 = vpop.f32.mrb[0].mxu0
      %v971 = vadd.f32 0.0, %v970
      %v972 = vpop.f32.mrb[0].mxu0
      %v973 = vpop.f32.mrb[0].mxu0
      %v974 = vadd.f32 0.0, %v973
      %v975 = vpop.f32.mrb[0].mxu0
      %976 = vmatprep.mubr.bf16.mxu0 0
      %977 = vmatmul.mubr.bf16.gmra.mrb[0].mxu0 %v683
      %v978 = vpop.f32.mrb[0].mxu0
      %v979 = vadd.f32 0.0, %v978
      %v980 = vpop.f32.mrb[0].mxu0
      %v981 = vpop.f32.mrb[0].mxu0
      %v982 = vadd.f32 0.0, %v981
      %v983 = vpop.f32.mrb[0].mxu0
      %984 = vmatprep.mubr.bf16.mxu0 0
      %985 = vmatmul.mubr.bf16.gmra.mrb[0].mxu0 %v686
      %v986 = vpop.f32.mrb[0].mxu0
      %v987 = vadd.f32 0.0, %v986
      %v988 = vpop.f32.mrb[0].mxu0
      %v989 = vpop.f32.mrb[0].mxu0
      %v990 = vadd.f32 0.0, %v989
      %v991 = vpop.f32.mrb[0].mxu0
      %992 = vmatprep.mubr.bf16.mxu0 0
      %993 = vmatmul.mubr.bf16.gmra.mrb[0].mxu0 %v689
      %v994 = vpop.f32.mrb[0].mxu0
      %v995 = vadd.f32 0.0, %v994
      %v996 = vpop.f32.mrb[0].mxu0
      %v997 = vpop.f32.mrb[0].mxu0
      %v998 = vadd.f32 0.0, %v997
      %v999 = vpop.f32.mrb[0].mxu0
      %1000 = vmatprep.mubr.bf16.mxu0 0
      %1001 = vmatmul.mubr.bf16.gmra.mrb[0].mxu0 %v692
      %v1002 = vpop.f32.mrb[0].mxu0
      %v1003 = vadd.f32 0.0, %v1002
      %v1004 = vpop.f32.mrb[0].mxu0
      %v1005 = vpop.f32.mrb[0].mxu0
      %v1006 = vadd.f32 0.0, %v1005
      %v1007 = vpop.f32.mrb[0].mxu0
      %1008 = vmatprep.mubr.bf16.mxu0 0
      %1009 = vmatmul.mubr.bf16.gmra.mrb[0].mxu0 %v695
      %v1010 = vpop.f32.mrb[0].mxu0
      %v1011 = vadd.f32 0.0, %v1010
      %v1012 = vpop.f32.mrb[0].mxu0
      %v1013 = vpop.f32.mrb[0].mxu0
      %v1014 = vadd.f32 0.0, %v1013
      %v1015 = vpop.f32.mrb[0].mxu0
      %1016 = vmatprep.mubr.bf16.mxu0 0
      %1017 = vmatmul.mubr.bf16.gmra.mrb[0].mxu0 %v698
      %v1018 = vpop.f32.mrb[0].mxu0
      %v1019 = vadd.f32 0.0, %v1018
      %v1020 = vpop.f32.mrb[0].mxu0
      %v1021 = vpop.f32.mrb[0].mxu0
      %v1022 = vadd.f32 0.0, %v1021
      %v1023 = vpop.f32.mrb[0].mxu0
      %1024 = vmatprep.mubr.bf16.mxu0 0
      %1025 = vmatmul.mubr.bf16.gmra.mrb[0].mxu0 %v701
      %v1026 = vpop.f32.mrb[0].mxu0
      %v1027 = vadd.f32 0.0, %v1026
      %v1028 = vpop.f32.mrb[0].mxu0
      %v1029 = vpop.f32.mrb[0].mxu0
      %v1030 = vadd.f32 0.0, %v1029
      %v1031 = vpop.f32.mrb[0].mxu0
      %1032 = vmatprep.mubr.bf16.mxu0 0
      %1033 = vmatmul.mubr.bf16.gmra.mrb[0].mxu0 %v704
      %v1034 = vpop.f32.mrb[0].mxu0
      %v1035 = vadd.f32 0.0, %v1034
      %v1036 = vpop.f32.mrb[0].mxu0
      %v1037 = vpop.f32.mrb[0].mxu0
      %v1038 = vadd.f32 0.0, %v1037
      %v1039 = vpop.f32.mrb[0].mxu0
      %1040 = vmatprep.mubr.bf16.mxu0 0
      %1041 = vmatmul.mubr.bf16.gmra.mrb[0].mxu0 %v707
      %v1042 = vpop.f32.mrb[0].mxu0
      %v1043 = vadd.f32 0.0, %v1042
      %v1044 = vpop.f32.mrb[0].mxu0
      %v1045 = vpop.f32.mrb[0].mxu0
      %v1046 = vadd.f32 0.0, %v1045
      %v1047 = vpop.f32.mrb[0].mxu0
      %1048 = vmatprep.mubr.bf16.mxu0 0
      %1049 = vmatmul.mubr.bf16.gmra.mrb[0].mxu0 %v710
      %v1050 = vpop.f32.mrb[0].mxu0
      %v1051 = vadd.f32 0.0, %v1050
      %v1052 = vpop.f32.mrb[0].mxu0
      %v1053 = vpop.f32.mrb[0].mxu0
      %v1054 = vadd.f32 0.0, %v1053
      %v1055 = vpop.f32.mrb[0].mxu0
      %1056 = vmatprep.mubr.bf16.mxu0 0
      %1057 = vmatmul.mubr.bf16.gmra.mrb[0].mxu0 %v713
      %v1058 = vpop.f32.mrb[0].mxu0
      %v1059 = vadd.f32 0.0, %v1058
      %v1060 = vpop.f32.mrb[0].mxu0
      %v1061 = vpop.f32.mrb[0].mxu0
      %v1062 = vadd.f32 0.0, %v1061
      %v1063 = vpop.f32.mrb[0].mxu0
      %1064 = vmatprep.mubr.bf16.mxu0 0
      %1065 = vmatmul.mubr.bf16.gmra.mrb[0].mxu0 %v716
      %v1066 = vpop.f32.mrb[0].mxu0
      %v1067 = vadd.f32 0.0, %v1066
      %v1068 = vpop.f32.mrb[0].mxu0
      %v1069 = vpop.f32.mrb[0].mxu0
      %v1070 = vadd.f32 0.0, %v1069
      %v1071 = vpop.f32.mrb[0].mxu0
      %1072 = vmatprep.mubr.bf16.mxu0 0
      %1073 = vmatmul.mubr.bf16.gmra.mrb[0].mxu0 %v719
      %v1074 = vpop.f32.mrb[0].mxu0
      %v1075 = vadd.f32 0.0, %v1074
      %v1076 = vpop.f32.mrb[0].mxu0
      %v1077 = vpop.f32.mrb[0].mxu0
      %v1078 = vadd.f32 0.0, %v1077
      %v1079 = vpop.f32.mrb[0].mxu0
      %1080 = vmatprep.mubr.bf16.mxu0 0
      %1081 = vmatmul.mubr.bf16.gmra.mrb[0].mxu0 %v722
      %v1082 = vpop.f32.mrb[0].mxu0
      %v1083 = vadd.f32 0.0, %v1082
      %v1084 = vpop.f32.mrb[0].mxu0
      %v1085 = vpop.f32.mrb[0].mxu0
      %v1086 = vadd.f32 0.0, %v1085
      %v1087 = vpop.f32.mrb[0].mxu0
      %1088 = vmatprep.mubr.bf16.mxu0 0
      %1089 = vmatmul.mubr.bf16.gmra.mrb[0].mxu0 %v725
      %v1090 = vpop.f32.mrb[0].mxu0
      %v1091 = vadd.f32 0.0, %v1090
      %v1092 = vpop.f32.mrb[0].mxu0
      %v1093 = vpop.f32.mrb[0].mxu0
      %v1094 = vadd.f32 0.0, %v1093
      %v1095 = vpop.f32.mrb[0].mxu0
      %1096 = vmatprep.mubr.bf16.mxu0 0
      %1097 = vmatmul.mubr.bf16.gmra.mrb[0].mxu0 %v728
      %v1098 = vpop.f32.mrb[0].mxu0
      %v1099 = vadd.f32 0.0, %v1098
      %v1100 = vpop.f32.mrb[0].mxu0
      %v1101 = vpop.f32.mrb[0].mxu0
      %v1102 = vadd.f32 0.0, %v1101
      %v1103 = vpop.f32.mrb[0].mxu0
      %1104 = vmatprep.mubr.bf16.mxu0 0
      %1105 = vmatmul.mubr.bf16.gmra.mrb[0].mxu0 %v731
      %v1106 = vpop.f32.mrb[0].mxu0
      %v1107 = vadd.f32 0.0, %v1106
      %v1108 = vpop.f32.mrb[0].mxu0
      %v1109 = vpop.f32.mrb[0].mxu0
      %v1110 = vadd.f32 0.0, %v1109
      %v1111 = vpop.f32.mrb[0].mxu0
      %1112 = vmatprep.mubr.bf16.mxu0 0
      %1113 = vmatmul.mubr.bf16.gmra.mrb[0].mxu0 %v734
      %v1114 = vpop.f32.mrb[0].mxu0
      %v1115 = vadd.f32 0.0, %v1114
      %v1116 = vpop.f32.mrb[0].mxu0
      %v1117 = vpop.f32.mrb[0].mxu0
      %v1118 = vadd.f32 0.0, %v1117
      %v1119 = vpop.f32.mrb[0].mxu0
      %1120 = vmatprep.mubr.bf16.mxu0 0
      %1121 = vmatmul.mubr.bf16.gmra.mrb[0].mxu0 %v737
      %v1122 = vpop.f32.mrb[0].mxu0
      %v1123 = vadd.f32 0.0, %v1122
      %v1124 = vpop.f32.mrb[0].mxu0
      %v1125 = vpop.f32.mrb[0].mxu0
      %v1126 = vadd.f32 0.0, %v1125
      %v1127 = vpop.f32.mrb[0].mxu0
      %1128 = vmatprep.mubr.bf16.mxu0 0
      %1129 = vmatmul.mubr.bf16.gmra.mrb[0].mxu0 %v740
      %v1130 = vpop.f32.mrb[0].mxu0
      %v1131 = vadd.f32 0.0, %v1130
      %v1132 = vpop.f32.mrb[0].mxu0
      %v1133 = vpop.f32.mrb[0].mxu0
      %v1134 = vadd.f32 0.0, %v1133
      %v1135 = vpop.f32.mrb[0].mxu0
      %1136 = vmatprep.mubr.bf16.mxu0 0
      %1137 = vmatmul.mubr.bf16.gmra.mrb[0].mxu0 %v743
      %v1138 = vpop.f32.mrb[0].mxu0
      %v1139 = vadd.f32 0.0, %v1138
      %v1140 = vpop.f32.mrb[0].mxu0
      %v1141 = vpop.f32.mrb[0].mxu0
      %v1142 = vadd.f32 0.0, %v1141
      %v1143 = vpop.f32.mrb[0].mxu0
      %1144 = vmatprep.mubr.bf16.mxu0 0
      %1145 = vmatmul.mubr.bf16.gmra.mrb[0].mxu0 %v746
      %v1146 = vpop.f32.mrb[0].mxu0
      %v1147 = vadd.f32 0.0, %v1146
      %v1148 = vpop.f32.mrb[0].mxu0
      %v1149 = vpop.f32.mrb[0].mxu0
      %v1150 = vadd.f32 0.0, %v1149
      %v1151 = vpop.f32.mrb[0].mxu0
      %1152 = vmatprep.mubr.bf16.mxu0 0
      %1153 = vmatmul.mubr.bf16.gmra.mrb[0].mxu0 %v749
      %v1154 = vpop.f32.mrb[0].mxu0
      %v1155 = vadd.f32 0.0, %v1154
      %v1156 = vpop.f32.mrb[0].mxu0
      %v1157 = vpop.f32.mrb[0].mxu0
      %v1158 = vadd.f32 0.0, %v1157
      %v1159 = vpop.f32.mrb[0].mxu0
      %1160 = vmatprep.mubr.bf16.mxu0 0
      %1161 = vmatmul.mubr.bf16.gmra.mrb[0].mxu0 %v752
      %v1162 = vpop.f32.mrb[0].mxu0
      %v1163 = vadd.f32 0.0, %v1162
      %v1164 = vpop.f32.mrb[0].mxu0
      %v1165 = vpop.f32.mrb[0].mxu0
      %v1166 = vadd.f32 0.0, %v1165
      %v1167 = vpop.f32.mrb[0].mxu0
      %1168 = vmatprep.mubr.bf16.mxu0 0
      %1169 = vmatmul.mubr.bf16.gmra.mrb[0].mxu0 %v755
      %v1170 = vpop.f32.mrb[0].mxu0
      %v1171 = vadd.f32 0.0, %v1170
      %v1172 = vpop.f32.mrb[0].mxu0
      %v1173 = vpop.f32.mrb[0].mxu0
      %v1174 = vadd.f32 0.0, %v1173
      %v1175 = vpop.f32.mrb[0].mxu0
      %1176 = vmatprep.mubr.bf16.mxu0 0
      %1177 = vmatmul.mubr.bf16.gmra.mrb[0].mxu0 %v758
      %v1178 = vpop.f32.mrb[0].mxu0
      %v1179 = vadd.f32 0.0, %v1178
      %v1180 = vpop.f32.mrb[0].mxu0
      %v1181 = vpop.f32.mrb[0].mxu0
      %v1182 = vadd.f32 0.0, %v1181
      %v1183 = vpop.f32.mrb[0].mxu0
      %1184 = vmatprep.mubr.bf16.mxu0 0
      %1185 = vmatmul.mubr.bf16.gmra.mrb[0].mxu0 %v761
      %v1186 = vpop.f32.mrb[0].mxu0
      %v1187 = vadd.f32 0.0, %v1186
      %v1188 = vpop.f32.mrb[0].mxu0
      %v1189 = vpop.f32.mrb[0].mxu0
      %v1190 = vadd.f32 0.0, %v1189
      %v1191 = vpop.f32.mrb[0].mxu0
      %1192 = vmatprep.mubr.bf16.mxu0 0
      %1193 = vmatmul.mubr.bf16.gmra.mrb[0].mxu0 %v764
      %v1194 = vpop.f32.mrb[0].mxu0
      %v1195 = vadd.f32 0.0, %v1194
      %v1196 = vpop.f32.mrb[0].mxu0
      %v1197 = vpop.f32.mrb[0].mxu0
      %v1198 = vadd.f32 0.0, %v1197
      %v1199 = vpop.f32.mrb[0].mxu0
      %1200 = vmatprep.mubr.bf16.mxu0 0
      %1201 = vmatmul.mubr.bf16.gmra.mrb[0].mxu0 %v767
      %v1202 = vpop.f32.mrb[0].mxu0
      %v1203 = vadd.f32 0.0, %v1202
      %v1204 = vpop.f32.mrb[0].mxu0
      %v1205 = vpop.f32.mrb[0].mxu0
      %v1206 = vadd.f32 0.0, %v1205
      %v1207 = vpop.f32.mrb[0].mxu0
      %1208 = vmatprep.mubr.bf16.mxu0 0
      %1209 = vmatmul.mubr.bf16.gmra.mrb[0].mxu0 %v770
      %v1210 = vpop.f32.mrb[0].mxu0
      %v1211 = vadd.f32 0.0, %v1210
      %v1212 = vpop.f32.mrb[0].mxu0
      %v1213 = vpop.f32.mrb[0].mxu0
      %v1214 = vadd.f32 0.0, %v1213
      %v1215 = vpop.f32.mrb[0].mxu0
      %1216 = vmatprep.mubr.bf16.mxu0 0
      %1217 = vmatmul.mubr.bf16.gmra.mrb[0].mxu0 %v773
      %v1218 = vpop.f32.mrb[0].mxu0
      %v1219 = vadd.f32 0.0, %v1218
      %v1220 = vpop.f32.mrb[0].mxu0
      %v1221 = vpop.f32.mrb[0].mxu0
      %v1222 = vadd.f32 0.0, %v1221
      %v1223 = vpop.f32.mrb[0].mxu0
      %1224 = vmatprep.mubr.bf16.mxu0 0
      %1225 = vmatmul.mubr.bf16.gmra.mrb[0].mxu0 %v776
      %v1226 = vpop.f32.mrb[0].mxu0
      %v1227 = vadd.f32 0.0, %v1226
      %v1228 = vpop.f32.mrb[0].mxu0
      %v1229 = vpop.f32.mrb[0].mxu0
      %v1230 = vadd.f32 0.0, %v1229
      %v1231 = vpop.f32.mrb[0].mxu0
      %1232 = vmatprep.mubr.bf16.mxu0 0
      %1233 = vmatmul.mubr.bf16.gmra.mrb[0].mxu0 %v779
      %v1234 = vpop.f32.mrb[0].mxu0
      %v1235 = vadd.f32 0.0, %v1234
      %v1236 = vpop.f32.mrb[0].mxu0
      %v1237 = vpop.f32.mrb[0].mxu0
      %v1238 = vadd.f32 0.0, %v1237
      %v1239 = vpop.f32.mrb[0].mxu0
      %1240 = vmatprep.mubr.bf16.mxu0 0
      %1241 = vmatmul.mubr.bf16.gmra.mrb[0].mxu0 %v782
      %v1242 = vpop.f32.mrb[0].mxu0
      %v1243 = vadd.f32 0.0, %v1242
      %v1244 = vpop.f32.mrb[0].mxu0
      %v1245 = vpop.f32.mrb[0].mxu0
      %v1246 = vadd.f32 0.0, %v1245
      %v1247 = vpop.f32.mrb[0].mxu0
      %1248 = vmatprep.mubr.bf16.mxu0 0
      %1249 = vmatmul.mubr.bf16.gmra.mrb[0].mxu0 %v785
      %v1250 = vpop.f32.mrb[0].mxu0
      %v1251 = vadd.f32 0.0, %v1250
      %v1252 = vpop.f32.mrb[0].mxu0
      %v1253 = vpop.f32.mrb[0].mxu0
      %v1254 = vadd.f32 0.0, %v1253
      %v1255 = vpop.f32.mrb[0].mxu0
      %1256 = vmatprep.mubr.bf16.mxu0 0
      %1257 = vmatmul.mubr.bf16.gmra.mrb[0].mxu0 %v788
      %v1258 = vpop.f32.mrb[0].mxu0
      %v1259 = vadd.f32 0.0, %v1258
      %v1260 = vpop.f32.mrb[0].mxu0
      %v1261 = vpop.f32.mrb[0].mxu0
      %v1262 = vadd.f32 0.0, %v1261
      %v1263 = vpop.f32.mrb[0].mxu0
      %1264 = vmatprep.mubr.bf16.mxu0 0
      %1265 = vmatmul.mubr.bf16.gmra.mrb[0].mxu0 %v791
      %v1266 = vpop.f32.mrb[0].mxu0
      %v1267 = vadd.f32 0.0, %v1266
      %v1268 = vpop.f32.mrb[0].mxu0
      %v1269 = vpop.f32.mrb[0].mxu0
      %v1270 = vadd.f32 0.0, %v1269
      %v1271 = vpop.f32.mrb[0].mxu0
      %1272 = vmatprep.mubr.bf16.mxu0 0
      %1273 = vmatmul.mubr.bf16.gmra.mrb[0].mxu0 %v794
      %v1274 = vpop.f32.mrb[0].mxu0
      %v1275 = vadd.f32 0.0, %v1274
      %v1276 = vpop.f32.mrb[0].mxu0
      %v1277 = vpop.f32.mrb[0].mxu0
      %v1278 = vadd.f32 0.0, %v1277
      %v1279 = vpop.f32.mrb[0].mxu0
      %1280 = vmatprep.mubr.bf16.mxu0 0
      %1281 = vmatmul.mubr.bf16.gmra.mrb[0].mxu0 %v797
      %v1282 = vpop.f32.mrb[0].mxu0
      %v1283 = vadd.f32 0.0, %v1282
      %v1284 = vpop.f32.mrb[0].mxu0
      %v1285 = vpop.f32.mrb[0].mxu0
      %v1286 = vadd.f32 0.0, %v1285
      %v1287 = vpop.f32.mrb[0].mxu0
      %1288 = vmatprep.mubr.bf16.mxu0 0
      %1289 = vmatmul.mubr.bf16.gmra.mrb[0].mxu0 %v800
      %v1290 = vpop.f32.mrb[0].mxu0
      %v1291 = vadd.f32 0.0, %v1290
      %v1292 = vpop.f32.mrb[0].mxu0
      %v1293 = vpop.f32.mrb[0].mxu0
      %v1294 = vadd.f32 0.0, %v1293
      %v1295 = vpop.f32.mrb[0].mxu0
      %1296 = vmatprep.mubr.bf16.mxu0 0
      %1297 = vmatmul.mubr.bf16.gmra.mrb[0].mxu0 %v803
      %v1298 = vpop.f32.mrb[0].mxu0
      %v1299 = vadd.f32 0.0, %v1298
      %v1300 = vpop.f32.mrb[0].mxu0
      %v1301 = vpop.f32.mrb[0].mxu0
      %v1302 = vadd.f32 0.0, %v1301
      %v1303 = vpop.f32.mrb[0].mxu0
      %1304 = vmatprep.mubr.bf16.mxu0 0
      %1305 = vmatmul.mubr.bf16.gmra.mrb[0].mxu0 %v806
      %v1306 = vpop.f32.mrb[0].mxu0
      %v1307 = vadd.f32 0.0, %v1306
      %v1308 = vpop.f32.mrb[0].mxu0
      %v1309 = vpop.f32.mrb[0].mxu0
      %v1310 = vadd.f32 0.0, %v1309
      %v1311 = vpop.f32.mrb[0].mxu0
      %1312 = vmatprep.mubr.bf16.mxu0 0
      %1313 = vmatmul.mubr.bf16.gmra.mrb[0].mxu0 %v809
      %v1314 = vpop.f32.mrb[0].mxu0
      %v1315 = vadd.f32 0.0, %v1314
      %v1316 = vpop.f32.mrb[0].mxu0
      %v1317 = vpop.f32.mrb[0].mxu0
      %v1318 = vadd.f32 0.0, %v1317
      %v1319 = vpop.f32.mrb[0].mxu0
      %1320 = vmatprep.mubr.bf16.mxu0 0
      %1321 = vmatmul.mubr.bf16.gmra.mrb[0].mxu0 %v812
      %v1322 = vpop.f32.mrb[0].mxu0
      %v1323 = vadd.f32 0.0, %v1322
      %v1324 = vpop.f32.mrb[0].mxu0
      %v1325 = vpop.f32.mrb[0].mxu0
      %v1326 = vadd.f32 0.0, %v1325
      %v1327 = vpop.f32.mrb[0].mxu0
      %1328 = vmatprep.mubr.bf16.mxu0 0
      %1329 = vmatmul.mubr.bf16.gmra.mrb[0].mxu0 %v815
      %v1330 = vpop.f32.mrb[0].mxu0
      %v1331 = vadd.f32 0.0, %v1330
      %v1332 = vpop.f32.mrb[0].mxu0
      %v1333 = vpop.f32.mrb[0].mxu0
      %v1334 = vadd.f32 0.0, %v1333
      %v1335 = vpop.f32.mrb[0].mxu0
      %1336 = vmatprep.mubr.bf16.mxu0 0
      %1337 = vmatmul.mubr.bf16.gmra.mrb[0].mxu0 %v818
      %v1338 = vpop.f32.mrb[0].mxu0
      %v1339 = vadd.f32 0.0, %v1338
      %v1340 = vpop.f32.mrb[0].mxu0
      %v1341 = vpop.f32.mrb[0].mxu0
      %v1342 = vadd.f32 0.0, %v1341
      %v1343 = vpop.f32.mrb[0].mxu0
      %1344 = vmatprep.mubr.bf16.mxu0 0
      %1345 = vmatmul.mubr.bf16.gmra.mrb[0].mxu0 %v821
      %v1346 = vpop.f32.mrb[0].mxu0
      %v1347 = vadd.f32 0.0, %v1346
      %v1348 = vpop.f32.mrb[0].mxu0
      %v1349 = vpop.f32.mrb[0].mxu0
      %v1350 = vadd.f32 0.0, %v1349
      %v1351 = vpop.f32.mrb[0].mxu0
      %1352 = vmatprep.mubr.bf16.mxu0 0
      %1353 = vmatmul.mubr.bf16.gmra.mrb[0].mxu0 %v824
      %v1354 = vpop.f32.mrb[0].mxu0
      %v1355 = vadd.f32 0.0, %v1354
      %v1356 = vpop.f32.mrb[0].mxu0
      %v1357 = vpop.f32.mrb[0].mxu0
      %v1358 = vadd.f32 0.0, %v1357
      %v1359 = vpop.f32.mrb[0].mxu0
      %1360 = vmatprep.mubr.bf16.mxu0 0
      %1361 = vmatmul.mubr.bf16.gmra.mrb[0].mxu0 %v827
      %v1362 = vpop.f32.mrb[0].mxu0
      %v1363 = vadd.f32 0.0, %v1362
      %v1364 = vpop.f32.mrb[0].mxu0
      %v1365 = vpop.f32.mrb[0].mxu0
      %v1366 = vadd.f32 0.0, %v1365
      %v1367 = vpop.f32.mrb[0].mxu0
      %1368 = vmatprep.mubr.bf16.mxu0 0
      %1369 = vmatmul.mubr.bf16.gmra.mrb[0].mxu0 %v830
      %v1370 = vpop.f32.mrb[0].mxu0
      %v1371 = vadd.f32 0.0, %v1370
      %v1372 = vpop.f32.mrb[0].mxu0
      %v1373 = vpop.f32.mrb[0].mxu0
      %v1374 = vadd.f32 0.0, %v1373
      %v1375 = vpop.f32.mrb[0].mxu0
      %1376 = vdwg.mxu0
      %v1377 = vmax.f32 %v867, %v995
      %v1378 = vmax.f32 %v870, %v998
      %v1379 = vmax.f32 %v875, %v1003
      %v1380 = vmax.f32 %v878, %v1006
      %v1381 = vmax.f32 %v883, %v1011
      %v1382 = vmax.f32 %v886, %v1014
      %v1383 = vmax.f32 %v891, %v1019
      %v1384 = vmax.f32 %v894, %v1022
      %v1385 = vmax.f32 %v899, %v1027
      %v1386 = vmax.f32 %v902, %v1030
      %v1387 = vmax.f32 %v907, %v1035
      %v1388 = vmax.f32 %v910, %v1038
      %v1389 = vmax.f32 %v915, %v1043
      %v1390 = vmax.f32 %v918, %v1046
      %v1391 = vmax.f32 %v923, %v1051
      %v1392 = vmax.f32 %v926, %v1054
      %v1393 = vmax.f32 %v931, %v1059
      %v1394 = vmax.f32 %v934, %v1062
      %v1395 = vmax.f32 %v939, %v1067
      %v1396 = vmax.f32 %v942, %v1070
      %v1397 = vmax.f32 %v947, %v1075
      %v1398 = vmax.f32 %v950, %v1078
      %v1399 = vmax.f32 %v955, %v1083
      %v1400 = vmax.f32 %v958, %v1086
      %v1401 = vmax.f32 %v963, %v1091
      %v1402 = vmax.f32 %v966, %v1094
      %v1403 = vmax.f32 %v971, %v1099
      %v1404 = vmax.f32 %v974, %v1102
      %v1405 = vmax.f32 %v979, %v1107
      %v1406 = vmax.f32 %v982, %v1110
      %v1407 = vmax.f32 %v987, %v1115
      %v1408 = vmax.f32 %v990, %v1118
      %v1409 = vmax.f32 %v1123, %v1251
      %v1410 = vmax.f32 %v1126, %v1254
      %v1411 = vmax.f32 %v1131, %v1259
      %v1412 = vmax.f32 %v1134, %v1262
      %v1413 = vmax.f32 %v1139, %v1267
      %v1414 = vmax.f32 %v1142, %v1270
      %v1415 = vmax.f32 %v1147, %v1275
      %v1416 = vmax.f32 %v1150, %v1278
      %v1417 = vmax.f32 %v1155, %v1283
      %v1418 = vmax.f32 %v1158, %v1286
      %v1419 = vmax.f32 %v1163, %v1291
      %v1420 = vmax.f32 %v1166, %v1294
      %v1421 = vmax.f32 %v1171, %v1299
      %v1422 = vmax.f32 %v1174, %v1302
      %v1423 = vmax.f32 %v1179, %v1307
      %v1424 = vmax.f32 %v1182, %v1310
      %v1425 = vmax.f32 %v1187, %v1315
      %v1426 = vmax.f32 %v1190, %v1318
      %v1427 = vmax.f32 %v1195, %v1323
      %v1428 = vmax.f32 %v1198, %v1326
      %v1429 = vmax.f32 %v1203, %v1331
      %v1430 = vmax.f32 %v1206, %v1334
      %v1431 = vmax.f32 %v1211, %v1339
      %v1432 = vmax.f32 %v1214, %v1342
      %v1433 = vmax.f32 %v1219, %v1347
      %v1434 = vmax.f32 %v1222, %v1350
      %v1435 = vmax.f32 %v1227, %v1355
      %v1436 = vmax.f32 %v1230, %v1358
      %v1437 = vmax.f32 %v1235, %v1363
      %v1438 = vmax.f32 %v1238, %v1366
      %v1439 = vmax.f32 %v1243, %v1371
      %v1440 = vmax.f32 %v1246, %v1374
      %v1441 = vmax.f32 %v1377, %v1409
      %v1442 = vmax.f32 %v1378, %v1410
      %v1443 = vmax.f32 %v1379, %v1411
      %v1444 = vmax.f32 %v1380, %v1412
      %v1445 = vmax.f32 %v1381, %v1413
      %v1446 = vmax.f32 %v1382, %v1414
      %v1447 = vmax.f32 %v1383, %v1415
      %v1448 = vmax.f32 %v1384, %v1416
      %v1449 = vmax.f32 %v1385, %v1417
      %v1450 = vmax.f32 %v1386, %v1418
      %v1451 = vmax.f32 %v1387, %v1419
      %v1452 = vmax.f32 %v1388, %v1420
      %v1453 = vmax.f32 %v1389, %v1421
      %v1454 = vmax.f32 %v1390, %v1422
      %v1455 = vmax.f32 %v1391, %v1423
      %v1456 = vmax.f32 %v1392, %v1424
      %v1457 = vmax.f32 %v1393, %v1425
      %v1458 = vmax.f32 %v1394, %v1426
      %v1459 = vmax.f32 %v1395, %v1427
      %v1460 = vmax.f32 %v1396, %v1428
      %v1461 = vmax.f32 %v1397, %v1429
      %v1462 = vmax.f32 %v1398, %v1430
      %v1463 = vmax.f32 %v1399, %v1431
      %v1464 = vmax.f32 %v1400, %v1432
      %v1465 = vmax.f32 %v1401, %v1433
      %v1466 = vmax.f32 %v1402, %v1434
      %v1467 = vmax.f32 %v1403, %v1435
      %v1468 = vmax.f32 %v1404, %v1436
      %v1469 = vmax.f32 %v1405, %v1437
      %v1470 = vmax.f32 %v1406, %v1438
      %v1471 = vmax.f32 %v1407, %v1439
      %v1472 = vmax.f32 %v1408, %v1440
      %v1473 = vld [vmem:[%s2] sm:$0x1]
      %v1475 = vlaneseq
      %v1476 = vshrl.u32 %v1475, 7
      %v1477 = vsub.s32 0, %v1476
      %v1478 = vrot.slane %v1473, %v1477
      %v1480 = vadd.f32 %v1441, %v1478
      %v1481 = vadd.f32 %v1442, %v1478
      %v1482 = vadd.f32 %v1443, %v1478
      %v1483 = vadd.f32 %v1444, %v1478
      %v1484 = vadd.f32 %v1445, %v1478
      %v1485 = vadd.f32 %v1446, %v1478
      %v1486 = vadd.f32 %v1447, %v1478
      %v1487 = vadd.f32 %v1448, %v1478
      %v1488 = vadd.f32 %v1449, %v1478
      %v1489 = vadd.f32 %v1450, %v1478
      %v1490 = vadd.f32 %v1451, %v1478
      %v1491 = vadd.f32 %v1452, %v1478
      %v1492 = vadd.f32 %v1453, %v1478
      %v1493 = vadd.f32 %v1454, %v1478
      %v1494 = vadd.f32 %v1455, %v1478
      %v1495 = vadd.f32 %v1456, %v1478
      %v1496 = vadd.f32 %v1457, %v1478
      %v1497 = vadd.f32 %v1458, %v1478
      %v1498 = vadd.f32 %v1459, %v1478
      %v1499 = vadd.f32 %v1460, %v1478
      %v1500 = vadd.f32 %v1461, %v1478
      %v1501 = vadd.f32 %v1462, %v1478
      %v1502 = vadd.f32 %v1463, %v1478
      %v1503 = vadd.f32 %v1464, %v1478
      %v1504 = vadd.f32 %v1465, %v1478
      %v1505 = vadd.f32 %v1466, %v1478
      %v1506 = vadd.f32 %v1467, %v1478
      %v1507 = vadd.f32 %v1468, %v1478
      %v1508 = vadd.f32 %v1469, %v1478
      %v1509 = vadd.f32 %v1470, %v1478
      %v1510 = vadd.f32 %v1471, %v1478
      %v1511 = vadd.f32 %v1472, %v1478
      %v1512 = vmax.f32 %v1480, 0.0
      %v1513 = vmax.f32 %v1481, 0.0
      %v1514 = vmax.f32 %v1482, 0.0
      %v1515 = vmax.f32 %v1483, 0.0
      %v1516 = vmax.f32 %v1484, 0.0
      %v1517 = vmax.f32 %v1485, 0.0
      %v1518 = vmax.f32 %v1486, 0.0
      %v1519 = vmax.f32 %v1487, 0.0
      %v1520 = vmax.f32 %v1488, 0.0
      %v1521 = vmax.f32 %v1489, 0.0
      %v1522 = vmax.f32 %v1490, 0.0
      %v1523 = vmax.f32 %v1491, 0.0
      %v1524 = vmax.f32 %v1492, 0.0
      %v1525 = vmax.f32 %v1493, 0.0
      %v1526 = vmax.f32 %v1494, 0.0
      %v1527 = vmax.f32 %v1495, 0.0
      %v1528 = vmax.f32 %v1496, 0.0
      %v1529 = vmax.f32 %v1497, 0.0
      %v1530 = vmax.f32 %v1498, 0.0
      %v1531 = vmax.f32 %v1499, 0.0
      %v1532 = vmax.f32 %v1500, 0.0
      %v1533 = vmax.f32 %v1501, 0.0
      %v1534 = vmax.f32 %v1502, 0.0
      %v1535 = vmax.f32 %v1503, 0.0
      %v1536 = vmax.f32 %v1504, 0.0
      %v1537 = vmax.f32 %v1505, 0.0
      %v1538 = vmax.f32 %v1506, 0.0
      %v1539 = vmax.f32 %v1507, 0.0
      %v1540 = vmax.f32 %v1508, 0.0
      %v1541 = vmax.f32 %v1509, 0.0
      %v1542 = vmax.f32 %v1510, 0.0
      %v1543 = vmax.f32 %v1511, 0.0
      %1544 = vst.msk [vmem:[%s172] sm:$0xff] %vm639, %v1512
      %1545 = vst.msk [vmem:[%s172 + $0x8] sm:$0xff] %vm639, %v1513
      %1546 = vst.msk [vmem:[%s172 + $0x10] sm:$0xff] %vm639, %v1514
      %1547 = vst.msk [vmem:[%s172 + $0x18] sm:$0xff] %vm639, %v1515
      %1548 = vst.msk [vmem:[%s172 + $0x20] sm:$0xff] %vm639, %v1516
      %1549 = vst.msk [vmem:[%s172 + $0x28] sm:$0xff] %vm639, %v1517
      %1550 = vst.msk [vmem:[%s172 + $0x30] sm:$0xff] %vm639, %v1518
      %1551 = vst.msk [vmem:[%s172 + $0x38] sm:$0xff] %vm639, %v1519
      %1552 = vst.msk [vmem:[%s172 + $0x40] sm:$0xff] %vm639, %v1520
      %1553 = vst.msk [vmem:[%s172 + $0x48] sm:$0xff] %vm639, %v1521
      %1554 = vst.msk [vmem:[%s172 + $0x50] sm:$0xff] %vm639, %v1522
      %1555 = vst.msk [vmem:[%s172 + $0x58] sm:$0xff] %vm639, %v1523
      %1556 = vst.msk [vmem:[%s172 + $0x60] sm:$0xff] %vm639, %v1524
      %1557 = vst.msk [vmem:[%s172 + $0x68] sm:$0xff] %vm639, %v1525
      %1558 = vst.msk [vmem:[%s172 + $0x70] sm:$0xff] %vm639, %v1526
      %1559 = vst.msk [vmem:[%s172 + $0x78] sm:$0xff] %vm639, %v1527
      %1560 = vst.msk [vmem:[%s172 + $0x80] sm:$0xff] %vm639, %v1528
      %1561 = vst.msk [vmem:[%s172 + $0x88] sm:$0xff] %vm639, %v1529
      %1562 = vst.msk [vmem:[%s172 + $0x90] sm:$0xff] %vm639, %v1530
      %1563 = vst.msk [vmem:[%s172 + $0x98] sm:$0xff] %vm639, %v1531
      %1564 = vst.msk [vmem:[%s172 + $0xa0] sm:$0xff] %vm639, %v1532
      %1565 = vst.msk [vmem:[%s172 + $0xa8] sm:$0xff] %vm639, %v1533
      %1566 = vst.msk [vmem:[%s172 + $0xb0] sm:$0xff] %vm639, %v1534
      %1567 = vst.msk [vmem:[%s172 + $0xb8] sm:$0xff] %vm639, %v1535
      %1568 = vst.msk [vmem:[%s172 + $0xc0] sm:$0xff] %vm639, %v1536
      %1569 = vst.msk [vmem:[%s172 + $0xc8] sm:$0xff] %vm639, %v1537
      %1570 = vst.msk [vmem:[%s172 + $0xd0] sm:$0xff] %vm639, %v1538
      %1571 = vst.msk [vmem:[%s172 + $0xd8] sm:$0xff] %vm639, %v1539
      %1572 = vst.msk [vmem:[%s172 + $0xe0] sm:$0xff] %vm639, %v1540
      %1573 = vst.msk [vmem:[%s172 + $0xe8] sm:$0xff] %vm639, %v1541
      %1574 = vst.msk [vmem:[%s172 + $0xf0] sm:$0xff] %vm639, %v1542
      %1575 = vst.msk [vmem:[%s172 + $0xf8] sm:$0xff] %vm639, %v1543
      %s1576 = smul.u32 32, %s14
      %p1577 = scmp.lt.s32.totalorder %s1576, 63
      %s1578 = scalar_select %p1577, %s1576, 63
      %s1579 = smul.addr %s1578, 8
      %s1580 = scalar_lea.vmem %s3, %s1579
      // Predicated region
      $region33: #{multi_head_cnn_forward.4} parent=31 // pred_check
        %p1581 = pneg %p100
      $region34: #{multi_head_cnn_forward.4} parent=31 // pred_check_branch
        %1583 = sbr.rel (%p1581) target = $region36
      $region35: #{multi_head_cnn_forward.4} parent=31 // pred_region
        %s1584 = smul.u32 32, %s14
      $region36: #{multi_head_cnn_forward.4} parent=31 // pred_fallthru
        _
    $region32: #{multi_head_cnn_forward.4} parent=5 // pred_fallthru
      _
    %p1585 = scmp.le.s32.totalorder 2, %s9
    // Predicated region
    $region37: #{multi_head_cnn_forward.4} parent=5 // pred_check
      %p1586 = pneg %p1585
    $region38: #{multi_head_cnn_forward.4} parent=5 // pred_check_branch
      %1588 = sbr.rel (%p1586) target = $region40
    $region39: #{multi_head_cnn_forward.4} parent=5 // pred_region
      %s1589 = ssub.s32 %s9, 2
      // Predicated region
      $region41: #{multi_head_cnn_forward.4} parent=39 // pred_check
        %p1590 = pneg %p106
      $region42: #{multi_head_cnn_forward.4} parent=39 // pred_check_branch
        %1592 = sbr.rel (%p1590) target = $region44
      $region43: #{multi_head_cnn_forward.4} parent=39 // pred_region
        %s1593 = smul.u32 32, %s15
        %p1594 = scmp.lt.s32.totalorder %s1593, 63
        %s1595 = scalar_select %p1594, %s1593, 63
        %s1596 = smul.addr %s1595, 8
        %s1597 = scalar_lea.vmem %s3, %s1596
      $region44: #{multi_head_cnn_forward.4} parent=39 // pred_fallthru
        _
    $region40: #{multi_head_cnn_forward.4} parent=5 // pred_fallthru
      _
  $region6: #{multi_head_cnn_forward.4} parent=0 // loop_footer
    %s13 = sadd.s32 1, %s9
  $region7: #{multi_head_cnn_forward.4} parent=0 // loop_footer_branch
    %8 = sbr.rel target = $region3
  $region8: #{multi_head_cnn_forward.4} parent=0 // loop_exit
    _

// kernel: multi_head_cnn_forward.5
$region0: #{multi_head_cnn_forward.5}
  #allocation0 [shape = 'u32[]', space=smem, size = 0x4, offset = 0x4, fixed_abs, tag = 'smem constant byte address 0x4 - core index']
  #allocation1 [shape = 'u32[144,128]{1,0:T(1,128)}', space=vmem, size = 0x12000, scoped, tag = 'internal scratch']
  %s0 = inlined_call_operand.vmem [shape: bf16[512,288], index: 0, kind: input, shape index: {}]
  %s1 = inlined_call_operand.vmem [shape: bf16[288,64], index: 1, kind: input, shape index: {}]
  %s2 = inlined_call_operand.vmem [shape: f32[1,64], index: 2, kind: input, shape index: {}]
  %s3 = inlined_call_operand.vmem [shape: f32[128,64], index: 3, kind: output, shape index: {}]
  %s4 = sld [smem:[#allocation0]]
  $region45: #{multi_head_cnn_forward.5} parent=0
    _
  %s6 = ssub.s32 1, %s4
  %s7 = scalar_select 0, %s6, %s4
  loop: start=0, step=1, limit=4
  $region2: #{multi_head_cnn_forward.5} parent=0 // loop_pre_header
    _
  $region3: #{multi_head_cnn_forward.5} parent=0 // loop_header
    %s9 = sphi 0, %s13
    %p10 = scmp.ge.s32.totalorder %s9, 4
    %s19 = sphi 0, %s21
    %s22 = sphi 0, %s19
    %s23 = sphi 0, %s22
    %s39 = sphi 0, %s23
    %s43 = sphi 0, %s43
    %s45 = sphi 0, %s43
    %s46 = sphi 0, %s45
    %s60 = sphi 0, %s46
    %s64 = sphi 0, %s64
    %s66 = sphi 0, %s64
    %s67 = sphi 0, %s66
    %s81 = sphi 0, %s67
    %s87 = sphi 0, %s89
    %s90 = sphi 0, %s87
    %s91 = sphi 0, %s90
    %s107 = sphi 0, %s91
  $region4: #{multi_head_cnn_forward.5} parent=0 // loop_header_branch
    %12 = sbr.rel (%p10) target = $region8
  $region5: #{multi_head_cnn_forward.5} parent=0 // loop_body
    %s14 = ssub.s32 %s9, 1
    %s15 = ssub.s32 %s9, 2
    %s16 = sadd.s32 %s9, 1
    %s17 = ssub.s32 %s9, %s16
    %p18 = scmp.eq.s32.totalorder %s17, 0
    %s20 = sadd.s32 %s19, 1
    %s21 = scalar_select %p18, %s19, %s20
    %p24 = pneg %p18
    %p25 = scmp.eq.s32.totalorder %s9, 1
    %p26 = por %p24, %p25
    %p27 = scmp.ne.s32.totalorder %s19, %s22
    %p28 = scmp.eq.s32.totalorder %s9, 0
    %p29 = por %p27, %p28
    %p30 = scmp.ne.s32.totalorder %s19, %s22
    %p31 = scmp.eq.s32.totalorder %s14, 1
    %p32 = por %p30, %p31
    %p33 = scmp.ne.s32.totalorder %s22, %s23
    %p34 = scmp.eq.s32.totalorder %s14, 0
    %p35 = por %p33, %p34
    %p36 = scmp.ne.s32.totalorder %s22, %s23
    %p37 = scmp.eq.s32.totalorder %s15, 1
    %p38 = por %p36, %p37
    %p40 = scmp.ne.s32.totalorder %s23, %s39
    %p41 = scmp.eq.s32.totalorder %s15, 0
    %p42 = por %p40, %p41
    %s44 = sadd.s32 %s43, 1
    %p47 = scmp.eq.s32.totalorder %s9, 1
    %p48 = scmp.ne.s32.totalorder %s43, %s45
    %p49 = scmp.eq.s32.totalorder %s9, 0
    %p50 = por %p48, %p49
    %p51 = scmp.ne.s32.totalorder %s43, %s45
    %p52 = scmp.eq.s32.totalorder %s14, 1
    %p53 = por %p51, %p52
    %p54 = scmp.ne.s32.totalorder %s45, %s46
    %p55 = scmp.eq.s32.totalorder %s14, 0
    %p56 = por %p54, %p55
    %p57 = scmp.ne.s32.totalorder %s45, %s46
    %p58 = scmp.eq.s32.totalorder %s15, 1
    %p59 = por %p57, %p58
    %p61 = scmp.ne.s32.totalorder %s46, %s60
    %p62 = scmp.eq.s32.totalorder %s15, 0
    %p63 = por %p61, %p62
    %s65 = sadd.s32 %s64, 1
    %p68 = scmp.eq.s32.totalorder %s9, 1
    %p69 = scmp.ne.s32.totalorder %s64, %s66
    %p70 = scmp.eq.s32.totalorder %s9, 0
    %p71 = por %p69, %p70
    %p72 = scmp.ne.s32.totalorder %s64, %s66
    %p73 = scmp.eq.s32.totalorder %s14, 1
    %p74 = por %p72, %p73
    %p75 = scmp.ne.s32.totalorder %s66, %s67
    %p76 = scmp.eq.s32.totalorder %s14, 0
    %p77 = por %p75, %p76
    %p78 = scmp.ne.s32.totalorder %s66, %s67
    %p79 = scmp.eq.s32.totalorder %s15, 1
    %p80 = por %p78, %p79
    %p82 = scmp.ne.s32.totalorder %s67, %s81
    %p83 = scmp.eq.s32.totalorder %s15, 0
    %p84 = por %p82, %p83
    %s85 = ssub.s32 %s9, %s16
    %p86 = scmp.eq.s32.totalorder %s85, 0
    %s88 = sadd.s32 %s87, 1
    %s89 = scalar_select %p86, %s87, %s88
    %p92 = pneg %p86
    %p93 = scmp.eq.s32.totalorder %s9, 1
    %p94 = por %p92, %p93
    %p95 = scmp.ne.s32.totalorder %s87, %s90
    %p96 = scmp.eq.s32.totalorder %s9, 0
    %p97 = por %p95, %p96
    %p98 = scmp.ne.s32.totalorder %s87, %s90
    %p99 = scmp.eq.s32.totalorder %s14, 1
    %p100 = por %p98, %p99
    %p101 = scmp.ne.s32.totalorder %s90, %s91
    %p102 = scmp.eq.s32.totalorder %s14, 0
    %p103 = por %p101, %p102
    %p104 = scmp.ne.s32.totalorder %s90, %s91
    %p105 = scmp.eq.s32.totalorder %s15, 1
    %p106 = por %p104, %p105
    %p108 = scmp.ne.s32.totalorder %s91, %s107
    %p109 = scmp.eq.s32.totalorder %s15, 0
    %p110 = por %p108, %p109
    %p111 = scmp.le.s32.totalorder 1, %s9
    %p112 = scmp.lt.s32.totalorder %s9, 3
    %p113 = pnand %p111, %p112
    %p114 = pneg %p113
    // Predicated region
    $region9: #{multi_head_cnn_forward.5} parent=5 // pred_check
      _
    $region10: #{multi_head_cnn_forward.5} parent=5 // pred_check_branch
      %116 = sbr.rel (%p113) target = $region12
    $region11: #{multi_head_cnn_forward.5} parent=5 // pred_region
      %s117 = ssub.s32 %s9, 1
      // Predicated region
      $region13: #{multi_head_cnn_forward.5} parent=11 // pred_check
        %p118 = pneg %p56
      $region14: #{multi_head_cnn_forward.5} parent=11 // pred_check_branch
        %120 = sbr.rel (%p118) target = $region16
      $region15: #{multi_head_cnn_forward.5} parent=11 // pred_region
        _
      $region16: #{multi_head_cnn_forward.5} parent=11 // pred_fallthru
        _
      // Predicated region
      $region17: #{multi_head_cnn_forward.5} parent=11 // pred_check
        %p121 = pneg %p77
      $region18: #{multi_head_cnn_forward.5} parent=11 // pred_check_branch
        %123 = sbr.rel (%p121) target = $region20
      $region19: #{multi_head_cnn_forward.5} parent=11 // pred_region
        _
      $region20: #{multi_head_cnn_forward.5} parent=11 // pred_fallthru
        _
    $region12: #{multi_head_cnn_forward.5} parent=5 // pred_fallthru
      _
    %p124 = scmp.lt.s32.totalorder %s9, 2
    // Predicated region
    $region21: #{multi_head_cnn_forward.5} parent=5 // pred_check
      %p125 = pneg %p124
    $region22: #{multi_head_cnn_forward.5} parent=5 // pred_check_branch
      %127 = sbr.rel (%p125) target = $region24
    $region23: #{multi_head_cnn_forward.5} parent=5 // pred_region
      // Predicated region
      $region25: #{multi_head_cnn_forward.5} parent=23 // pred_check
        %p128 = pneg %p29
      $region26: #{multi_head_cnn_forward.5} parent=23 // pred_check_branch
        %130 = sbr.rel (%p128) target = $region28
      $region27: #{multi_head_cnn_forward.5} parent=23 // pred_region
        %s131 = smul.u32 32, %s9
        %p132 = scmp.lt.s32.totalorder %s131, 63
        %s133 = scalar_select %p132, %s131, 63
        %s134 = smul.addr %s133, 3
        %s135 = smul.addr %s134, 4
        %s136 = scalar_lea.vmem %s0, %s135
        %s137 = smul.u32 32, %s9
      $region28: #{multi_head_cnn_forward.5} parent=23 // pred_fallthru
        _
    $region24: #{multi_head_cnn_forward.5} parent=5 // pred_fallthru
      _
    %p138 = scmp.le.s32.totalorder 1, %s9
    %p139 = scmp.lt.s32.totalorder %s9, 3
    %p140 = pnand %p138, %p139
    %p141 = pneg %p140
    // Predicated region
    $region29: #{multi_head_cnn_forward.5} parent=5 // pred_check
      _
    $region30: #{multi_head_cnn_forward.5} parent=5 // pred_check_branch
      %143 = sbr.rel (%p140) target = $region32
    $region31: #{multi_head_cnn_forward.5} parent=5 // pred_region
      %s144 = ssub.s32 %s9, 1
      %s145 = smul.u32 32, %s14
      %p146 = scmp.lt.s32.totalorder %s145, 63
      %s147 = scalar_select %p146, %s145, 63
      %s148 = smul.addr %s147, 3
      %s149 = smul.addr %s148, 4
      %s150 = scalar_lea.vmem %s0, %s149
      %p151 = pneg %p35
      %p152 = pneg %p32
      %p153 = pneg %p56
      %p154 = pneg %p53
      %p155 = pneg %p77
      %p156 = pneg %p74
      %p157 = pneg %p103
      %p158 = pneg %p100
      %s159 = smul.u32 8, %s14
      %p160 = scmp.lt.s32.totalorder %s159, 15
      %s161 = scalar_select %p160, %s159, 15
      %s162 = smul.addr %s161, 8
      %s163 = scalar_lea.vmem %s3, %s162
      %s164 = smul.u32 32, %s14
      %p165 = scmp.lt.s32.totalorder %s164, 63
      %s166 = scalar_select %p165, %s164, 63
      %s167 = smul.addr %s166, 3
      %s168 = smul.addr %s167, 4
      %s169 = scalar_lea.vmem %s0, %s168
      %s170 = smul.u32 32, %s14
      %s171 = smul.u32 8, %s14
      %p172 = scmp.lt.s32.totalorder %s171, 15
      %s173 = scalar_select %p172, %s171, 15
      %s174 = smul.addr %s173, 8
      %s175 = scalar_lea.vmem %s3, %s174
      %s176 = smul.u32 8, %s14
      %v178 = vld [vmem:[%s169] sm:$0xff]
      %v179 = vld [vmem:[%s169 + $0x8] sm:$0xf]
      %v180 = vld [vmem:[%s169 + $0xc] sm:$0xff]
      %v181 = vld [vmem:[%s169 + $0x14] sm:$0xf]
      %v182 = vld [vmem:[%s169 + $0x18] sm:$0xff]
      %v183 = vld [vmem:[%s169 + $0x20] sm:$0xf]
      %v184 = vld [vmem:[%s169 + $0x24] sm:$0xff]
      %v185 = vld [vmem:[%s169 + $0x2c] sm:$0xf]
      %v186 = vld [vmem:[%s169 + $0x30] sm:$0xff]
      %v187 = vld [vmem:[%s169 + $0x38] sm:$0xf]
      %v188 = vld [vmem:[%s169 + $0x3c] sm:$0xff]
      %v189 = vld [vmem:[%s169 + $0x44] sm:$0xf]
      %v190 = vld [vmem:[%s169 + $0x48] sm:$0xff]
      %v191 = vld [vmem:[%s169 + $0x50] sm:$0xf]
      %v192 = vld [vmem:[%s169 + $0x54] sm:$0xff]
      %v193 = vld [vmem:[%s169 + $0x5c] sm:$0xf]
      %v194 = vld [vmem:[%s169 + $0x60] sm:$0xff]
      %v195 = vld [vmem:[%s169 + $0x68] sm:$0xf]
      %v196 = vld [vmem:[%s169 + $0x6c] sm:$0xff]
      %v197 = vld [vmem:[%s169 + $0x74] sm:$0xf]
      %v198 = vld [vmem:[%s169 + $0x78] sm:$0xff]
      %v199 = vld [vmem:[%s169 + $0x80] sm:$0xf]
      %v200 = vld [vmem:[%s169 + $0x84] sm:$0xff]
      %v201 = vld [vmem:[%s169 + $0x8c] sm:$0xf]
      %v202 = vld [vmem:[%s169 + $0x90] sm:$0xff]
      %v203 = vld [vmem:[%s169 + $0x98] sm:$0xf]
      %v204 = vld [vmem:[%s169 + $0x9c] sm:$0xff]
      %v205 = vld [vmem:[%s169 + $0xa4] sm:$0xf]
      %v206 = vld [vmem:[%s169 + $0xa8] sm:$0xff]
      %v207 = vld [vmem:[%s169 + $0xb0] sm:$0xf]
      %v208 = vld [vmem:[%s169 + $0xb4] sm:$0xff]
      %v209 = vld [vmem:[%s169 + $0xbc] sm:$0xf]
      %v210 = vld [vmem:[%s169 + $0xc0] sm:$0xff]
      %v211 = vld [vmem:[%s169 + $0xc8] sm:$0xf]
      %v212 = vld [vmem:[%s169 + $0xcc] sm:$0xff]
      %v213 = vld [vmem:[%s169 + $0xd4] sm:$0xf]
      %v214 = vld [vmem:[%s169 + $0xd8] sm:$0xff]
      %v215 = vld [vmem:[%s169 + $0xe0] sm:$0xf]
      %v216 = vld [vmem:[%s169 + $0xe4] sm:$0xff]
      %v217 = vld [vmem:[%s169 + $0xec] sm:$0xf]
      %v218 = vld [vmem:[%s169 + $0xf0] sm:$0xff]
      %v219 = vld [vmem:[%s169 + $0xf8] sm:$0xf]
      %v220 = vld [vmem:[%s169 + $0xfc] sm:$0xff]
      %v221 = vld [vmem:[%s169 + $0x104] sm:$0xf]
      %v222 = vld [vmem:[%s169 + $0x108] sm:$0xff]
      %v223 = vld [vmem:[%s169 + $0x110] sm:$0xf]
      %v224 = vld [vmem:[%s169 + $0x114] sm:$0xff]
      %v225 = vld [vmem:[%s169 + $0x11c] sm:$0xf]
      %v226 = vld [vmem:[%s169 + $0x120] sm:$0xff]
      %v227 = vld [vmem:[%s169 + $0x128] sm:$0xf]
      %v228 = vld [vmem:[%s169 + $0x12c] sm:$0xff]
      %v229 = vld [vmem:[%s169 + $0x134] sm:$0xf]
      %v230 = vld [vmem:[%s169 + $0x138] sm:$0xff]
      %v231 = vld [vmem:[%s169 + $0x140] sm:$0xf]
      %v232 = vld [vmem:[%s169 + $0x144] sm:$0xff]
      %v233 = vld [vmem:[%s169 + $0x14c] sm:$0xf]
      %v234 = vld [vmem:[%s169 + $0x150] sm:$0xff]
      %v235 = vld [vmem:[%s169 + $0x158] sm:$0xf]
      %v236 = vld [vmem:[%s169 + $0x15c] sm:$0xff]
      %v237 = vld [vmem:[%s169 + $0x164] sm:$0xf]
      %v238 = vld [vmem:[%s169 + $0x168] sm:$0xff]
      %v239 = vld [vmem:[%s169 + $0x170] sm:$0xf]
      %v240 = vld [vmem:[%s169 + $0x174] sm:$0xff]
      %v241 = vld [vmem:[%s169 + $0x17c] sm:$0xf]
      %v242 = vld [vmem:[%s1] sm:$0xf]
      %v243 = vld [vmem:[%s1 + $0x4] sm:$0xf]
      %v244 = vld [vmem:[%s1 + $0x8] sm:$0xf]
      %v245 = vld [vmem:[%s1 + $0xc] sm:$0xf]
      %v246 = vld [vmem:[%s1 + $0x10] sm:$0xf]
      %v247 = vld [vmem:[%s1 + $0x14] sm:$0xf]
      %v248 = vld [vmem:[%s1 + $0x18] sm:$0xf]
      %v249 = vld [vmem:[%s1 + $0x1c] sm:$0xf]
      %v250 = vld [vmem:[%s1 + $0x20] sm:$0xf]
      %v251 = vld [vmem:[%s1 + $0x24] sm:$0xf]
      %v252 = vld [vmem:[%s1 + $0x28] sm:$0xf]
      %v253 = vld [vmem:[%s1 + $0x2c] sm:$0xf]
      %v254 = vld [vmem:[%s1 + $0x30] sm:$0xf]
      %v255 = vld [vmem:[%s1 + $0x34] sm:$0xf]
      %v256 = vld [vmem:[%s1 + $0x38] sm:$0xf]
      %v257 = vld [vmem:[%s1 + $0x3c] sm:$0xf]
      %v258 = vld [vmem:[%s1 + $0x40] sm:$0xf]
      %v259 = vld [vmem:[%s1 + $0x44] sm:$0xf]
      %v260 = vld [vmem:[%s1 + $0x48] sm:$0xf]
      %v261 = vld [vmem:[%s1 + $0x4c] sm:$0xf]
      %v262 = vld [vmem:[%s1 + $0x50] sm:$0xf]
      %v263 = vld [vmem:[%s1 + $0x54] sm:$0xf]
      %v264 = vld [vmem:[%s1 + $0x58] sm:$0xf]
      %v265 = vld [vmem:[%s1 + $0x5c] sm:$0xf]
      %v266 = vld [vmem:[%s1 + $0x60] sm:$0xf]
      %v267 = vld [vmem:[%s1 + $0x64] sm:$0xf]
      %v268 = vld [vmem:[%s1 + $0x68] sm:$0xf]
      %v269 = vld [vmem:[%s1 + $0x6c] sm:$0xf]
      %v270 = vld [vmem:[%s1 + $0x70] sm:$0xf]
      %v271 = vld [vmem:[%s1 + $0x74] sm:$0xf]
      %v272 = vld [vmem:[%s1 + $0x78] sm:$0xf]
      %v273 = vld [vmem:[%s1 + $0x7c] sm:$0xf]
      %v274 = vld [vmem:[%s1 + $0x80] sm:$0xf]
      %v275 = vld [vmem:[%s1 + $0x84] sm:$0xf]
      %v276 = vld [vmem:[%s1 + $0x88] sm:$0xf]
      %v277 = vld [vmem:[%s1 + $0x8c] sm:$0xf]
      %v342 = vunpack.c.l.b16 %v178
      %v343 = vunpack.c.h.b16 %v178
      %v344 = vunpack.c.l.b16 %v179
      %v345 = vunpack.c.l.b16 %v180
      %v346 = vunpack.c.h.b16 %v180
      %v347 = vunpack.c.l.b16 %v181
      %v348 = vunpack.c.l.b16 %v182
      %v349 = vunpack.c.h.b16 %v182
      %v350 = vunpack.c.l.b16 %v183
      %v351 = vunpack.c.l.b16 %v184
      %v352 = vunpack.c.h.b16 %v184
      %v353 = vunpack.c.l.b16 %v185
      %v354 = vunpack.c.l.b16 %v186
      %v355 = vunpack.c.h.b16 %v186
      %v356 = vunpack.c.l.b16 %v187
      %v357 = vunpack.c.l.b16 %v188
      %v358 = vunpack.c.h.b16 %v188
      %v359 = vunpack.c.l.b16 %v189
      %v360 = vunpack.c.l.b16 %v190
      %v361 = vunpack.c.h.b16 %v190
      %v362 = vunpack.c.l.b16 %v191
      %v363 = vunpack.c.l.b16 %v192
      %v364 = vunpack.c.h.b16 %v192
      %v365 = vunpack.c.l.b16 %v193
      %v366 = vunpack.c.l.b16 %v194
      %v367 = vunpack.c.h.b16 %v194
      %v368 = vunpack.c.l.b16 %v195
      %v369 = vunpack.c.l.b16 %v196
      %v370 = vunpack.c.h.b16 %v196
      %v371 = vunpack.c.l.b16 %v197
      %v372 = vunpack.c.l.b16 %v198
      %v373 = vunpack.c.h.b16 %v198
      %v374 = vunpack.c.l.b16 %v199
      %v375 = vunpack.c.l.b16 %v200
      %v376 = vunpack.c.h.b16 %v200
      %v377 = vunpack.c.l.b16 %v201
      %v378 = vunpack.c.l.b16 %v202
      %v379 = vunpack.c.h.b16 %v202
      %v380 = vunpack.c.l.b16 %v203
      %v381 = vunpack.c.l.b16 %v204
      %v382 = vunpack.c.h.b16 %v204
      %v383 = vunpack.c.l.b16 %v205
      %v384 = vunpack.c.l.b16 %v206
      %v385 = vunpack.c.h.b16 %v206
      %v386 = vunpack.c.l.b16 %v207
      %v387 = vunpack.c.l.b16 %v208
      %v388 = vunpack.c.h.b16 %v208
      %v389 = vunpack.c.l.b16 %v209
      %v390 = vunpack.c.l.b16 %v210
      %v391 = vunpack.c.h.b16 %v210
      %v392 = vunpack.c.l.b16 %v211
      %v393 = vunpack.c.l.b16 %v212
      %v394 = vunpack.c.h.b16 %v212
      %v395 = vunpack.c.l.b16 %v213
      %v396 = vunpack.c.l.b16 %v214
      %v397 = vunpack.c.h.b16 %v214
      %v398 = vunpack.c.l.b16 %v215
      %v399 = vunpack.c.l.b16 %v216
      %v400 = vunpack.c.h.b16 %v216
      %v401 = vunpack.c.l.b16 %v217
      %v402 = vunpack.c.l.b16 %v218
      %v403 = vunpack.c.h.b16 %v218
      %v404 = vunpack.c.l.b16 %v219
      %v405 = vunpack.c.l.b16 %v220
      %v406 = vunpack.c.h.b16 %v220
      %v407 = vunpack.c.l.b16 %v221
      %v408 = vunpack.c.l.b16 %v222
      %v409 = vunpack.c.h.b16 %v222
      %v410 = vunpack.c.l.b16 %v223
      %v411 = vunpack.c.l.b16 %v224
      %v412 = vunpack.c.h.b16 %v224
      %v413 = vunpack.c.l.b16 %v225
      %v414 = vunpack.c.l.b16 %v226
      %v415 = vunpack.c.h.b16 %v226
      %v416 = vunpack.c.l.b16 %v227
      %v417 = vunpack.c.l.b16 %v228
      %v418 = vunpack.c.h.b16 %v228
      %v419 = vunpack.c.l.b16 %v229
      %v420 = vunpack.c.l.b16 %v230
      %v421 = vunpack.c.h.b16 %v230
      %v422 = vunpack.c.l.b16 %v231
      %v423 = vunpack.c.l.b16 %v232
      %v424 = vunpack.c.h.b16 %v232
      %v425 = vunpack.c.l.b16 %v233
      %v426 = vunpack.c.l.b16 %v234
      %v427 = vunpack.c.h.b16 %v234
      %v428 = vunpack.c.l.b16 %v235
      %v429 = vunpack.c.l.b16 %v236
      %v430 = vunpack.c.h.b16 %v236
      %v431 = vunpack.c.l.b16 %v237
      %v432 = vunpack.c.l.b16 %v238
      %v433 = vunpack.c.h.b16 %v238
      %v434 = vunpack.c.l.b16 %v239
      %v435 = vunpack.c.l.b16 %v240
      %v436 = vunpack.c.h.b16 %v240
      %v437 = vunpack.c.l.b16 %v241
      %v438 = vpack.c.b16 %v345, %v342
      %v439 = vpack.c.b16 %v346, %v343
      %v440 = vpack.c.b16 %v347, %v344
      %v441 = vpack.c.b16 %v351, %v348
      %v442 = vpack.c.b16 %v352, %v349
      %v443 = vpack.c.b16 %v353, %v350
      %v444 = vpack.c.b16 %v357, %v354
      %v445 = vpack.c.b16 %v358, %v355
      %v446 = vpack.c.b16 %v359, %v356
      %v447 = vpack.c.b16 %v363, %v360
      %v448 = vpack.c.b16 %v364, %v361
      %v449 = vpack.c.b16 %v365, %v362
      %v450 = vpack.c.b16 %v369, %v366
      %v451 = vpack.c.b16 %v370, %v367
      %v452 = vpack.c.b16 %v371, %v368
      %v453 = vpack.c.b16 %v375, %v372
      %v454 = vpack.c.b16 %v376, %v373
      %v455 = vpack.c.b16 %v377, %v374
      %v456 = vpack.c.b16 %v381, %v378
      %v457 = vpack.c.b16 %v382, %v379
      %v458 = vpack.c.b16 %v383, %v380
      %v459 = vpack.c.b16 %v387, %v384
      %v460 = vpack.c.b16 %v388, %v385
      %v461 = vpack.c.b16 %v389, %v386
      %v462 = vpack.c.b16 %v393, %v390
      %v463 = vpack.c.b16 %v394, %v391
      %v464 = vpack.c.b16 %v395, %v392
      %v465 = vpack.c.b16 %v399, %v396
      %v466 = vpack.c.b16 %v400, %v397
      %v467 = vpack.c.b16 %v401, %v398
      %v468 = vpack.c.b16 %v405, %v402
      %v469 = vpack.c.b16 %v406, %v403
      %v470 = vpack.c.b16 %v407, %v404
      %v471 = vpack.c.b16 %v411, %v408
      %v472 = vpack.c.b16 %v412, %v409
      %v473 = vpack.c.b16 %v413, %v410
      %v474 = vpack.c.b16 %v417, %v414
      %v475 = vpack.c.b16 %v418, %v415
      %v476 = vpack.c.b16 %v419, %v416
      %v477 = vpack.c.b16 %v423, %v420
      %v478 = vpack.c.b16 %v424, %v421
      %v479 = vpack.c.b16 %v425, %v422
      %v480 = vpack.c.b16 %v429, %v426
      %v481 = vpack.c.b16 %v430, %v427
      %v482 = vpack.c.b16 %v431, %v428
      %v483 = vpack.c.b16 %v435, %v432
      %v484 = vpack.c.b16 %v436, %v433
      %v485 = vpack.c.b16 %v437, %v434
      %v554 = vunpack.c.l.b16 %v242
      %v555 = vunpack.c.l.b16 %v243
      %v556 = vunpack.c.l.b16 %v244
      %v557 = vunpack.c.l.b16 %v245
      %v558 = vunpack.c.l.b16 %v246
      %v559 = vunpack.c.l.b16 %v247
      %v560 = vunpack.c.l.b16 %v248
      %v561 = vunpack.c.l.b16 %v249
      %v562 = vunpack.c.l.b16 %v250
      %v563 = vunpack.c.l.b16 %v251
      %v564 = vunpack.c.l.b16 %v252
      %v565 = vunpack.c.l.b16 %v253
      %v566 = vunpack.c.l.b16 %v254
      %v567 = vunpack.c.l.b16 %v255
      %v568 = vunpack.c.l.b16 %v256
      %v569 = vunpack.c.l.b16 %v257
      %v570 = vunpack.c.l.b16 %v258
      %v571 = vunpack.c.l.b16 %v259
      %v572 = vunpack.c.l.b16 %v260
      %v573 = vunpack.c.l.b16 %v261
      %v574 = vunpack.c.l.b16 %v262
      %v575 = vunpack.c.l.b16 %v263
      %v576 = vunpack.c.l.b16 %v264
      %v577 = vunpack.c.l.b16 %v265
      %v578 = vunpack.c.l.b16 %v266
      %v579 = vunpack.c.l.b16 %v267
      %v580 = vunpack.c.l.b16 %v268
      %v581 = vunpack.c.l.b16 %v269
      %v582 = vunpack.c.l.b16 %v270
      %v583 = vunpack.c.l.b16 %v271
      %v584 = vunpack.c.l.b16 %v272
      %v585 = vunpack.c.l.b16 %v273
      %v586 = vunpack.c.l.b16 %v274
      %v587 = vunpack.c.l.b16 %v275
      %v588 = vunpack.c.l.b16 %v276
      %v589 = vunpack.c.l.b16 %v277
      %v590 = vpack.c.b16 %v555, %v554
      %v591 = vpack.c.b16 %v557, %v556
      %v592 = vpack.c.b16 %v559, %v558
      %v593 = vpack.c.b16 %v561, %v560
      %v594 = vpack.c.b16 %v563, %v562
      %v595 = vpack.c.b16 %v565, %v564
      %v596 = vpack.c.b16 %v567, %v566
      %v597 = vpack.c.b16 %v569, %v568
      %v598 = vpack.c.b16 %v571, %v570
      %v599 = vpack.c.b16 %v573, %v572
      %v600 = vpack.c.b16 %v575, %v574
      %v601 = vpack.c.b16 %v577, %v576
      %v602 = vpack.c.b16 %v579, %v578
      %v603 = vpack.c.b16 %v581, %v580
      %v604 = vpack.c.b16 %v583, %v582
      %v605 = vpack.c.b16 %v585, %v584
      %v606 = vpack.c.b16 %v587, %v586
      %v607 = vpack.c.b16 %v589, %v588
      %vm626 = vcmask 261120
      %v628 = vsel %vm626, %v440, 0
      %v631 = vsel %vm626, %v443, 0
      %v634 = vsel %vm626, %v446, 0
      %v637 = vsel %vm626, %v449, 0
      %v640 = vsel %vm626, %v452, 0
      %v643 = vsel %vm626, %v455, 0
      %v646 = vsel %vm626, %v458, 0
      %v649 = vsel %vm626, %v461, 0
      %v652 = vsel %vm626, %v464, 0
      %v655 = vsel %vm626, %v467, 0
      %v658 = vsel %vm626, %v470, 0
      %v661 = vsel %vm626, %v473, 0
      %v664 = vsel %vm626, %v476, 0
      %v667 = vsel %vm626, %v479, 0
      %v670 = vsel %vm626, %v482, 0
      %v673 = vsel %vm626, %v485, 0
      %675 = vmatprep.subr.bf16.mxu0 0
      %676 = vmatpush1.bf16.msra.mxu0 %v590
      %677 = vmatprep.subr.bf16.mxu0 0
      %678 = vmatpush1.bf16.msra.mxu0 %v591
      %679 = vmatprep.subr.bf16.mxu0 0
      %680 = vmatpush1.bf16.msra.mxu0 %v592
      %681 = vmatprep.subr.bf16.mxu0 0
      %682 = vmatpush1.bf16.msra.mxu0 %v593
      %683 = vmatprep.subr.bf16.mxu0 0
      %684 = vmatpush1.bf16.msra.mxu0 %v594
      %685 = vmatprep.subr.bf16.mxu0 0
      %686 = vmatpush1.bf16.msra.mxu0 %v595
      %687 = vmatprep.subr.bf16.mxu0 0
      %688 = vmatpush1.bf16.msra.mxu0 %v596
      %689 = vmatprep.subr.bf16.mxu0 0
      %690 = vmatpush1.bf16.msra.mxu0 %v597
      %691 = vmatprep.subr.bf16.mxu0 0
      %692 = vmatpush1.bf16.msra.mxu0 %v598
      %693 = vmatprep.subr.bf16.mxu0 0
      %694 = vmatpush1.bf16.msra.mxu0 %v599
      %695 = vmatprep.subr.bf16.mxu0 0
      %696 = vmatpush1.bf16.msra.mxu0 %v600
      %697 = vmatprep.subr.bf16.mxu0 0
      %698 = vmatpush1.bf16.msra.mxu0 %v601
      %699 = vmatprep.subr.bf16.mxu0 0
      %700 = vmatpush1.bf16.msra.mxu0 %v602
      %701 = vmatprep.subr.bf16.mxu0 0
      %702 = vmatpush1.bf16.msra.mxu0 %v603
      %703 = vmatprep.subr.bf16.mxu0 0
      %704 = vmatpush1.bf16.msra.mxu0 %v604
      %705 = vmatprep.subr.bf16.mxu0 0
      %706 = vmatpush1.bf16.msra.mxu0 %v605
      %707 = vmatprep.mubr.bf16.mxu0 %v439
      %708 = vmatmul.mubr.bf16.gmra.mrb[0].mxu0 %v438
      %v709 = vpop.f32.mrb[0].mxu0
      %v710 = vadd.f32 0.0, %v709
      %v711 = vpop.f32.mrb[0].mxu0
      %v712 = vpop.f32.mrb[0].mxu0
      %v713 = vadd.f32 0.0, %v712
      %v714 = vpop.f32.mrb[0].mxu0
      %715 = vmatprep.mubr.bf16.mxu0 %v442
      %716 = vmatmul.mubr.bf16.gmra.mrb[0].mxu0 %v441
      %v717 = vpop.f32.mrb[0].mxu0
      %v718 = vadd.f32 0.0, %v717
      %v719 = vpop.f32.mrb[0].mxu0
      %v720 = vpop.f32.mrb[0].mxu0
      %v721 = vadd.f32 0.0, %v720
      %v722 = vpop.f32.mrb[0].mxu0
      %723 = vmatprep.mubr.bf16.mxu0 %v445
      %724 = vmatmul.mubr.bf16.gmra.mrb[0].mxu0 %v444
      %v725 = vpop.f32.mrb[0].mxu0
      %v726 = vadd.f32 0.0, %v725
      %v727 = vpop.f32.mrb[0].mxu0
      %v728 = vpop.f32.mrb[0].mxu0
      %v729 = vadd.f32 0.0, %v728
      %v730 = vpop.f32.mrb[0].mxu0
      %731 = vmatprep.mubr.bf16.mxu0 %v448
      %732 = vmatmul.mubr.bf16.gmra.mrb[0].mxu0 %v447
      %v733 = vpop.f32.mrb[0].mxu0
      %v734 = vadd.f32 0.0, %v733
      %v735 = vpop.f32.mrb[0].mxu0
      %v736 = vpop.f32.mrb[0].mxu0
      %v737 = vadd.f32 0.0, %v736
      %v738 = vpop.f32.mrb[0].mxu0
      %739 = vmatprep.mubr.bf16.mxu0 %v451
      %740 = vmatmul.mubr.bf16.gmra.mrb[0].mxu0 %v450
      %v741 = vpop.f32.mrb[0].mxu0
      %v742 = vadd.f32 0.0, %v741
      %v743 = vpop.f32.mrb[0].mxu0
      %v744 = vpop.f32.mrb[0].mxu0
      %v745 = vadd.f32 0.0, %v744
      %v746 = vpop.f32.mrb[0].mxu0
      %747 = vmatprep.mubr.bf16.mxu0 %v454
      %748 = vmatmul.mubr.bf16.gmra.mrb[0].mxu0 %v453
      %v749 = vpop.f32.mrb[0].mxu0
      %v750 = vadd.f32 0.0, %v749
      %v751 = vpop.f32.mrb[0].mxu0
      %v752 = vpop.f32.mrb[0].mxu0
      %v753 = vadd.f32 0.0, %v752
      %v754 = vpop.f32.mrb[0].mxu0
      %755 = vmatprep.mubr.bf16.mxu0 %v457
      %756 = vmatmul.mubr.bf16.gmra.mrb[0].mxu0 %v456
      %v757 = vpop.f32.mrb[0].mxu0
      %v758 = vadd.f32 0.0, %v757
      %v759 = vpop.f32.mrb[0].mxu0
      %v760 = vpop.f32.mrb[0].mxu0
      %v761 = vadd.f32 0.0, %v760
      %v762 = vpop.f32.mrb[0].mxu0
      %763 = vmatprep.mubr.bf16.mxu0 %v460
      %764 = vmatmul.mubr.bf16.gmra.mrb[0].mxu0 %v459
      %v765 = vpop.f32.mrb[0].mxu0
      %v766 = vadd.f32 0.0, %v765
      %v767 = vpop.f32.mrb[0].mxu0
      %v768 = vpop.f32.mrb[0].mxu0
      %v769 = vadd.f32 0.0, %v768
      %v770 = vpop.f32.mrb[0].mxu0
      %771 = vmatprep.mubr.bf16.mxu0 %v463
      %772 = vmatmul.mubr.bf16.gmra.mrb[0].mxu0 %v462
      %v773 = vpop.f32.mrb[0].mxu0
      %v774 = vadd.f32 0.0, %v773
      %v775 = vpop.f32.mrb[0].mxu0
      %v776 = vpop.f32.mrb[0].mxu0
      %v777 = vadd.f32 0.0, %v776
      %v778 = vpop.f32.mrb[0].mxu0
      %779 = vmatprep.mubr.bf16.mxu0 %v466
      %780 = vmatmul.mubr.bf16.gmra.mrb[0].mxu0 %v465
      %v781 = vpop.f32.mrb[0].mxu0
      %v782 = vadd.f32 0.0, %v781
      %v783 = vpop.f32.mrb[0].mxu0
      %v784 = vpop.f32.mrb[0].mxu0
      %v785 = vadd.f32 0.0, %v784
      %v786 = vpop.f32.mrb[0].mxu0
      %787 = vmatprep.mubr.bf16.mxu0 %v469
      %788 = vmatmul.mubr.bf16.gmra.mrb[0].mxu0 %v468
      %v789 = vpop.f32.mrb[0].mxu0
      %v790 = vadd.f32 0.0, %v789
      %v791 = vpop.f32.mrb[0].mxu0
      %v792 = vpop.f32.mrb[0].mxu0
      %v793 = vadd.f32 0.0, %v792
      %v794 = vpop.f32.mrb[0].mxu0
      %795 = vmatprep.mubr.bf16.mxu0 %v472
      %796 = vmatmul.mubr.bf16.gmra.mrb[0].mxu0 %v471
      %v797 = vpop.f32.mrb[0].mxu0
      %v798 = vadd.f32 0.0, %v797
      %v799 = vpop.f32.mrb[0].mxu0
      %v800 = vpop.f32.mrb[0].mxu0
      %v801 = vadd.f32 0.0, %v800
      %v802 = vpop.f32.mrb[0].mxu0
      %803 = vmatprep.mubr.bf16.mxu0 %v475
      %804 = vmatmul.mubr.bf16.gmra.mrb[0].mxu0 %v474
      %v805 = vpop.f32.mrb[0].mxu0
      %v806 = vadd.f32 0.0, %v805
      %v807 = vpop.f32.mrb[0].mxu0
      %v808 = vpop.f32.mrb[0].mxu0
      %v809 = vadd.f32 0.0, %v808
      %v810 = vpop.f32.mrb[0].mxu0
      %811 = vmatprep.mubr.bf16.mxu0 %v478
      %812 = vmatmul.mubr.bf16.gmra.mrb[0].mxu0 %v477
      %v813 = vpop.f32.mrb[0].mxu0
      %v814 = vadd.f32 0.0, %v813
      %v815 = vpop.f32.mrb[0].mxu0
      %v816 = vpop.f32.mrb[0].mxu0
      %v817 = vadd.f32 0.0, %v816
      %v818 = vpop.f32.mrb[0].mxu0
      %819 = vmatprep.mubr.bf16.mxu0 %v481
      %820 = vmatmul.mubr.bf16.gmra.mrb[0].mxu0 %v480
      %v821 = vpop.f32.mrb[0].mxu0
      %v822 = vadd.f32 0.0, %v821
      %v823 = vpop.f32.mrb[0].mxu0
      %v824 = vpop.f32.mrb[0].mxu0
      %v825 = vadd.f32 0.0, %v824
      %v826 = vpop.f32.mrb[0].mxu0
      %827 = vmatprep.mubr.bf16.mxu0 %v484
      %828 = vmatmul.mubr.bf16.gmra.mrb[0].mxu0 %v483
      %v829 = vpop.f32.mrb[0].mxu0
      %v830 = vadd.f32 0.0, %v829
      %v831 = vpop.f32.mrb[0].mxu0
      %v832 = vpop.f32.mrb[0].mxu0
      %v833 = vadd.f32 0.0, %v832
      %v834 = vpop.f32.mrb[0].mxu0
      %835 = vdwg.mxu0
      %836 = vmatprep.subr.bf16.mxu0 0
      %837 = vmatpush1.bf16.msra.mxu0 %v606
      %838 = vmatprep.subr.bf16.mxu0 0
      %839 = vmatpush1.bf16.msra.mxu0 %v607
      %840 = vmatprep.subr.bf16.mxu0 0
      %841 = vmatpush1.bf16.msra.mxu0 0
      %842 = vmatprep.subr.bf16.mxu0 0
      %843 = vmatpush1.bf16.msra.mxu0 0
      %844 = vmatprep.subr.bf16.mxu0 0
      %845 = vmatpush1.bf16.msra.mxu0 0
      %846 = vmatprep.subr.bf16.mxu0 0
      %847 = vmatpush1.bf16.msra.mxu0 0
      %848 = vmatprep.subr.bf16.mxu0 0
      %849 = vmatpush1.bf16.msra.mxu0 0
      %850 = vmatprep.subr.bf16.mxu0 0
      %851 = vmatpush1.bf16.msra.mxu0 0
      %852 = vmatprep.subr.bf16.mxu0 0
      %853 = vmatpush1.bf16.msra.mxu0 0
      %854 = vmatprep.subr.bf16.mxu0 0
      %855 = vmatpush1.bf16.msra.mxu0 0
      %856 = vmatprep.subr.bf16.mxu0 0
      %857 = vmatpush1.bf16.msra.mxu0 0
      %858 = vmatprep.subr.bf16.mxu0 0
      %859 = vmatpush1.bf16.msra.mxu0 0
      %860 = vmatprep.subr.bf16.mxu0 0
      %861 = vmatpush1.bf16.msra.mxu0 0
      %862 = vmatprep.subr.bf16.mxu0 0
      %863 = vmatpush1.bf16.msra.mxu0 0
      %864 = vmatprep.subr.bf16.mxu0 0
      %865 = vmatpush1.bf16.msra.mxu0 0
      %866 = vmatprep.subr.bf16.mxu0 0
      %867 = vmatpush1.bf16.msra.mxu0 0
      %868 = vmatprep.mubr.bf16.mxu0 0
      %869 = vmatmul.mubr.bf16.gmra.mrb[0].mxu0 %v628
      %v870 = vpop.f32.mrb[0].mxu0
      %v871 = vadd.f32 %v710, %v870
      %v872 = vpop.f32.mrb[0].mxu0
      %v873 = vpop.f32.mrb[0].mxu0
      %v874 = vadd.f32 %v713, %v873
      %v875 = vpop.f32.mrb[0].mxu0
      %876 = vmatprep.mubr.bf16.mxu0 0
      %877 = vmatmul.mubr.bf16.gmra.mrb[0].mxu0 %v631
      %v878 = vpop.f32.mrb[0].mxu0
      %v879 = vadd.f32 %v718, %v878
      %v880 = vpop.f32.mrb[0].mxu0
      %v881 = vpop.f32.mrb[0].mxu0
      %v882 = vadd.f32 %v721, %v881
      %v883 = vpop.f32.mrb[0].mxu0
      %884 = vmatprep.mubr.bf16.mxu0 0
      %885 = vmatmul.mubr.bf16.gmra.mrb[0].mxu0 %v634
      %v886 = vpop.f32.mrb[0].mxu0
      %v887 = vadd.f32 %v726, %v886
      %v888 = vpop.f32.mrb[0].mxu0
      %v889 = vpop.f32.mrb[0].mxu0
      %v890 = vadd.f32 %v729, %v889
      %v891 = vpop.f32.mrb[0].mxu0
      %892 = vmatprep.mubr.bf16.mxu0 0
      %893 = vmatmul.mubr.bf16.gmra.mrb[0].mxu0 %v637
      %v894 = vpop.f32.mrb[0].mxu0
      %v895 = vadd.f32 %v734, %v894
      %v896 = vpop.f32.mrb[0].mxu0
      %v897 = vpop.f32.mrb[0].mxu0
      %v898 = vadd.f32 %v737, %v897
      %v899 = vpop.f32.mrb[0].mxu0
      %900 = vmatprep.mubr.bf16.mxu0 0
      %901 = vmatmul.mubr.bf16.gmra.mrb[0].mxu0 %v640
      %v902 = vpop.f32.mrb[0].mxu0
      %v903 = vadd.f32 %v742, %v902
      %v904 = vpop.f32.mrb[0].mxu0
      %v905 = vpop.f32.mrb[0].mxu0
      %v906 = vadd.f32 %v745, %v905
      %v907 = vpop.f32.mrb[0].mxu0
      %908 = vmatprep.mubr.bf16.mxu0 0
      %909 = vmatmul.mubr.bf16.gmra.mrb[0].mxu0 %v643
      %v910 = vpop.f32.mrb[0].mxu0
      %v911 = vadd.f32 %v750, %v910
      %v912 = vpop.f32.mrb[0].mxu0
      %v913 = vpop.f32.mrb[0].mxu0
      %v914 = vadd.f32 %v753, %v913
      %v915 = vpop.f32.mrb[0].mxu0
      %916 = vmatprep.mubr.bf16.mxu0 0
      %917 = vmatmul.mubr.bf16.gmra.mrb[0].mxu0 %v646
      %v918 = vpop.f32.mrb[0].mxu0
      %v919 = vadd.f32 %v758, %v918
      %v920 = vpop.f32.mrb[0].mxu0
      %v921 = vpop.f32.mrb[0].mxu0
      %v922 = vadd.f32 %v761, %v921
      %v923 = vpop.f32.mrb[0].mxu0
      %924 = vmatprep.mubr.bf16.mxu0 0
      %925 = vmatmul.mubr.bf16.gmra.mrb[0].mxu0 %v649
      %v926 = vpop.f32.mrb[0].mxu0
      %v927 = vadd.f32 %v766, %v926
      %v928 = vpop.f32.mrb[0].mxu0
      %v929 = vpop.f32.mrb[0].mxu0
      %v930 = vadd.f32 %v769, %v929
      %v931 = vpop.f32.mrb[0].mxu0
      %932 = vmatprep.mubr.bf16.mxu0 0
      %933 = vmatmul.mubr.bf16.gmra.mrb[0].mxu0 %v652
      %v934 = vpop.f32.mrb[0].mxu0
      %v935 = vadd.f32 %v774, %v934
      %v936 = vpop.f32.mrb[0].mxu0
      %v937 = vpop.f32.mrb[0].mxu0
      %v938 = vadd.f32 %v777, %v937
      %v939 = vpop.f32.mrb[0].mxu0
      %940 = vmatprep.mubr.bf16.mxu0 0
      %941 = vmatmul.mubr.bf16.gmra.mrb[0].mxu0 %v655
      %v942 = vpop.f32.mrb[0].mxu0
      %v943 = vadd.f32 %v782, %v942
      %v944 = vpop.f32.mrb[0].mxu0
      %v945 = vpop.f32.mrb[0].mxu0
      %v946 = vadd.f32 %v785, %v945
      %v947 = vpop.f32.mrb[0].mxu0
      %948 = vmatprep.mubr.bf16.mxu0 0
      %949 = vmatmul.mubr.bf16.gmra.mrb[0].mxu0 %v658
      %v950 = vpop.f32.mrb[0].mxu0
      %v951 = vadd.f32 %v790, %v950
      %v952 = vpop.f32.mrb[0].mxu0
      %v953 = vpop.f32.mrb[0].mxu0
      %v954 = vadd.f32 %v793, %v953
      %v955 = vpop.f32.mrb[0].mxu0
      %956 = vmatprep.mubr.bf16.mxu0 0
      %957 = vmatmul.mubr.bf16.gmra.mrb[0].mxu0 %v661
      %v958 = vpop.f32.mrb[0].mxu0
      %v959 = vadd.f32 %v798, %v958
      %v960 = vpop.f32.mrb[0].mxu0
      %v961 = vpop.f32.mrb[0].mxu0
      %v962 = vadd.f32 %v801, %v961
      %v963 = vpop.f32.mrb[0].mxu0
      %964 = vmatprep.mubr.bf16.mxu0 0
      %965 = vmatmul.mubr.bf16.gmra.mrb[0].mxu0 %v664
      %v966 = vpop.f32.mrb[0].mxu0
      %v967 = vadd.f32 %v806, %v966
      %v968 = vpop.f32.mrb[0].mxu0
      %v969 = vpop.f32.mrb[0].mxu0
      %v970 = vadd.f32 %v809, %v969
      %v971 = vpop.f32.mrb[0].mxu0
      %972 = vmatprep.mubr.bf16.mxu0 0
      %973 = vmatmul.mubr.bf16.gmra.mrb[0].mxu0 %v667
      %v974 = vpop.f32.mrb[0].mxu0
      %v975 = vadd.f32 %v814, %v974
      %v976 = vpop.f32.mrb[0].mxu0
      %v977 = vpop.f32.mrb[0].mxu0
      %v978 = vadd.f32 %v817, %v977
      %v979 = vpop.f32.mrb[0].mxu0
      %980 = vmatprep.mubr.bf16.mxu0 0
      %981 = vmatmul.mubr.bf16.gmra.mrb[0].mxu0 %v670
      %v982 = vpop.f32.mrb[0].mxu0
      %v983 = vadd.f32 %v822, %v982
      %v984 = vpop.f32.mrb[0].mxu0
      %v985 = vpop.f32.mrb[0].mxu0
      %v986 = vadd.f32 %v825, %v985
      %v987 = vpop.f32.mrb[0].mxu0
      %988 = vmatprep.mubr.bf16.mxu0 0
      %989 = vmatmul.mubr.bf16.gmra.mrb[0].mxu0 %v673
      %v990 = vpop.f32.mrb[0].mxu0
      %v991 = vadd.f32 %v830, %v990
      %v992 = vpop.f32.mrb[0].mxu0
      %v993 = vpop.f32.mrb[0].mxu0
      %v994 = vadd.f32 %v833, %v993
      %v995 = vpop.f32.mrb[0].mxu0
      %996 = vdwg.mxu0
      %v997 = vmax.f32 %v871, %v903
      %v998 = vmax.f32 %v874, %v906
      %v999 = vmax.f32 %v879, %v911
      %v1000 = vmax.f32 %v882, %v914
      %v1001 = vmax.f32 %v887, %v919
      %v1002 = vmax.f32 %v890, %v922
      %v1003 = vmax.f32 %v895, %v927
      %v1004 = vmax.f32 %v898, %v930
      %v1005 = vmax.f32 %v935, %v967
      %v1006 = vmax.f32 %v938, %v970
      %v1007 = vmax.f32 %v943, %v975
      %v1008 = vmax.f32 %v946, %v978
      %v1009 = vmax.f32 %v951, %v983
      %v1010 = vmax.f32 %v954, %v986
      %v1011 = vmax.f32 %v959, %v991
      %v1012 = vmax.f32 %v962, %v994
      %v1013 = vmax.f32 %v997, %v1005
      %v1014 = vmax.f32 %v998, %v1006
      %v1015 = vmax.f32 %v999, %v1007
      %v1016 = vmax.f32 %v1000, %v1008
      %v1017 = vmax.f32 %v1001, %v1009
      %v1018 = vmax.f32 %v1002, %v1010
      %v1019 = vmax.f32 %v1003, %v1011
      %v1020 = vmax.f32 %v1004, %v1012
      %v1021 = vld [vmem:[%s2] sm:$0x1]
      %v1023 = vlaneseq
      %v1024 = vshrl.u32 %v1023, 7
      %v1025 = vsub.s32 0, %v1024
      %v1026 = vrot.slane %v1021, %v1025
      %v1028 = vadd.f32 %v1013, %v1026
      %v1029 = vadd.f32 %v1014, %v1026
      %v1030 = vadd.f32 %v1015, %v1026
      %v1031 = vadd.f32 %v1016, %v1026
      %v1032 = vadd.f32 %v1017, %v1026
      %v1033 = vadd.f32 %v1018, %v1026
      %v1034 = vadd.f32 %v1019, %v1026
      %v1035 = vadd.f32 %v1020, %v1026
      %v1036 = vmax.f32 %v1028, 0.0
      %v1037 = vmax.f32 %v1029, 0.0
      %v1038 = vmax.f32 %v1030, 0.0
      %v1039 = vmax.f32 %v1031, 0.0
      %v1040 = vmax.f32 %v1032, 0.0
      %v1041 = vmax.f32 %v1033, 0.0
      %v1042 = vmax.f32 %v1034, 0.0
      %v1043 = vmax.f32 %v1035, 0.0
      %vm1044 = vcmask 523264
      %1045 = vst.msk [vmem:[%s175] sm:$0xff] %vm1044, %v1036
      %1046 = vst.msk [vmem:[%s175 + $0x8] sm:$0xff] %vm1044, %v1037
      %1047 = vst.msk [vmem:[%s175 + $0x10] sm:$0xff] %vm1044, %v1038
      %1048 = vst.msk [vmem:[%s175 + $0x18] sm:$0xff] %vm1044, %v1039
      %1049 = vst.msk [vmem:[%s175 + $0x20] sm:$0xff] %vm1044, %v1040
      %1050 = vst.msk [vmem:[%s175 + $0x28] sm:$0xff] %vm1044, %v1041
      %1051 = vst.msk [vmem:[%s175 + $0x30] sm:$0xff] %vm1044, %v1042
      %1052 = vst.msk [vmem:[%s175 + $0x38] sm:$0xff] %vm1044, %v1043
      %s1053 = smul.u32 8, %s14
      %p1054 = scmp.lt.s32.totalorder %s1053, 15
      %s1055 = scalar_select %p1054, %s1053, 15
      %s1056 = smul.addr %s1055, 8
      %s1057 = scalar_lea.vmem %s3, %s1056
      // Predicated region
      $region33: #{multi_head_cnn_forward.5} parent=31 // pred_check
        %p1058 = pneg %p100
      $region34: #{multi_head_cnn_forward.5} parent=31 // pred_check_branch
        %1060 = sbr.rel (%p1058) target = $region36
      $region35: #{multi_head_cnn_forward.5} parent=31 // pred_region
        %s1061 = smul.u32 8, %s14
      $region36: #{multi_head_cnn_forward.5} parent=31 // pred_fallthru
        _
    $region32: #{multi_head_cnn_forward.5} parent=5 // pred_fallthru
      _
    %p1062 = scmp.le.s32.totalorder 2, %s9
    // Predicated region
    $region37: #{multi_head_cnn_forward.5} parent=5 // pred_check
      %p1063 = pneg %p1062
    $region38: #{multi_head_cnn_forward.5} parent=5 // pred_check_branch
      %1065 = sbr.rel (%p1063) target = $region40
    $region39: #{multi_head_cnn_forward.5} parent=5 // pred_region
      %s1066 = ssub.s32 %s9, 2
      // Predicated region
      $region41: #{multi_head_cnn_forward.5} parent=39 // pred_check
        %p1067 = pneg %p106
      $region42: #{multi_head_cnn_forward.5} parent=39 // pred_check_branch
        %1069 = sbr.rel (%p1067) target = $region44
      $region43: #{multi_head_cnn_forward.5} parent=39 // pred_region
        %s1070 = smul.u32 8, %s15
        %p1071 = scmp.lt.s32.totalorder %s1070, 15
        %s1072 = scalar_select %p1071, %s1070, 15
        %s1073 = smul.addr %s1072, 8
        %s1074 = scalar_lea.vmem %s3, %s1073
      $region44: #{multi_head_cnn_forward.5} parent=39 // pred_fallthru
        _
    $region40: #{multi_head_cnn_forward.5} parent=5 // pred_fallthru
      _
  $region6: #{multi_head_cnn_forward.5} parent=0 // loop_footer
    %s13 = sadd.s32 1, %s9
  $region7: #{multi_head_cnn_forward.5} parent=0 // loop_footer_branch
    %8 = sbr.rel target = $region3
  $region8: #{multi_head_cnn_forward.5} parent=0 // loop_exit
    _

// kernel: multi_head_cnn_forward.6
$region0: #{multi_head_cnn_forward.6}
  #allocation0 [shape = 'u32[]', space=smem, size = 0x4, offset = 0x4, fixed_abs, tag = 'smem constant byte address 0x4 - core index']
  #allocation1 [shape = 'u32[144,128]{1,0:T(1,128)}', space=vmem, size = 0x12000, scoped, tag = 'internal scratch']
  #allocation2 [shape = 'f32[2,128]{1,0:T(2,128)}', space=vmem, size = 0x400, scoped, tag = 'scratch operand']
  %s0 = inlined_call_operand.vmem [shape: bf16[2,4096], index: 0, kind: input, shape index: {}]
  %s1 = inlined_call_operand.vmem [shape: bf16[4096,256], index: 1, kind: input, shape index: {}]
  %s2 = inlined_call_operand.vmem [shape: f32[1,256], index: 2, kind: input, shape index: {}]
  %s3 = inlined_call_operand.vmem [shape: f32[2,256], index: 3, kind: output, shape index: {}]
  %s4 = sld [smem:[#allocation0]]
  $region94: #{multi_head_cnn_forward.6} parent=0
    _
  %s6 = ssub.s32 1, %s4
  %s7 = scalar_select 0, %s6, %s4
  $region1: #{multi_head_cnn_forward.6} parent=0
    #allocation3 [shape = 'u8[262144]{0}', space=vmem, size = 0x40000, scoped, tag = 'input window, operand 1']
    loop: start=0, step=1, limit=18
    $region2: #{multi_head_cnn_forward.6} parent=1 // loop_pre_header
      _
    $region3: #{multi_head_cnn_forward.6} parent=1 // loop_header
      %s9 = sphi 0, %s13
      %p10 = scmp.ge.s32.totalorder %s9, 18
      %s16 = sphi 0, %s28
      %s17 = sphi 0, %s24
      %s18 = sphi 0, %s16
      %s19 = sphi 0, %s17
      %s20 = sphi 0, %s18
      %s21 = sphi 0, %s19
      %s31 = sphi 0, %s33
      %s34 = sphi 0, %s31
      %s35 = sphi 0, %s34
      %s51 = sphi 0, %s35
      %s59 = sphi 0, %s61
      %s62 = sphi 0, %s59
      %s63 = sphi 0, %s62
      %s79 = sphi 0, %s63
      %s85 = sphi 0, %s87
      %s88 = sphi 0, %s85
      %s89 = sphi 0, %s88
      %s105 = sphi 0, %s89
      %s111 = sphi 0, %s113
      %s114 = sphi 0, %s111
      %s115 = sphi 0, %s114
      %s131 = sphi 0, %s115
    $region4: #{multi_head_cnn_forward.6} parent=1 // loop_header_branch
      %12 = sbr.rel (%p10) target = $region8
    $region5: #{multi_head_cnn_forward.6} parent=1 // loop_body
      %s14 = ssub.s32 %s9, 1
      %s15 = ssub.s32 %s9, 2
      %s22 = sadd.s32 1, %s17
      %p23 = scmp.ge.s32.totalorder %s22, 8
      %s24 = scalar_select %p23, 0, %s22
      %s25 = sadd.s32 1, %s16
      %s26 = scalar_select %p23, %s25, %s16
      %p27 = scmp.ge.s32.totalorder %s26, 2
      %s28 = scalar_select %p27, 0, %s26
      %s29 = ssub.s32 %s17, %s24
      %p30 = scmp.eq.s32.totalorder %s29, 0
      %s32 = sadd.s32 %s31, 1
      %s33 = scalar_select %p30, %s31, %s32
      %p36 = pneg %p30
      %p37 = scmp.eq.s32.totalorder %s9, 15
      %p38 = por %p36, %p37
      %p39 = scmp.ne.s32.totalorder %s31, %s34
      %p40 = scmp.eq.s32.totalorder %s9, 0
      %p41 = por %p39, %p40
      %p42 = scmp.ne.s32.totalorder %s31, %s34
      %p43 = scmp.eq.s32.totalorder %s14, 15
      %p44 = por %p42, %p43
      %p45 = scmp.ne.s32.totalorder %s34, %s35
      %p46 = scmp.eq.s32.totalorder %s14, 0
      %p47 = por %p45, %p46
      %p48 = scmp.ne.s32.totalorder %s34, %s35
      %p49 = scmp.eq.s32.totalorder %s15, 15
      %p50 = por %p48, %p49
      %p52 = scmp.ne.s32.totalorder %s35, %s51
      %p53 = scmp.eq.s32.totalorder %s15, 0
      %p54 = por %p52, %p53
      %s55 = ssub.s32 %s17, %s24
      %s56 = ssub.s32 %s16, %s28
      %s57 = sor.u32 %s55, %s56
      %p58 = scmp.eq.s32.totalorder %s57, 0
      %s60 = sadd.s32 %s59, 1
      %s61 = scalar_select %p58, %s59, %s60
      %p64 = pneg %p58
      %p65 = scmp.eq.s32.totalorder %s9, 15
      %p66 = por %p64, %p65
      %p67 = scmp.ne.s32.totalorder %s59, %s62
      %p68 = scmp.eq.s32.totalorder %s9, 0
      %p69 = por %p67, %p68
      %p70 = scmp.ne.s32.totalorder %s59, %s62
      %p71 = scmp.eq.s32.totalorder %s14, 15
      %p72 = por %p70, %p71
      %p73 = scmp.ne.s32.totalorder %s62, %s63
      %p74 = scmp.eq.s32.totalorder %s14, 0
      %p75 = por %p73, %p74
      %p76 = scmp.ne.s32.totalorder %s62, %s63
      %p77 = scmp.eq.s32.totalorder %s15, 15
      %p78 = por %p76, %p77
      %p80 = scmp.ne.s32.totalorder %s63, %s79
      %p81 = scmp.eq.s32.totalorder %s15, 0
      %p82 = por %p80, %p81
      %s83 = ssub.s32 %s16, %s28
      %p84 = scmp.eq.s32.totalorder %s83, 0
      %s86 = sadd.s32 %s85, 1
      %s87 = scalar_select %p84, %s85, %s86
      %p90 = pneg %p84
      %p91 = scmp.eq.s32.totalorder %s9, 15
      %p92 = por %p90, %p91
      %p93 = scmp.ne.s32.totalorder %s85, %s88
      %p94 = scmp.eq.s32.totalorder %s9, 0
      %p95 = por %p93, %p94
      %p96 = scmp.ne.s32.totalorder %s85, %s88
      %p97 = scmp.eq.s32.totalorder %s14, 15
      %p98 = por %p96, %p97
      %p99 = scmp.ne.s32.totalorder %s88, %s89
      %p100 = scmp.eq.s32.totalorder %s14, 0
      %p101 = por %p99, %p100
      %p102 = scmp.ne.s32.totalorder %s88, %s89
      %p103 = scmp.eq.s32.totalorder %s15, 15
      %p104 = por %p102, %p103
      %p106 = scmp.ne.s32.totalorder %s89, %s105
      %p107 = scmp.eq.s32.totalorder %s15, 0
      %p108 = por %p106, %p107
      %s109 = ssub.s32 %s16, %s28
      %p110 = scmp.eq.s32.totalorder %s109, 0
      %s112 = sadd.s32 %s111, 1
      %s113 = scalar_select %p110, %s111, %s112
      %p116 = pneg %p110
      %p117 = scmp.eq.s32.totalorder %s9, 15
      %p118 = por %p116, %p117
      %p119 = scmp.ne.s32.totalorder %s111, %s114
      %p120 = scmp.eq.s32.totalorder %s9, 0
      %p121 = por %p119, %p120
      %p122 = scmp.ne.s32.totalorder %s111, %s114
      %p123 = scmp.eq.s32.totalorder %s14, 15
      %p124 = por %p122, %p123
      %p125 = scmp.ne.s32.totalorder %s114, %s115
      %p126 = scmp.eq.s32.totalorder %s14, 0
      %p127 = por %p125, %p126
      %p128 = scmp.ne.s32.totalorder %s114, %s115
      %p129 = scmp.eq.s32.totalorder %s15, 15
      %p130 = por %p128, %p129
      %p132 = scmp.ne.s32.totalorder %s115, %s131
      %p133 = scmp.eq.s32.totalorder %s15, 0
      %p134 = por %p132, %p133
      %p135 = scmp.le.s32.totalorder 1, %s9
      %p136 = scmp.lt.s32.totalorder %s9, 17
      %p137 = pnand %p135, %p136
      %p138 = pneg %p137
      // Predicated region
      $region9: #{multi_head_cnn_forward.6} parent=5 // pred_check
        _
      $region10: #{multi_head_cnn_forward.6} parent=5 // pred_check_branch
        %140 = sbr.rel (%p137) target = $region12
      $region11: #{multi_head_cnn_forward.6} parent=5 // pred_region
        %s141 = ssub.s32 %s9, 1
      $region12: #{multi_head_cnn_forward.6} parent=5 // pred_fallthru
        _
      %p142 = scmp.lt.s32.totalorder %s9, 16
      // Predicated region
      $region13: #{multi_head_cnn_forward.6} parent=5 // pred_check
        %p143 = pneg %p142
      $region14: #{multi_head_cnn_forward.6} parent=5 // pred_check_branch
        %145 = sbr.rel (%p143) target = $region16
      $region15: #{multi_head_cnn_forward.6} parent=5 // pred_region
        // Predicated region
        $region17: #{multi_head_cnn_forward.6} parent=15 // pred_check
          %p146 = pneg %p41
        $region18: #{multi_head_cnn_forward.6} parent=15 // pred_check_branch
          %148 = sbr.rel (%p146) target = $region20
        $region19: #{multi_head_cnn_forward.6} parent=15 // pred_region
          %s149 = smul.u32 4, %s17
          %p150 = scmp.lt.s32.totalorder %s149, 31
          %s151 = scalar_select %p150, %s149, 31
          %s152 = scalar_lea.vmem %s0, %s151
          %s153 = smul.u32 4, %s17
        $region20: #{multi_head_cnn_forward.6} parent=15 // pred_fallthru
          _
        // Predicated region
        $region21: #{multi_head_cnn_forward.6} parent=15 // pred_check
          %p154 = pneg %p69
        $region22: #{multi_head_cnn_forward.6} parent=15 // pred_check_branch
          %156 = sbr.rel (%p154) target = $region24
        $region23: #{multi_head_cnn_forward.6} parent=15 // pred_region
          %s157 = sand.u32 %s59, 1
          %s158 = sand.u32 %s59, 1
          %s159 = smul.addr %s158, 256
          %s160 = scalar_lea.vmem [#allocation3], %s159
          %s161 = smul.u32 64, %s17
          %s162 = smul.addr %s161, 2
          %s163 = sadd.s32 %s16, %s162
          %s164 = smul.addr %s163, 4
          %s165 = scalar_lea.vmem %s1, %s164
          // Predicated region
          $region25: #{multi_head_cnn_forward.6} parent=23 // pred_check
            _
          $region26: #{multi_head_cnn_forward.6} parent=23 // pred_check_branch
            %167 = sbr.rel (0) target = $region28
          $region27: #{multi_head_cnn_forward.6} parent=23 // pred_region
            // Predicated region
            $region29: #{multi_head_cnn_forward.6} parent=27 // pred_check
              _
            $region30: #{multi_head_cnn_forward.6} parent=27 // pred_check_branch
              %169 = sbr.rel target = $region32
            $region31: #{multi_head_cnn_forward.6} parent=27 // pred_region
              // Predicated region
              $region44: #{multi_head_cnn_forward.6} parent=31 // pred_check
                _
              $region45: #{multi_head_cnn_forward.6} parent=31 // pred_check_branch
                %310 = sbr.rel (0) target = $region47
              $region46: #{multi_head_cnn_forward.6} parent=31 // pred_region
                loop: start=0, step=1, limit=1
                $region48: #{multi_head_cnn_forward.6} parent=46 // loop_pre_header
                  _
                $region49: #{multi_head_cnn_forward.6} parent=46 // loop_header
                  %s312 = sphi 0, %s316
                  %p313 = scmp.ge.s32.totalorder %s312, 1
                  %s317 = sphi %s165, %s165
                  %s318 = sphi %s160, %s160
                $region50: #{multi_head_cnn_forward.6} parent=46 // loop_header_branch
                  %315 = sbr.rel (%p313) target = $region54
                $region51: #{multi_head_cnn_forward.6} parent=46 // loop_body
                  _
                $region52: #{multi_head_cnn_forward.6} parent=46 // loop_footer
                  %s316 = sadd.s32 1, %s312
                $region53: #{multi_head_cnn_forward.6} parent=46 // loop_footer_branch
                  %311 = sbr.rel target = $region49
                $region54: #{multi_head_cnn_forward.6} parent=46 // loop_exit
                  _
                loop: start=0, step=1, limit=1
                $region55: #{multi_head_cnn_forward.6} parent=46 // loop_pre_header
                  _
                $region56: #{multi_head_cnn_forward.6} parent=46 // loop_header
                  %s321 = sphi 0, %s325
                  %p322 = scmp.ge.s32.totalorder %s321, 1
                  %s326 = sphi %s165, %s165
                  %s327 = sphi %s160, %s160
                $region57: #{multi_head_cnn_forward.6} parent=46 // loop_header_branch
                  %324 = sbr.rel (%p322) target = $region61
                $region58: #{multi_head_cnn_forward.6} parent=46 // loop_body
                  %v328 = vld [vmem:[%s326] sm:$0xf]
                  %329 = vst [vmem:[%s327] sm:$0xf] %v328
                  %v330 = vld [vmem:[%s326 + $0x8] sm:$0xf]
                  %331 = vst [vmem:[%s327 + $0x4] sm:$0xf] %v330
                  %v332 = vld [vmem:[%s326 + $0x10] sm:$0xf]
                  %333 = vst [vmem:[%s327 + $0x8] sm:$0xf] %v332
                  %v334 = vld [vmem:[%s326 + $0x18] sm:$0xf]
                  %335 = vst [vmem:[%s327 + $0xc] sm:$0xf] %v334
                  %v336 = vld [vmem:[%s326 + $0x20] sm:$0xf]
                  %337 = vst [vmem:[%s327 + $0x10] sm:$0xf] %v336
                  %v338 = vld [vmem:[%s326 + $0x28] sm:$0xf]
                  %339 = vst [vmem:[%s327 + $0x14] sm:$0xf] %v338
                  %v340 = vld [vmem:[%s326 + $0x30] sm:$0xf]
                  %341 = vst [vmem:[%s327 + $0x18] sm:$0xf] %v340
                  %v342 = vld [vmem:[%s326 + $0x38] sm:$0xf]
                  %343 = vst [vmem:[%s327 + $0x1c] sm:$0xf] %v342
                  %v344 = vld [vmem:[%s326 + $0x40] sm:$0xf]
                  %345 = vst [vmem:[%s327 + $0x20] sm:$0xf] %v344
                  %v346 = vld [vmem:[%s326 + $0x48] sm:$0xf]
                  %347 = vst [vmem:[%s327 + $0x24] sm:$0xf] %v346
                  %v348 = vld [vmem:[%s326 + $0x50] sm:$0xf]
                  %349 = vst [vmem:[%s327 + $0x28] sm:$0xf] %v348
                  %v350 = vld [vmem:[%s326 + $0x58] sm:$0xf]
                  %351 = vst [vmem:[%s327 + $0x2c] sm:$0xf] %v350
                  %v352 = vld [vmem:[%s326 + $0x60] sm:$0xf]
                  %353 = vst [vmem:[%s327 + $0x30] sm:$0xf] %v352
                  %v354 = vld [vmem:[%s326 + $0x68] sm:$0xf]
                  %355 = vst [vmem:[%s327 + $0x34] sm:$0xf] %v354
                  %v356 = vld [vmem:[%s326 + $0x70] sm:$0xf]
                  %357 = vst [vmem:[%s327 + $0x38] sm:$0xf] %v356
                  %v358 = vld [vmem:[%s326 + $0x78] sm:$0xf]
                  %359 = vst [vmem:[%s327 + $0x3c] sm:$0xf] %v358
                  %v360 = vld [vmem:[%s326 + $0x80] sm:$0xf]
                  %361 = vst [vmem:[%s327 + $0x40] sm:$0xf] %v360
                  %v362 = vld [vmem:[%s326 + $0x88] sm:$0xf]
                  %363 = vst [vmem:[%s327 + $0x44] sm:$0xf] %v362
                  %v364 = vld [vmem:[%s326 + $0x90] sm:$0xf]
                  %365 = vst [vmem:[%s327 + $0x48] sm:$0xf] %v364
                  %v366 = vld [vmem:[%s326 + $0x98] sm:$0xf]
                  %367 = vst [vmem:[%s327 + $0x4c] sm:$0xf] %v366
                  %v368 = vld [vmem:[%s326 + $0xa0] sm:$0xf]
                  %369 = vst [vmem:[%s327 + $0x50] sm:$0xf] %v368
                  %v370 = vld [vmem:[%s326 + $0xa8] sm:$0xf]
                  %371 = vst [vmem:[%s327 + $0x54] sm:$0xf] %v370
                  %v372 = vld [vmem:[%s326 + $0xb0] sm:$0xf]
                  %373 = vst [vmem:[%s327 + $0x58] sm:$0xf] %v372
                  %v374 = vld [vmem:[%s326 + $0xb8] sm:$0xf]
                  %375 = vst [vmem:[%s327 + $0x5c] sm:$0xf] %v374
                  %v376 = vld [vmem:[%s326 + $0xc0] sm:$0xf]
                  %377 = vst [vmem:[%s327 + $0x60] sm:$0xf] %v376
                  %v378 = vld [vmem:[%s326 + $0xc8] sm:$0xf]
                  %379 = vst [vmem:[%s327 + $0x64] sm:$0xf] %v378
                  %v380 = vld [vmem:[%s326 + $0xd0] sm:$0xf]
                  %381 = vst [vmem:[%s327 + $0x68] sm:$0xf] %v380
                  %v382 = vld [vmem:[%s326 + $0xd8] sm:$0xf]
                  %383 = vst [vmem:[%s327 + $0x6c] sm:$0xf] %v382
                  %v384 = vld [vmem:[%s326 + $0xe0] sm:$0xf]
                  %385 = vst [vmem:[%s327 + $0x70] sm:$0xf] %v384
                  %v386 = vld [vmem:[%s326 + $0xe8] sm:$0xf]
                  %387 = vst [vmem:[%s327 + $0x74] sm:$0xf] %v386
                  %v388 = vld [vmem:[%s326 + $0xf0] sm:$0xf]
                  %389 = vst [vmem:[%s327 + $0x78] sm:$0xf] %v388
                  %v390 = vld [vmem:[%s326 + $0xf8] sm:$0xf]
                  %391 = vst [vmem:[%s327 + $0x7c] sm:$0xf] %v390
                  %v392 = vld [vmem:[%s326 + $0x100] sm:$0xf]
                  %393 = vst [vmem:[%s327 + $0x80] sm:$0xf] %v392
                  %v394 = vld [vmem:[%s326 + $0x108] sm:$0xf]
                  %395 = vst [vmem:[%s327 + $0x84] sm:$0xf] %v394
                  %v396 = vld [vmem:[%s326 + $0x110] sm:$0xf]
                  %397 = vst [vmem:[%s327 + $0x88] sm:$0xf] %v396
                  %v398 = vld [vmem:[%s326 + $0x118] sm:$0xf]
                  %399 = vst [vmem:[%s327 + $0x8c] sm:$0xf] %v398
                  %v400 = vld [vmem:[%s326 + $0x120] sm:$0xf]
                  %401 = vst [vmem:[%s327 + $0x90] sm:$0xf] %v400
                  %v402 = vld [vmem:[%s326 + $0x128] sm:$0xf]
                  %403 = vst [vmem:[%s327 + $0x94] sm:$0xf] %v402
                  %v404 = vld [vmem:[%s326 + $0x130] sm:$0xf]
                  %405 = vst [vmem:[%s327 + $0x98] sm:$0xf] %v404
                  %v406 = vld [vmem:[%s326 + $0x138] sm:$0xf]
                  %407 = vst [vmem:[%s327 + $0x9c] sm:$0xf] %v406
                  %v408 = vld [vmem:[%s326 + $0x140] sm:$0xf]
                  %409 = vst [vmem:[%s327 + $0xa0] sm:$0xf] %v408
                  %v410 = vld [vmem:[%s326 + $0x148] sm:$0xf]
                  %411 = vst [vmem:[%s327 + $0xa4] sm:$0xf] %v410
                  %v412 = vld [vmem:[%s326 + $0x150] sm:$0xf]
                  %413 = vst [vmem:[%s327 + $0xa8] sm:$0xf] %v412
                  %v414 = vld [vmem:[%s326 + $0x158] sm:$0xf]
                  %415 = vst [vmem:[%s327 + $0xac] sm:$0xf] %v414
                  %v416 = vld [vmem:[%s326 + $0x160] sm:$0xf]
                  %417 = vst [vmem:[%s327 + $0xb0] sm:$0xf] %v416
                  %v418 = vld [vmem:[%s326 + $0x168] sm:$0xf]
                  %419 = vst [vmem:[%s327 + $0xb4] sm:$0xf] %v418
                  %v420 = vld [vmem:[%s326 + $0x170] sm:$0xf]
                  %421 = vst [vmem:[%s327 + $0xb8] sm:$0xf] %v420
                  %v422 = vld [vmem:[%s326 + $0x178] sm:$0xf]
                  %423 = vst [vmem:[%s327 + $0xbc] sm:$0xf] %v422
                  %v424 = vld [vmem:[%s326 + $0x180] sm:$0xf]
                  %425 = vst [vmem:[%s327 + $0xc0] sm:$0xf] %v424
                  %v426 = vld [vmem:[%s326 + $0x188] sm:$0xf]
                  %427 = vst [vmem:[%s327 + $0xc4] sm:$0xf] %v426
                  %v428 = vld [vmem:[%s326 + $0x190] sm:$0xf]
                  %429 = vst [vmem:[%s327 + $0xc8] sm:$0xf] %v428
                  %v430 = vld [vmem:[%s326 + $0x198] sm:$0xf]
                  %431 = vst [vmem:[%s327 + $0xcc] sm:$0xf] %v430
                  %v432 = vld [vmem:[%s326 + $0x1a0] sm:$0xf]
                  %433 = vst [vmem:[%s327 + $0xd0] sm:$0xf] %v432
                  %v434 = vld [vmem:[%s326 + $0x1a8] sm:$0xf]
                  %435 = vst [vmem:[%s327 + $0xd4] sm:$0xf] %v434
                  %v436 = vld [vmem:[%s326 + $0x1b0] sm:$0xf]
                  %437 = vst [vmem:[%s327 + $0xd8] sm:$0xf] %v436
                  %v438 = vld [vmem:[%s326 + $0x1b8] sm:$0xf]
                  %439 = vst [vmem:[%s327 + $0xdc] sm:$0xf] %v438
                  %v440 = vld [vmem:[%s326 + $0x1c0] sm:$0xf]
                  %441 = vst [vmem:[%s327 + $0xe0] sm:$0xf] %v440
                  %v442 = vld [vmem:[%s326 + $0x1c8] sm:$0xf]
                  %443 = vst [vmem:[%s327 + $0xe4] sm:$0xf] %v442
                  %v444 = vld [vmem:[%s326 + $0x1d0] sm:$0xf]
                  %445 = vst [vmem:[%s327 + $0xe8] sm:$0xf] %v444
                  %v446 = vld [vmem:[%s326 + $0x1d8] sm:$0xf]
                  %447 = vst [vmem:[%s327 + $0xec] sm:$0xf] %v446
                  %v448 = vld [vmem:[%s326 + $0x1e0] sm:$0xf]
                  %449 = vst [vmem:[%s327 + $0xf0] sm:$0xf] %v448
                  %v450 = vld [vmem:[%s326 + $0x1e8] sm:$0xf]
                  %451 = vst [vmem:[%s327 + $0xf4] sm:$0xf] %v450
                  %v452 = vld [vmem:[%s326 + $0x1f0] sm:$0xf]
                  %453 = vst [vmem:[%s327 + $0xf8] sm:$0xf] %v452
                  %v454 = vld [vmem:[%s326 + $0x1f8] sm:$0xf]
                  %455 = vst [vmem:[%s327 + $0xfc] sm:$0xf] %v454
                $region59: #{multi_head_cnn_forward.6} parent=46 // loop_footer
                  %s325 = sadd.s32 1, %s321
                $region60: #{multi_head_cnn_forward.6} parent=46 // loop_footer_branch
                  %320 = sbr.rel target = $region56
                $region61: #{multi_head_cnn_forward.6} parent=46 // loop_exit
                  _
              $region47: #{multi_head_cnn_forward.6} parent=31 // pred_fallthru
                _
            $region32: #{multi_head_cnn_forward.6} parent=27 // pred_fallthru
              _
            // Predicated region
            $region33: #{multi_head_cnn_forward.6} parent=27 // pred_check
              _
            $region34: #{multi_head_cnn_forward.6} parent=27 // pred_check_branch
              %171 = sbr.rel (0) target = $region36
            $region35: #{multi_head_cnn_forward.6} parent=27 // pred_region
              loop: start=0, step=1, limit=1
              $region37: #{multi_head_cnn_forward.6} parent=35 // loop_pre_header
                _
              $region38: #{multi_head_cnn_forward.6} parent=35 // loop_header
                %s174 = sphi 0, %s178
                %p175 = scmp.ge.s32.totalorder %s174, 1
                %s179 = sphi %s165, %s165
                %s180 = sphi %s160, %s160
              $region39: #{multi_head_cnn_forward.6} parent=35 // loop_header_branch
                %177 = sbr.rel (%p175) target = $region43
              $region40: #{multi_head_cnn_forward.6} parent=35 // loop_body
                %v181 = vld [vmem:[%s179] sm:$0xf]
                %182 = vst [vmem:[%s180] sm:$0xf] %v181
                %v183 = vld [vmem:[%s179 + $0x8] sm:$0xf]
                %184 = vst [vmem:[%s180 + $0x4] sm:$0xf] %v183
                %v185 = vld [vmem:[%s179 + $0x10] sm:$0xf]
                %186 = vst [vmem:[%s180 + $0x8] sm:$0xf] %v185
                %v187 = vld [vmem:[%s179 + $0x18] sm:$0xf]
                %188 = vst [vmem:[%s180 + $0xc] sm:$0xf] %v187
                %v189 = vld [vmem:[%s179 + $0x20] sm:$0xf]
                %190 = vst [vmem:[%s180 + $0x10] sm:$0xf] %v189
                %v191 = vld [vmem:[%s179 + $0x28] sm:$0xf]
                %192 = vst [vmem:[%s180 + $0x14] sm:$0xf] %v191
                %v193 = vld [vmem:[%s179 + $0x30] sm:$0xf]
                %194 = vst [vmem:[%s180 + $0x18] sm:$0xf] %v193
                %v195 = vld [vmem:[%s179 + $0x38] sm:$0xf]
                %196 = vst [vmem:[%s180 + $0x1c] sm:$0xf] %v195
                %v197 = vld [vmem:[%s179 + $0x40] sm:$0xf]
                %198 = vst [vmem:[%s180 + $0x20] sm:$0xf] %v197
                %v199 = vld [vmem:[%s179 + $0x48] sm:$0xf]
                %200 = vst [vmem:[%s180 + $0x24] sm:$0xf] %v199
                %v201 = vld [vmem:[%s179 + $0x50] sm:$0xf]
                %202 = vst [vmem:[%s180 + $0x28] sm:$0xf] %v201
                %v203 = vld [vmem:[%s179 + $0x58] sm:$0xf]
                %204 = vst [vmem:[%s180 + $0x2c] sm:$0xf] %v203
                %v205 = vld [vmem:[%s179 + $0x60] sm:$0xf]
                %206 = vst [vmem:[%s180 + $0x30] sm:$0xf] %v205
                %v207 = vld [vmem:[%s179 + $0x68] sm:$0xf]
                %208 = vst [vmem:[%s180 + $0x34] sm:$0xf] %v207
                %v209 = vld [vmem:[%s179 + $0x70] sm:$0xf]
                %210 = vst [vmem:[%s180 + $0x38] sm:$0xf] %v209
                %v211 = vld [vmem:[%s179 + $0x78] sm:$0xf]
                %212 = vst [vmem:[%s180 + $0x3c] sm:$0xf] %v211
                %v213 = vld [vmem:[%s179 + $0x80] sm:$0xf]
                %214 = vst [vmem:[%s180 + $0x40] sm:$0xf] %v213
                %v215 = vld [vmem:[%s179 + $0x88] sm:$0xf]
                %216 = vst [vmem:[%s180 + $0x44] sm:$0xf] %v215
                %v217 = vld [vmem:[%s179 + $0x90] sm:$0xf]
                %218 = vst [vmem:[%s180 + $0x48] sm:$0xf] %v217
                %v219 = vld [vmem:[%s179 + $0x98] sm:$0xf]
                %220 = vst [vmem:[%s180 + $0x4c] sm:$0xf] %v219
                %v221 = vld [vmem:[%s179 + $0xa0] sm:$0xf]
                %222 = vst [vmem:[%s180 + $0x50] sm:$0xf] %v221
                %v223 = vld [vmem:[%s179 + $0xa8] sm:$0xf]
                %224 = vst [vmem:[%s180 + $0x54] sm:$0xf] %v223
                %v225 = vld [vmem:[%s179 + $0xb0] sm:$0xf]
                %226 = vst [vmem:[%s180 + $0x58] sm:$0xf] %v225
                %v227 = vld [vmem:[%s179 + $0xb8] sm:$0xf]
                %228 = vst [vmem:[%s180 + $0x5c] sm:$0xf] %v227
                %v229 = vld [vmem:[%s179 + $0xc0] sm:$0xf]
                %230 = vst [vmem:[%s180 + $0x60] sm:$0xf] %v229
                %v231 = vld [vmem:[%s179 + $0xc8] sm:$0xf]
                %232 = vst [vmem:[%s180 + $0x64] sm:$0xf] %v231
                %v233 = vld [vmem:[%s179 + $0xd0] sm:$0xf]
                %234 = vst [vmem:[%s180 + $0x68] sm:$0xf] %v233
                %v235 = vld [vmem:[%s179 + $0xd8] sm:$0xf]
                %236 = vst [vmem:[%s180 + $0x6c] sm:$0xf] %v235
                %v237 = vld [vmem:[%s179 + $0xe0] sm:$0xf]
                %238 = vst [vmem:[%s180 + $0x70] sm:$0xf] %v237
                %v239 = vld [vmem:[%s179 + $0xe8] sm:$0xf]
                %240 = vst [vmem:[%s180 + $0x74] sm:$0xf] %v239
                %v241 = vld [vmem:[%s179 + $0xf0] sm:$0xf]
                %242 = vst [vmem:[%s180 + $0x78] sm:$0xf] %v241
                %v243 = vld [vmem:[%s179 + $0xf8] sm:$0xf]
                %244 = vst [vmem:[%s180 + $0x7c] sm:$0xf] %v243
                %v245 = vld [vmem:[%s179 + $0x100] sm:$0xf]
                %246 = vst [vmem:[%s180 + $0x80] sm:$0xf] %v245
                %v247 = vld [vmem:[%s179 + $0x108] sm:$0xf]
                %248 = vst [vmem:[%s180 + $0x84] sm:$0xf] %v247
                %v249 = vld [vmem:[%s179 + $0x110] sm:$0xf]
                %250 = vst [vmem:[%s180 + $0x88] sm:$0xf] %v249
                %v251 = vld [vmem:[%s179 + $0x118] sm:$0xf]
                %252 = vst [vmem:[%s180 + $0x8c] sm:$0xf] %v251
                %v253 = vld [vmem:[%s179 + $0x120] sm:$0xf]
                %254 = vst [vmem:[%s180 + $0x90] sm:$0xf] %v253
                %v255 = vld [vmem:[%s179 + $0x128] sm:$0xf]
                %256 = vst [vmem:[%s180 + $0x94] sm:$0xf] %v255
                %v257 = vld [vmem:[%s179 + $0x130] sm:$0xf]
                %258 = vst [vmem:[%s180 + $0x98] sm:$0xf] %v257
                %v259 = vld [vmem:[%s179 + $0x138] sm:$0xf]
                %260 = vst [vmem:[%s180 + $0x9c] sm:$0xf] %v259
                %v261 = vld [vmem:[%s179 + $0x140] sm:$0xf]
                %262 = vst [vmem:[%s180 + $0xa0] sm:$0xf] %v261
                %v263 = vld [vmem:[%s179 + $0x148] sm:$0xf]
                %264 = vst [vmem:[%s180 + $0xa4] sm:$0xf] %v263
                %v265 = vld [vmem:[%s179 + $0x150] sm:$0xf]
                %266 = vst [vmem:[%s180 + $0xa8] sm:$0xf] %v265
                %v267 = vld [vmem:[%s179 + $0x158] sm:$0xf]
                %268 = vst [vmem:[%s180 + $0xac] sm:$0xf] %v267
                %v269 = vld [vmem:[%s179 + $0x160] sm:$0xf]
                %270 = vst [vmem:[%s180 + $0xb0] sm:$0xf] %v269
                %v271 = vld [vmem:[%s179 + $0x168] sm:$0xf]
                %272 = vst [vmem:[%s180 + $0xb4] sm:$0xf] %v271
                %v273 = vld [vmem:[%s179 + $0x170] sm:$0xf]
                %274 = vst [vmem:[%s180 + $0xb8] sm:$0xf] %v273
                %v275 = vld [vmem:[%s179 + $0x178] sm:$0xf]
                %276 = vst [vmem:[%s180 + $0xbc] sm:$0xf] %v275
                %v277 = vld [vmem:[%s179 + $0x180] sm:$0xf]
                %278 = vst [vmem:[%s180 + $0xc0] sm:$0xf] %v277
                %v279 = vld [vmem:[%s179 + $0x188] sm:$0xf]
                %280 = vst [vmem:[%s180 + $0xc4] sm:$0xf] %v279
                %v281 = vld [vmem:[%s179 + $0x190] sm:$0xf]
                %282 = vst [vmem:[%s180 + $0xc8] sm:$0xf] %v281
                %v283 = vld [vmem:[%s179 + $0x198] sm:$0xf]
                %284 = vst [vmem:[%s180 + $0xcc] sm:$0xf] %v283
                %v285 = vld [vmem:[%s179 + $0x1a0] sm:$0xf]
                %286 = vst [vmem:[%s180 + $0xd0] sm:$0xf] %v285
                %v287 = vld [vmem:[%s179 + $0x1a8] sm:$0xf]
                %288 = vst [vmem:[%s180 + $0xd4] sm:$0xf] %v287
                %v289 = vld [vmem:[%s179 + $0x1b0] sm:$0xf]
                %290 = vst [vmem:[%s180 + $0xd8] sm:$0xf] %v289
                %v291 = vld [vmem:[%s179 + $0x1b8] sm:$0xf]
                %292 = vst [vmem:[%s180 + $0xdc] sm:$0xf] %v291
                %v293 = vld [vmem:[%s179 + $0x1c0] sm:$0xf]
                %294 = vst [vmem:[%s180 + $0xe0] sm:$0xf] %v293
                %v295 = vld [vmem:[%s179 + $0x1c8] sm:$0xf]
                %296 = vst [vmem:[%s180 + $0xe4] sm:$0xf] %v295
                %v297 = vld [vmem:[%s179 + $0x1d0] sm:$0xf]
                %298 = vst [vmem:[%s180 + $0xe8] sm:$0xf] %v297
                %v299 = vld [vmem:[%s179 + $0x1d8] sm:$0xf]
                %300 = vst [vmem:[%s180 + $0xec] sm:$0xf] %v299
                %v301 = vld [vmem:[%s179 + $0x1e0] sm:$0xf]
                %302 = vst [vmem:[%s180 + $0xf0] sm:$0xf] %v301
                %v303 = vld [vmem:[%s179 + $0x1e8] sm:$0xf]
                %304 = vst [vmem:[%s180 + $0xf4] sm:$0xf] %v303
                %v305 = vld [vmem:[%s179 + $0x1f0] sm:$0xf]
                %306 = vst [vmem:[%s180 + $0xf8] sm:$0xf] %v305
                %v307 = vld [vmem:[%s179 + $0x1f8] sm:$0xf]
                %308 = vst [vmem:[%s180 + $0xfc] sm:$0xf] %v307
              $region41: #{multi_head_cnn_forward.6} parent=35 // loop_footer
                %s178 = sadd.s32 1, %s174
              $region42: #{multi_head_cnn_forward.6} parent=35 // loop_footer_branch
                %173 = sbr.rel target = $region38
              $region43: #{multi_head_cnn_forward.6} parent=35 // loop_exit
                _
            $region36: #{multi_head_cnn_forward.6} parent=27 // pred_fallthru
              _
          $region28: #{multi_head_cnn_forward.6} parent=23 // pred_fallthru
            _
          %456 = vnop
        $region24: #{multi_head_cnn_forward.6} parent=15 // pred_fallthru
          _
        // Predicated region
        $region62: #{multi_head_cnn_forward.6} parent=15 // pred_check
          %p457 = pneg %p95
        $region63: #{multi_head_cnn_forward.6} parent=15 // pred_check_branch
          %459 = sbr.rel (%p457) target = $region65
        $region64: #{multi_head_cnn_forward.6} parent=15 // pred_region
          %p460 = scmp.lt.s32.totalorder %s16, 1
          %s461 = scalar_select %p460, %s16, 1
          %s462 = scalar_lea.vmem %s2, %s461
        $region65: #{multi_head_cnn_forward.6} parent=15 // pred_fallthru
          _
      $region16: #{multi_head_cnn_forward.6} parent=5 // pred_fallthru
        _
      %p463 = scmp.le.s32.totalorder 1, %s9
      %p464 = scmp.lt.s32.totalorder %s9, 17
      %p465 = pnand %p463, %p464
      %p466 = pneg %p465
      // Predicated region
      $region66: #{multi_head_cnn_forward.6} parent=5 // pred_check
        _
      $region67: #{multi_head_cnn_forward.6} parent=5 // pred_check_branch
        %468 = sbr.rel (%p465) target = $region69
      $region68: #{multi_head_cnn_forward.6} parent=5 // pred_region
        %s469 = ssub.s32 %s9, 1
        %s470 = sand.u32 %s62, 1
        %s471 = sand.u32 %s62, 1
        %s472 = smul.addr %s471, 256
        %s473 = scalar_lea.vmem [#allocation3], %s472
        // Predicated region
        $region70: #{multi_head_cnn_forward.6} parent=68 // pred_check
          %p474 = pneg %p75
        $region71: #{multi_head_cnn_forward.6} parent=68 // pred_check_branch
          %476 = sbr.rel (%p474) target = $region73
        $region72: #{multi_head_cnn_forward.6} parent=68 // pred_region
          _
        $region73: #{multi_head_cnn_forward.6} parent=68 // pred_fallthru
          _
        %s477 = smul.u32 4, %s19
        %p478 = scmp.lt.s32.totalorder %s477, 31
        %s479 = scalar_select %p478, %s477, 31
        %s480 = scalar_lea.vmem %s0, %s479
        %p481 = pneg %p47
        %p482 = pneg %p44
        %s483 = sand.u32 %s62, 1
        %s484 = sand.u32 %s62, 1
        %s485 = smul.addr %s484, 256
        %s486 = scalar_lea.vmem [#allocation3], %s485
        %p487 = pneg %p75
        %p488 = pneg %p72
        %p489 = scmp.lt.s32.totalorder %s18, 1
        %s490 = scalar_select %p489, %s18, 1
        %s491 = scalar_lea.vmem %s2, %s490
        %p492 = pneg %p101
        %p493 = pneg %p98
        %p494 = pneg %p127
        %p495 = pneg %p124
        %p496 = scmp.lt.s32.totalorder %s18, 1
        %s497 = scalar_select %p496, %s18, 1
        %s498 = smul.addr %s497, 2
        %s499 = scalar_lea.vmem %s3, %s498
        %s500 = smul.u32 4, %s19
        %p501 = scmp.lt.s32.totalorder %s500, 31
        %s502 = scalar_select %p501, %s500, 31
        %s503 = scalar_lea.vmem %s0, %s502
        %s504 = smul.u32 4, %s19
        %s505 = smul.u32 64, %s19
        %p506 = scmp.lt.s32.totalorder %s18, 1
        %s507 = scalar_select %p506, %s18, 1
        %s508 = scalar_lea.vmem %s2, %s507
        %p509 = scmp.lt.s32.totalorder %s18, 1
        %s510 = scalar_select %p509, %s18, 1
        %s511 = smul.addr %s510, 2
        %s512 = scalar_lea.vmem %s3, %s511
        %p514 = scmp.eq.s32.totalorder %s19, 0
        // Predicated region
        $region74: #{multi_head_cnn_forward.6} parent=68 // pred_check
          %p515 = pneg %p514
        $region75: #{multi_head_cnn_forward.6} parent=68 // pred_check_branch
          %517 = sbr.rel (%p515) target = $region77
        $region76: #{multi_head_cnn_forward.6} parent=68 // pred_region
          %518 = vst [vmem:[#allocation2] sm:$0x3] 0.0
        $region77: #{multi_head_cnn_forward.6} parent=68 // pred_fallthru
          _
        %v519 = vld [vmem:[#allocation2] sm:$0x3]
        %v520 = vld [vmem:[%s503] sm:$0xf]
        %v521 = vld [vmem:[%s473] sm:$0xf]
        %v522 = vld [vmem:[%s473 + $0x4] sm:$0xf]
        %v523 = vld [vmem:[%s473 + $0x8] sm:$0xf]
        %v524 = vld [vmem:[%s473 + $0xc] sm:$0xf]
        %v525 = vld [vmem:[%s473 + $0x10] sm:$0xf]
        %v526 = vld [vmem:[%s473 + $0x14] sm:$0xf]
        %v527 = vld [vmem:[%s473 + $0x18] sm:$0xf]
        %v528 = vld [vmem:[%s473 + $0x1c] sm:$0xf]
        %v529 = vld [vmem:[%s473 + $0x20] sm:$0xf]
        %v530 = vld [vmem:[%s473 + $0x24] sm:$0xf]
        %v531 = vld [vmem:[%s473 + $0x28] sm:$0xf]
        %v532 = vld [vmem:[%s473 + $0x2c] sm:$0xf]
        %v533 = vld [vmem:[%s473 + $0x30] sm:$0xf]
        %v534 = vld [vmem:[%s473 + $0x34] sm:$0xf]
        %v535 = vld [vmem:[%s473 + $0x38] sm:$0xf]
        %v536 = vld [vmem:[%s473 + $0x3c] sm:$0xf]
        %v537 = vld [vmem:[%s473 + $0x40] sm:$0xf]
        %v538 = vld [vmem:[%s473 + $0x44] sm:$0xf]
        %v539 = vld [vmem:[%s473 + $0x48] sm:$0xf]
        %v540 = vld [vmem:[%s473 + $0x4c] sm:$0xf]
        %v541 = vld [vmem:[%s473 + $0x50] sm:$0xf]
        %v542 = vld [vmem:[%s473 + $0x54] sm:$0xf]
        %v543 = vld [vmem:[%s473 + $0x58] sm:$0xf]
        %v544 = vld [vmem:[%s473 + $0x5c] sm:$0xf]
        %v545 = vld [vmem:[%s473 + $0x60] sm:$0xf]
        %v546 = vld [vmem:[%s473 + $0x64] sm:$0xf]
        %v547 = vld [vmem:[%s473 + $0x68] sm:$0xf]
        %v548 = vld [vmem:[%s473 + $0x6c] sm:$0xf]
        %v549 = vld [vmem:[%s473 + $0x70] sm:$0xf]
        %v550 = vld [vmem:[%s473 + $0x74] sm:$0xf]
        %v551 = vld [vmem:[%s473 + $0x78] sm:$0xf]
        %v552 = vld [vmem:[%s473 + $0x7c] sm:$0xf]
        %v553 = vld [vmem:[%s473 + $0x80] sm:$0xf]
        %v554 = vld [vmem:[%s473 + $0x84] sm:$0xf]
        %v555 = vld [vmem:[%s473 + $0x88] sm:$0xf]
        %v556 = vld [vmem:[%s473 + $0x8c] sm:$0xf]
        %v557 = vld [vmem:[%s473 + $0x90] sm:$0xf]
        %v558 = vld [vmem:[%s473 + $0x94] sm:$0xf]
        %v559 = vld [vmem:[%s473 + $0x98] sm:$0xf]
        %v560 = vld [vmem:[%s473 + $0x9c] sm:$0xf]
        %v561 = vld [vmem:[%s473 + $0xa0] sm:$0xf]
        %v562 = vld [vmem:[%s473 + $0xa4] sm:$0xf]
        %v563 = vld [vmem:[%s473 + $0xa8] sm:$0xf]
        %v564 = vld [vmem:[%s473 + $0xac] sm:$0xf]
        %v565 = vld [vmem:[%s473 + $0xb0] sm:$0xf]
        %v566 = vld [vmem:[%s473 + $0xb4] sm:$0xf]
        %v567 = vld [vmem:[%s473 + $0xb8] sm:$0xf]
        %v568 = vld [vmem:[%s473 + $0xbc] sm:$0xf]
        %v569 = vld [vmem:[%s473 + $0xc0] sm:$0xf]
        %v570 = vld [vmem:[%s473 + $0xc4] sm:$0xf]
        %v571 = vld [vmem:[%s473 + $0xc8] sm:$0xf]
        %v572 = vld [vmem:[%s473 + $0xcc] sm:$0xf]
        %v573 = vld [vmem:[%s473 + $0xd0] sm:$0xf]
        %v574 = vld [vmem:[%s473 + $0xd4] sm:$0xf]
        %v575 = vld [vmem:[%s473 + $0xd8] sm:$0xf]
        %v576 = vld [vmem:[%s473 + $0xdc] sm:$0xf]
        %v577 = vld [vmem:[%s473 + $0xe0] sm:$0xf]
        %v578 = vld [vmem:[%s473 + $0xe4] sm:$0xf]
        %v579 = vld [vmem:[%s473 + $0xe8] sm:$0xf]
        %v580 = vld [vmem:[%s473 + $0xec] sm:$0xf]
        %v581 = vld [vmem:[%s473 + $0xf0] sm:$0xf]
        %v582 = vld [vmem:[%s473 + $0xf4] sm:$0xf]
        %v583 = vld [vmem:[%s473 + $0xf8] sm:$0xf]
        %v584 = vld [vmem:[%s473 + $0xfc] sm:$0xf]
        %v587 = vunpack.c.l.s4 1966171168
        %v588 = vunpack.c.0.s8 %v587
        %v589 = vlaneseq
        %v590 = vshrl.u32 %v589, 7
        %v591 = vsub.s32 %v588, %v590
        %v592 = vrot.slane %v520, %v591
        %v593 = vcombine.high %v592, %v592
        %v595 = vunpack.c.l.s4 1966171168
        %v596 = vunpack.c.0.s8 %v595
        %v597 = vlaneseq
        %v598 = vshrl.u32 %v597, 7
        %v599 = vsub.s32 %v596, %v598
        %v600 = vrot.slane %v592, %v599
        %v602 = vunpack.c.l.s4 1966171168
        %v603 = vunpack.c.0.s8 %v602
        %v604 = vlaneseq
        %v605 = vshrl.u32 %v604, 7
        %v606 = vsub.s32 %v603, %v605
        %v607 = vrot.slane %v593, %v606
        %v608 = vcombine.high %v600, %v600
        %v609 = vcombine.high %v607, %v607
        %v678 = vunpack.c.l.b16 %v521
        %v679 = vunpack.c.l.b16 %v522
        %v680 = vunpack.c.l.b16 %v523
        %v681 = vunpack.c.l.b16 %v524
        %v682 = vunpack.c.l.b16 %v525
        %v683 = vunpack.c.l.b16 %v526
        %v684 = vunpack.c.l.b16 %v527
        %v685 = vunpack.c.l.b16 %v528
        %v686 = vunpack.c.l.b16 %v529
        %v687 = vunpack.c.l.b16 %v530
        %v688 = vunpack.c.l.b16 %v531
        %v689 = vunpack.c.l.b16 %v532
        %v690 = vunpack.c.l.b16 %v533
        %v691 = vunpack.c.l.b16 %v534
        %v692 = vunpack.c.l.b16 %v535
        %v693 = vunpack.c.l.b16 %v536
        %v694 = vunpack.c.l.b16 %v537
        %v695 = vunpack.c.l.b16 %v538
        %v696 = vunpack.c.l.b16 %v539
        %v697 = vunpack.c.l.b16 %v540
        %v698 = vunpack.c.l.b16 %v541
        %v699 = vunpack.c.l.b16 %v542
        %v700 = vunpack.c.l.b16 %v543
        %v701 = vunpack.c.l.b16 %v544
        %v702 = vunpack.c.l.b16 %v545
        %v703 = vunpack.c.l.b16 %v546
        %v704 = vunpack.c.l.b16 %v547
        %v705 = vunpack.c.l.b16 %v548
        %v706 = vunpack.c.l.b16 %v549
        %v707 = vunpack.c.l.b16 %v550
        %v708 = vunpack.c.l.b16 %v551
        %v709 = vunpack.c.l.b16 %v552
        %v710 = vunpack.c.l.b16 %v553
        %v711 = vunpack.c.l.b16 %v554
        %v712 = vunpack.c.l.b16 %v555
        %v713 = vunpack.c.l.b16 %v556
        %v714 = vunpack.c.l.b16 %v557
        %v715 = vunpack.c.l.b16 %v558
        %v716 = vunpack.c.l.b16 %v559
        %v717 = vunpack.c.l.b16 %v560
        %v718 = vunpack.c.l.b16 %v561
        %v719 = vunpack.c.l.b16 %v562
        %v720 = vunpack.c.l.b16 %v563
        %v721 = vunpack.c.l.b16 %v564
        %v722 = vunpack.c.l.b16 %v565
        %v723 = vunpack.c.l.b16 %v566
        %v724 = vunpack.c.l.b16 %v567
        %v725 = vunpack.c.l.b16 %v568
        %v726 = vunpack.c.l.b16 %v569
        %v727 = vunpack.c.l.b16 %v570
        %v728 = vunpack.c.l.b16 %v571
        %v729 = vunpack.c.l.b16 %v572
        %v730 = vunpack.c.l.b16 %v573
        %v731 = vunpack.c.l.b16 %v574
        %v732 = vunpack.c.l.b16 %v575
        %v733 = vunpack.c.l.b16 %v576
        %v734 = vunpack.c.l.b16 %v577
        %v735 = vunpack.c.l.b16 %v578
        %v736 = vunpack.c.l.b16 %v579
        %v737 = vunpack.c.l.b16 %v580
        %v738 = vunpack.c.l.b16 %v581
        %v739 = vunpack.c.l.b16 %v582
        %v740 = vunpack.c.l.b16 %v583
        %v741 = vunpack.c.l.b16 %v584
        %v742 = vpack.c.b16 %v679, %v678
        %v743 = vpack.c.b16 %v681, %v680
        %v744 = vpack.c.b16 %v683, %v682
        %v745 = vpack.c.b16 %v685, %v684
        %v746 = vpack.c.b16 %v687, %v686
        %v747 = vpack.c.b16 %v689, %v688
        %v748 = vpack.c.b16 %v691, %v690
        %v749 = vpack.c.b16 %v693, %v692
        %v750 = vpack.c.b16 %v695, %v694
        %v751 = vpack.c.b16 %v697, %v696
        %v752 = vpack.c.b16 %v699, %v698
        %v753 = vpack.c.b16 %v701, %v700
        %v754 = vpack.c.b16 %v703, %v702
        %v755 = vpack.c.b16 %v705, %v704
        %v756 = vpack.c.b16 %v707, %v706
        %v757 = vpack.c.b16 %v709, %v708
        %v758 = vpack.c.b16 %v711, %v710
        %v759 = vpack.c.b16 %v713, %v712
        %v760 = vpack.c.b16 %v715, %v714
        %v761 = vpack.c.b16 %v717, %v716
        %v762 = vpack.c.b16 %v719, %v718
        %v763 = vpack.c.b16 %v721, %v720
        %v764 = vpack.c.b16 %v723, %v722
        %v765 = vpack.c.b16 %v725, %v724
        %v766 = vpack.c.b16 %v727, %v726
        %v767 = vpack.c.b16 %v729, %v728
        %v768 = vpack.c.b16 %v731, %v730
        %v769 = vpack.c.b16 %v733, %v732
        %v770 = vpack.c.b16 %v735, %v734
        %v771 = vpack.c.b16 %v737, %v736
        %v772 = vpack.c.b16 %v739, %v738
        %v773 = vpack.c.b16 %v741, %v740
        %806 = vmatprep.subr.bf16.mxu0 0
        %807 = vmatpush1.bf16.msra.mxu0 %v742
        %808 = vmatprep.subr.bf16.mxu0 0
        %809 = vmatpush1.bf16.msra.mxu0 %v743
        %810 = vmatprep.subr.bf16.mxu0 0
        %811 = vmatpush1.bf16.msra.mxu0 %v744
        %812 = vmatprep.subr.bf16.mxu0 0
        %813 = vmatpush1.bf16.msra.mxu0 %v745
        %814 = vmatprep.subr.bf16.mxu0 0
        %815 = vmatpush1.bf16.msra.mxu0 %v746
        %816 = vmatprep.subr.bf16.mxu0 0
        %817 = vmatpush1.bf16.msra.mxu0 %v747
        %818 = vmatprep.subr.bf16.mxu0 0
        %819 = vmatpush1.bf16.msra.mxu0 %v748
        %820 = vmatprep.subr.bf16.mxu0 0
        %821 = vmatpush1.bf16.msra.mxu0 %v749
        %822 = vmatprep.subr.bf16.mxu0 0
        %823 = vmatpush1.bf16.msra.mxu0 %v750
        %824 = vmatprep.subr.bf16.mxu0 0
        %825 = vmatpush1.bf16.msra.mxu0 %v751
        %826 = vmatprep.subr.bf16.mxu0 0
        %827 = vmatpush1.bf16.msra.mxu0 %v752
        %828 = vmatprep.subr.bf16.mxu0 0
        %829 = vmatpush1.bf16.msra.mxu0 %v753
        %830 = vmatprep.subr.bf16.mxu0 0
        %831 = vmatpush1.bf16.msra.mxu0 %v754
        %832 = vmatprep.subr.bf16.mxu0 0
        %833 = vmatpush1.bf16.msra.mxu0 %v755
        %834 = vmatprep.subr.bf16.mxu0 0
        %835 = vmatpush1.bf16.msra.mxu0 %v756
        %836 = vmatprep.subr.bf16.mxu0 0
        %837 = vmatpush1.bf16.msra.mxu0 %v757
        %838 = vmatprep.mubr.bf16.mxu0 %v607
        %839 = vmatmul.mubr.bf16.gmra.mrb[0].mxu0 %v600
        %v840 = vpop.f32.mrb[0].mxu0
        %v841 = vadd.f32 0.0, %v840
        %v842 = vpop.f32.mrb[0].mxu0
        %v843 = vpop.f32.mrb[0].mxu0
        %v844 = vpop.f32.mrb[0].mxu0
        %845 = vdwg.mxu0
        %846 = vmatprep.subr.bf16.mxu0 0
        %847 = vmatpush1.bf16.msra.mxu0 %v758
        %848 = vmatprep.subr.bf16.mxu0 0
        %849 = vmatpush1.bf16.msra.mxu0 %v759
        %850 = vmatprep.subr.bf16.mxu0 0
        %851 = vmatpush1.bf16.msra.mxu0 %v760
        %852 = vmatprep.subr.bf16.mxu0 0
        %853 = vmatpush1.bf16.msra.mxu0 %v761
        %854 = vmatprep.subr.bf16.mxu0 0
        %855 = vmatpush1.bf16.msra.mxu0 %v762
        %856 = vmatprep.subr.bf16.mxu0 0
        %857 = vmatpush1.bf16.msra.mxu0 %v763
        %858 = vmatprep.subr.bf16.mxu0 0
        %859 = vmatpush1.bf16.msra.mxu0 %v764
        %860 = vmatprep.subr.bf16.mxu0 0
        %861 = vmatpush1.bf16.msra.mxu0 %v765
        %862 = vmatprep.subr.bf16.mxu0 0
        %863 = vmatpush1.bf16.msra.mxu0 %v766
        %864 = vmatprep.subr.bf16.mxu0 0
        %865 = vmatpush1.bf16.msra.mxu0 %v767
        %866 = vmatprep.subr.bf16.mxu0 0
        %867 = vmatpush1.bf16.msra.mxu0 %v768
        %868 = vmatprep.subr.bf16.mxu0 0
        %869 = vmatpush1.bf16.msra.mxu0 %v769
        %870 = vmatprep.subr.bf16.mxu0 0
        %871 = vmatpush1.bf16.msra.mxu0 %v770
        %872 = vmatprep.subr.bf16.mxu0 0
        %873 = vmatpush1.bf16.msra.mxu0 %v771
        %874 = vmatprep.subr.bf16.mxu0 0
        %875 = vmatpush1.bf16.msra.mxu0 %v772
        %876 = vmatprep.subr.bf16.mxu0 0
        %877 = vmatpush1.bf16.msra.mxu0 %v773
        %878 = vmatprep.mubr.bf16.mxu0 %v609
        %879 = vmatmul.mubr.bf16.gmra.mrb[0].mxu0 %v608
        %v880 = vpop.f32.mrb[0].mxu0
        %v881 = vadd.f32 %v841, %v880
        %v882 = vpop.f32.mrb[0].mxu0
        %v883 = vpop.f32.mrb[0].mxu0
        %v884 = vpop.f32.mrb[0].mxu0
        %885 = vdwg.mxu0
        %v886 = vadd.f32 %v519, %v881
        %887 = vst [vmem:[#allocation2] sm:$0x3] %v886
        %p888 = scmp.eq.s32.totalorder %s19, 7
        // Predicated region
        $region78: #{multi_head_cnn_forward.6} parent=68 // pred_check
          %p889 = pneg %p888
        $region79: #{multi_head_cnn_forward.6} parent=68 // pred_check_branch
          %891 = sbr.rel (%p889) target = $region81
        $region80: #{multi_head_cnn_forward.6} parent=68 // pred_region
          %v892 = vld [vmem:[#allocation2] sm:$0x3]
          %v893 = vld [vmem:[%s508] sm:$0x1]
          %v895 = vlaneseq
          %v896 = vshrl.u32 %v895, 7
          %v897 = vsub.s32 0, %v896
          %v898 = vrot.slane %v893, %v897
          %v900 = vadd.f32 %v892, %v898
          %v901 = vmax.f32 %v900, 0.0
          %902 = vst [vmem:[%s512] sm:$0x3] %v901
        $region81: #{multi_head_cnn_forward.6} parent=68 // pred_fallthru
          _
        %p903 = scmp.lt.s32.totalorder %s18, 1
        %s904 = scalar_select %p903, %s18, 1
        %s905 = smul.addr %s904, 2
        %s906 = scalar_lea.vmem %s3, %s905
        // Predicated region
        $region82: #{multi_head_cnn_forward.6} parent=68 // pred_check
          %p907 = pneg %p124
        $region83: #{multi_head_cnn_forward.6} parent=68 // pred_check_branch
          %909 = sbr.rel (%p907) target = $region85
        $region84: #{multi_head_cnn_forward.6} parent=68 // pred_region
          _
        $region85: #{multi_head_cnn_forward.6} parent=68 // pred_fallthru
          _
      $region69: #{multi_head_cnn_forward.6} parent=5 // pred_fallthru
        _
      %p910 = scmp.le.s32.totalorder 2, %s9
      // Predicated region
      $region86: #{multi_head_cnn_forward.6} parent=5 // pred_check
        %p911 = pneg %p910
      $region87: #{multi_head_cnn_forward.6} parent=5 // pred_check_branch
        %913 = sbr.rel (%p911) target = $region89
      $region88: #{multi_head_cnn_forward.6} parent=5 // pred_region
        %s914 = ssub.s32 %s9, 2
        // Predicated region
        $region90: #{multi_head_cnn_forward.6} parent=88 // pred_check
          %p915 = pneg %p130
        $region91: #{multi_head_cnn_forward.6} parent=88 // pred_check_branch
          %917 = sbr.rel (%p915) target = $region93
        $region92: #{multi_head_cnn_forward.6} parent=88 // pred_region
          %p918 = scmp.lt.s32.totalorder %s20, 1
          %s919 = scalar_select %p918, %s20, 1
          %s920 = smul.addr %s919, 2
          %s921 = scalar_lea.vmem %s3, %s920
        $region93: #{multi_head_cnn_forward.6} parent=88 // pred_fallthru
          _
      $region89: #{multi_head_cnn_forward.6} parent=5 // pred_fallthru
        _
    $region6: #{multi_head_cnn_forward.6} parent=1 // loop_footer
      %s13 = sadd.s32 1, %s9
    $region7: #{multi_head_cnn_forward.6} parent=1 // loop_footer_branch
      %8 = sbr.rel target = $region3
    $region8: #{multi_head_cnn_forward.6} parent=1 // loop_exit
      _

// kernel: multi_head_cnn_forward.7
$region0: #{multi_head_cnn_forward.7}
  #allocation0 [shape = 'u32[]', space=smem, size = 0x4, offset = 0x4, fixed_abs, tag = 'smem constant byte address 0x4 - core index']
  #allocation1 [shape = 'u32[144,128]{1,0:T(1,128)}', space=vmem, size = 0x12000, scoped, tag = 'internal scratch']
  #allocation2 [shape = 's32[1]{0}', space=sflag, size = 0x4, scoped, tag = 'scoped memory for multi_head_cnn_forward.7']
  #allocation3 [shape = 's32[1]{0:T(128)S(6)}', space=smem, size = 0x200, scoped, tag = 'prefetched SMEM operand 0']
  %s0 = inlined_call_operand.<no memory space> [shape: s32[1], index: 0, kind: input, shape index: {}]
  %s1 = inlined_call_operand.vmem [shape: f32[2,256], index: 1, kind: input, shape index: {}]
  %s2 = inlined_call_operand.vmem [shape: f32[3,256,10], index: 2, kind: input, shape index: {}]
  %s3 = inlined_call_operand.vmem [shape: f32[3,1,10], index: 3, kind: input, shape index: {}]
  %s4 = inlined_call_operand.hbm [shape: f32[2,10], index: 4, kind: output, shape index: {}]
  %s5 = sld [smem:[#allocation0]]
  $region22: #{multi_head_cnn_forward.7} parent=0
    _
  %s7 = ssub.s32 1, %s5
  %s8 = scalar_select 0, %s7, %s5
  %9 = sst [smem:[#allocation3]] %s0
  $region1: #{multi_head_cnn_forward.7} parent=0
    #allocation4 [shape = 'u8[1024]{0}', space=vmem, size = 0x400, scoped, tag = 'output window, operand 0, single buffered']
    #allocation5 [shape = 's32[1]{0}', space=sflag, size = 0x4, scoped, tag = 'scoped memory for multi_head_cnn_forward.7']
    %10 = vsyncpa [#allocation5], 0
    // Predicated region
    $region2: #{multi_head_cnn_forward.7} parent=1 // pred_check
      _
    $region3: #{multi_head_cnn_forward.7} parent=1 // pred_check_branch
      %12 = sbr.rel (0) target = $region5
    $region4: #{multi_head_cnn_forward.7} parent=1 // pred_region
      _
    $region5: #{multi_head_cnn_forward.7} parent=1 // pred_fallthru
      _
    // Predicated region
    $region6: #{multi_head_cnn_forward.7} parent=1 // pred_check
      _
    $region7: #{multi_head_cnn_forward.7} parent=1 // pred_check_branch
      %14 = sbr.rel (0) target = $region9
    $region8: #{multi_head_cnn_forward.7} parent=1 // pred_region
      %s15 = sld [smem:[#allocation3]]
      %p16 = scmp.lt.s32.totalorder %s15, 2
      %s17 = scalar_select %p16, %s15, 2
      %s18 = smul.addr %s17, 32
      %s19 = smul.addr %s18, 8
      %s20 = scalar_lea.vmem %s2, %s19
      %s21 = sld [smem:[#allocation3]]
    $region9: #{multi_head_cnn_forward.7} parent=1 // pred_fallthru
      _
    // Predicated region
    $region10: #{multi_head_cnn_forward.7} parent=1 // pred_check
      _
    $region11: #{multi_head_cnn_forward.7} parent=1 // pred_check_branch
      %23 = sbr.rel (0) target = $region13
    $region12: #{multi_head_cnn_forward.7} parent=1 // pred_region
      %s24 = sld [smem:[#allocation3]]
      %p25 = scmp.lt.s32.totalorder %s24, 2
      %s26 = scalar_select %p25, %s24, 2
      %s27 = scalar_lea.vmem %s3, %s26
      %s28 = sld [smem:[#allocation3]]
    $region13: #{multi_head_cnn_forward.7} parent=1 // pred_fallthru
      _
    %s29 = sld [smem:[#allocation3]]
    %p30 = scmp.lt.s32.totalorder %s29, 2
    %s31 = scalar_select %p30, %s29, 2
    %s32 = smul.addr %s31, 32
    %s33 = smul.addr %s32, 8
    %s34 = scalar_lea.vmem %s2, %s33
    %s35 = sld [smem:[#allocation3]]
    %p36 = scmp.lt.s32.totalorder %s35, 2
    %s37 = scalar_select %p36, %s35, 2
    %s38 = scalar_lea.vmem %s3, %s37
    %s39 = sld [smem:[#allocation3]]
    %p40 = scmp.lt.s32.totalorder %s39, 2
    %s41 = scalar_select %p40, %s39, 2
    %s42 = smul.addr %s41, 32
    %s43 = smul.addr %s42, 8
    %s44 = scalar_lea.vmem %s2, %s43
    %s45 = sld [smem:[#allocation3]]
    %s46 = sld [smem:[#allocation3]]
    %p47 = scmp.lt.s32.totalorder %s46, 2
    %s48 = scalar_select %p47, %s46, 2
    %s49 = scalar_lea.vmem %s3, %s48
    %s50 = sld [smem:[#allocation3]]
    %v51 = vld [vmem:[%s1] sm:$0xf]
    %v52 = vld [vmem:[%s44] sm:$0xff]
    %v53 = vld [vmem:[%s44 + $0x8] sm:$0xff]
    %v54 = vld [vmem:[%s44 + $0x10] sm:$0xff]
    %v55 = vld [vmem:[%s44 + $0x18] sm:$0xff]
    %v56 = vld [vmem:[%s44 + $0x20] sm:$0xff]
    %v57 = vld [vmem:[%s44 + $0x28] sm:$0xff]
    %v58 = vld [vmem:[%s44 + $0x30] sm:$0xff]
    %v59 = vld [vmem:[%s44 + $0x38] sm:$0xff]
    %v60 = vld [vmem:[%s44 + $0x40] sm:$0xff]
    %v61 = vld [vmem:[%s44 + $0x48] sm:$0xff]
    %v62 = vld [vmem:[%s44 + $0x50] sm:$0xff]
    %v63 = vld [vmem:[%s44 + $0x58] sm:$0xff]
    %v64 = vld [vmem:[%s44 + $0x60] sm:$0xff]
    %v65 = vld [vmem:[%s44 + $0x68] sm:$0xff]
    %v66 = vld [vmem:[%s44 + $0x70] sm:$0xff]
    %v67 = vld [vmem:[%s44 + $0x78] sm:$0xff]
    %v68 = vld [vmem:[%s44 + $0x80] sm:$0xff]
    %v69 = vld [vmem:[%s44 + $0x88] sm:$0xff]
    %v70 = vld [vmem:[%s44 + $0x90] sm:$0xff]
    %v71 = vld [vmem:[%s44 + $0x98] sm:$0xff]
    %v72 = vld [vmem:[%s44 + $0xa0] sm:$0xff]
    %v73 = vld [vmem:[%s44 + $0xa8] sm:$0xff]
    %v74 = vld [vmem:[%s44 + $0xb0] sm:$0xff]
    %v75 = vld [vmem:[%s44 + $0xb8] sm:$0xff]
    %v76 = vld [vmem:[%s44 + $0xc0] sm:$0xff]
    %v77 = vld [vmem:[%s44 + $0xc8] sm:$0xff]
    %v78 = vld [vmem:[%s44 + $0xd0] sm:$0xff]
    %v79 = vld [vmem:[%s44 + $0xd8] sm:$0xff]
    %v80 = vld [vmem:[%s44 + $0xe0] sm:$0xff]
    %v81 = vld [vmem:[%s44 + $0xe8] sm:$0xff]
    %v82 = vld [vmem:[%s44 + $0xf0] sm:$0xff]
    %v83 = vld [vmem:[%s44 + $0xf8] sm:$0xff]
    %v84 = vld [vmem:[%s49] sm:$0x1]
    %v86 = vlaneseq
    %v87 = vshrl.u32 %v86, 7
    %v88 = vsub.s32 0, %v87
    %v89 = vrot.slane %v84, %v88
    %v93 = vunpack.c.l.s4 1983009808
    %v94 = vunpack.c.0.s8 %v93
    %v95 = vlaneseq
    %v96 = vshrl.u32 %v95, 7
    %v97 = vsub.s32 %v94, %v96
    %v98 = vrot.slane %v51, %v97
    %v99 = vcombine.high %v98, %v98
    %102 = vmatprep.subr.mxu0 0.0
    %103 = vmatpush1.msra.mxu0 %v52
    %104 = vmatprep.subr.mxu0 0.0
    %105 = vmatpush1.msra.mxu0 %v53
    %106 = vmatprep.subr.mxu0 0.0
    %107 = vmatpush1.msra.mxu0 %v54
    %108 = vmatprep.subr.mxu0 0.0
    %109 = vmatpush1.msra.mxu0 %v55
    %110 = vmatprep.subr.mxu0 0.0
    %111 = vmatpush1.msra.mxu0 %v56
    %112 = vmatprep.subr.mxu0 0.0
    %113 = vmatpush1.msra.mxu0 %v57
    %114 = vmatprep.subr.mxu0 0.0
    %115 = vmatpush1.msra.mxu0 %v58
    %116 = vmatprep.subr.mxu0 0.0
    %117 = vmatpush1.msra.mxu0 %v59
    %118 = vmatprep.subr.mxu0 0.0
    %119 = vmatpush1.msra.mxu0 %v60
    %120 = vmatprep.subr.mxu0 0.0
    %121 = vmatpush1.msra.mxu0 %v61
    %122 = vmatprep.subr.mxu0 0.0
    %123 = vmatpush1.msra.mxu0 %v62
    %124 = vmatprep.subr.mxu0 0.0
    %125 = vmatpush1.msra.mxu0 %v63
    %126 = vmatprep.subr.mxu0 0.0
    %127 = vmatpush1.msra.mxu0 %v64
    %128 = vmatprep.subr.mxu0 0.0
    %129 = vmatpush1.msra.mxu0 %v65
    %130 = vmatprep.subr.mxu0 0.0
    %131 = vmatpush1.msra.mxu0 %v66
    %132 = vmatprep.subr.mxu0 0.0
    %133 = vmatpush1.msra.mxu0 %v67
    %134 = vmatprep.subr.mxu0 0.0
    %135 = vmatpush1.msra.mxu0 %v68
    %136 = vmatprep.subr.mxu0 0.0
    %137 = vmatpush1.msra.mxu0 %v69
    %138 = vmatprep.subr.mxu0 0.0
    %139 = vmatpush1.msra.mxu0 %v70
    %140 = vmatprep.subr.mxu0 0.0
    %141 = vmatpush1.msra.mxu0 %v71
    %142 = vmatprep.subr.mxu0 0.0
    %143 = vmatpush1.msra.mxu0 %v72
    %144 = vmatprep.subr.mxu0 0.0
    %145 = vmatpush1.msra.mxu0 %v73
    %146 = vmatprep.subr.mxu0 0.0
    %147 = vmatpush1.msra.mxu0 %v74
    %148 = vmatprep.subr.mxu0 0.0
    %149 = vmatpush1.msra.mxu0 %v75
    %150 = vmatprep.subr.mxu0 0.0
    %151 = vmatpush1.msra.mxu0 %v76
    %152 = vmatprep.subr.mxu0 0.0
    %153 = vmatpush1.msra.mxu0 %v77
    %154 = vmatprep.subr.mxu0 0.0
    %155 = vmatpush1.msra.mxu0 %v78
    %156 = vmatprep.subr.mxu0 0.0
    %157 = vmatpush1.msra.mxu0 %v79
    %158 = vmatprep.subr.mxu0 0.0
    %159 = vmatpush1.msra.mxu0 %v80
    %160 = vmatprep.subr.mxu0 0.0
    %161 = vmatpush1.msra.mxu0 %v81
    %162 = vmatprep.subr.mxu0 0.0
    %163 = vmatpush1.msra.mxu0 %v82
    %164 = vmatprep.subr.mxu0 0.0
    %165 = vmatpush1.msra.mxu0 %v83
    %166 = vmatprep.mubr.f32.mxu0 %v99
    %167 = vmatmul.mubr.f32.gmra.mrb[0].mxu0 %v98
    %v168 = vpop.f32.mrb[0].mxu0
    %v169 = vadd.f32 %v89, %v168
    %v170 = vpop.f32.mrb[0].mxu0
    %171 = vdwg.mxu0
    %vm172 = vcmask 74752
    %173 = vst.msk [vmem:[#allocation4] sm:$0x3] %vm172, %v169
    // Predicated region
    $region14: #{multi_head_cnn_forward.7} parent=1 // pred_check
      _
    $region15: #{multi_head_cnn_forward.7} parent=1 // pred_check_branch
      %175 = sbr.rel (0) target = $region17
    $region16: #{multi_head_cnn_forward.7} parent=1 // pred_region
      %s177 = ssub.s32 32, 32
      %178 = vsyncadd [#allocation5], %s177
      %s180 = sshll.u32 [#allocation4], 4
      %s181 = int_to_ptr.vmem [resolvable:$true] %s180
      %183 = dma.vmem_to_hbm [thread:$0]  %s181, 32, %s4, [#allocation5]
    $region17: #{multi_head_cnn_forward.7} parent=1 // pred_fallthru
      _
    // Predicated region
    $region18: #{multi_head_cnn_forward.7} parent=1 // pred_check
      _
    $region19: #{multi_head_cnn_forward.7} parent=1 // pred_check_branch
      %185 = sbr.rel (0) target = $region21
    $region20: #{multi_head_cnn_forward.7} parent=1 // pred_region
      %186 = dma.done [#allocation5], 32
    $region21: #{multi_head_cnn_forward.7} parent=1 // pred_fallthru
      _
    %187 = vsyncpa [#allocation5], 1

</llo_original>
